<compile_context>
chip_gen: v7x
topology: tpu7x:2x2x1
jax: 0.10.0
libtpu: 0.0.40
codegen_flags: <defaults>
</compile_context>

<pallas_src>
import jax
import jax.numpy as jnp
from jax.experimental import pallas as pl
from jax.experimental.pallas import tpu as pltpu


# ----------------------------------------------------------------------------
# Fused Pallas kernel: PerceiverIO pooler (encoder cross-attn -> latent
# self-attn -> decoder cross-attn) + per-task FinalProj, flash key tiling.
# ----------------------------------------------------------------------------
def pooler_kernel(x_ref, bias_ref, lat0_ref, dq_ref,
                  ln_g_ref, ln_b_ref, wq_ref, wkv_ref, wo_ref,
                  pw_ref, pb_ref, out_ref,
                  q_sc, m_sc, l_sc, acc_sc):
    f32 = jnp.float32
    cdt = wq_ref.dtype                   # compute dtype: bf16 on TPU, f32 otherwise
    inner = wq_ref.shape[-1]
    bb = x_ref.shape[0]

    k_step = pl.program_id(1)
    last_k = pl.num_programs(1) - 1

    def layer_norm(v, idx, eps=1e-5):
        v = v.astype(f32)
        mu = jnp.mean(v, axis=-1, keepdims=True)
        var = jnp.mean(jnp.square(v - mu), axis=-1, keepdims=True)
        return (v - mu) * jax.lax.rsqrt(var + eps) * ln_g_ref[idx] + ln_b_ref[idx]

    def project_kv(xn_c, blk):
        # fused K/V projection; split is lane-aligned (asserted in the wrapper)
        kv = jnp.einsum('bnd,dk->bnk', xn_c, wkv_ref[blk],
                        preferred_element_type=f32)
        return kv[..., :inner].astype(cdt), kv[..., inner:].astype(cdt)

    def softmax(s):
        s = s - jnp.max(s, axis=-1, keepdims=True)
        p = jnp.exp(s)
        return p / jnp.sum(p, axis=-1, keepdims=True)

    lat0 = lat0_ref[...].astype(f32)     # (M, D)
    M = lat0.shape[0]

    # ---- stage 1: latents attend to masked inputs (online softmax over N) ----
    @pl.when(k_step == 0)
    def _init():
        # batch-invariant encoder query projection, cached across key tiles
        q_sc[...] = jnp.einsum('md,dk->mk', layer_norm(lat0, 0).astype(cdt),
                               wq_ref[0],
                               preferred_element_type=f32).astype(cdt)
        m_sc[...] = jnp.full(m_sc.shape, -jnp.inf, m_sc.dtype)
        l_sc[...] = jnp.zeros(l_sc.shape, l_sc.dtype)
        acc_sc[...] = jnp.zeros(acc_sc.shape, acc_sc.dtype)

    # fused LayerNorm on the key tile (f32 stats, no persistent f32 copy of x)
    xn = layer_norm(x_ref[...], 1).astype(cdt)                # (bb, Nt, D)
    k_enc, v_enc = project_kv(xn, 0)                          # (bb, Nt, I)
    q_b = jnp.broadcast_to(q_sc[...][None], (bb, M, inner))   # cheap replicate
    s = jnp.einsum('bmk,bnk->bmn', q_b, k_enc, preferred_element_type=f32)
    s = s + bias_ref[...].astype(f32)                         # additive key mask

    m_prev = m_sc[...]
    m_new = jnp.maximum(m_prev, jnp.max(s, axis=-1, keepdims=True))
    alpha = jnp.exp(m_prev - m_new)
    p = jnp.exp(s - m_new)
    l_sc[...] = alpha * l_sc[...] + jnp.sum(p, axis=-1, keepdims=True)
    acc_sc[...] = alpha * acc_sc[...] + jnp.einsum(
        'bmn,bnk->bmk', p.astype(cdt), v_enc, preferred_element_type=f32)
    m_sc[...] = m_new

    # ---- stages 2-4: only once every key tile has been folded in ------------
    @pl.when(k_step == last_k)
    def _finish():
        # l > 0 always: vision tokens are never masked.
        o1 = acc_sc[...] / l_sc[...]                                    # (bb, M, I)
        lat = lat0[None] + jnp.einsum('bmk,kd->bmd', o1.astype(cdt),
                                      wo_ref[0], preferred_element_type=f32)

        # latent self-attention (no mask)
        q2 = jnp.einsum('bmd,dk->bmk', layer_norm(lat, 2).astype(cdt),
                        wq_ref[1], preferred_element_type=f32)
        k2, v2 = project_kv(layer_norm(lat, 3).astype(cdt), 1)
        p2 = softmax(jnp.einsum('bmk,bnk->bmn', q2.astype(cdt), k2,
                                preferred_element_type=f32))
        o2 = jnp.einsum('bmn,bnk->bmk', p2.astype(cdt), v2,
                        preferred_element_type=f32)
        lat = lat + jnp.einsum('bmk,kd->bmd', o2.astype(cdt), wo_ref[1],
                               preferred_element_type=f32)

        # decoder cross-attention with task queries (batch-invariant q proj)
        dq = dq_ref[...].astype(f32)                                    # (T, D)
        T = dq.shape[0]
        q3 = jnp.einsum('td,dk->tk', layer_norm(dq, 4).astype(cdt),
                        wq_ref[2], preferred_element_type=f32).astype(cdt)
        q3 = jnp.broadcast_to(q3[None], (bb, T, inner))
        k3, v3 = project_kv(layer_norm(lat, 5).astype(cdt), 2)
        p3 = softmax(jnp.einsum('btk,bmk->btm', q3, k3,
                                preferred_element_type=f32))
        o3 = jnp.einsum('btm,bmk->btk', p3.astype(cdt), v3,
                        preferred_element_type=f32)
        dec = dq[None] + jnp.einsum('btk,kd->btd', o3.astype(cdt), wo_ref[2],
                                    preferred_element_type=f32)         # (bb, T, D)

        # FinalProj: T lane-dense (bb, D) @ (D, Cpad>=128) matmuls written
        # straight into the lane-dense output block (no masked partial stores,
        # no major-dim transpose from a 'btd,tdc->btc' batch-dim einsum).
        dec_c = dec.astype(cdt)
        for t in range(T):                                              # static
            log_t = jnp.einsum('bd,dc->bc', dec_c[:, t, :], pw_ref[t],
                               preferred_element_type=f32) + pb_ref[t]
            out_ref[:, t, :] = log_t.astype(out_ref.dtype)


# ----------------------------------------------------------------------------
# Pallas wrapper
# ----------------------------------------------------------------------------
def _pick_vmem_limit_bytes():
    """Generation-aware VMEM limit: ~100 MiB on v5e/v6e, below 64 MiB on v7x."""
    fallback = 48 * 1024 * 1024
    if jax.default_backend() != "tpu":
        return fallback
    try:
        cap = pltpu.get_tpu_info().vmem_capacity_bytes
    except Exception:
        return fallback
    return min(int(cap * 0.8), 100 * 1024 * 1024)


def perceiver_pooler_pallas(in_array, mask, params, *, batch_block=None,
                            key_block=None):
    """in_array: (B, N, D) f32, mask: (B, N) {0,1} -> logits (B, T, C) f32."""
    B, N, D = in_array.shape
    M = params["latents"].shape[0]
    T = params["decoder_queries"].shape[0]
    Cp = params["proj_w"].shape[-1]        # lane-padded logits dim (multiple of 128)
    C = params["n_classes"]
    inner = params["wq_all"].shape[-1]
    cdt = params["wq_all"].dtype

    # fused K/V split must fall on a 128-lane boundary at production sizes
    assert inner % 128 == 0 or inner <= 128

    # batch grid: default to >=2 steps so the "parallel" axis can use both of
    # v7x's TensorCores and pipeline the x-tile DMA against compute.
    if batch_block is None:
        bb = B // 2 if (B >= 2 and B % 2 == 0) else B
    else:
        bb = batch_block
    assert B % bb == 0

    # key-axis (flash) tiling; None keeps the whole sequence resident.
    if key_block is None:
        kb = N
    else:
        kb = key_block
        assert N % kb == 0 and kb % 128 == 0
    nk = N // kb

    # additive key-mask bias: 0 for kept keys, -1e30 for masked (bf16-safe)
    bias = ((mask.astype(jnp.float32) - 1.0) * 1e30).reshape(B, 1, N).astype(cdt)

    grid_spec = pltpu.PrefetchScalarGridSpec(
        num_scalar_prefetch=0,
        grid=(B // bb, nk),
        in_specs=[
            pl.BlockSpec((bb, kb, D), lambda i, k: (i, k, 0)),         # x
            pl.BlockSpec((bb, 1, kb), lambda i, k: (i, 0, k)),         # mask bias
            pl.BlockSpec((M, D), lambda i, k: (0, 0)),                 # latents
            pl.BlockSpec((T, D), lambda i, k: (0, 0)),                 # dec queries
            pl.BlockSpec((6, D), lambda i, k: (0, 0)),                 # LN gamma
            pl.BlockSpec((6, D), lambda i, k: (0, 0)),                 # LN beta
            pl.BlockSpec((3, D, inner), lambda i, k: (0, 0, 0)),       # wq (scaled)
            pl.BlockSpec((3, D, 2 * inner), lambda i, k: (0, 0, 0)),   # fused wkv
            pl.BlockSpec((3, inner, D), lambda i, k: (0, 0, 0)),       # wo
            pl.BlockSpec((T, D, Cp), lambda i, k: (0, 0, 0)),          # proj_w pad
            pl.BlockSpec((T, Cp), lambda i, k: (0, 0)),                # proj_b pad
        ],
        out_specs=pl.BlockSpec((bb, T, Cp), lambda i, k: (i, 0, 0)),
        scratch_shapes=[
            pltpu.VMEM((M, inner), cdt),              # cached encoder queries
            pltpu.VMEM((bb, M, 1), jnp.float32),      # online-softmax max
            pltpu.VMEM((bb, M, 1), jnp.float32),      # online-softmax sum
            pltpu.VMEM((bb, M, inner), jnp.float32),  # online-softmax accumulator
        ],
    )
    out = pl.pallas_call(
        pooler_kernel,
        out_shape=jax.ShapeDtypeStruct((B, T, Cp), jnp.float32),
        grid_spec=grid_spec,
        compiler_params=pltpu.CompilerParams(
            dimension_semantics=("parallel", "arbitrary"),
            vmem_limit_bytes=_pick_vmem_limit_bytes(),
        ),
    )(in_array.astype(cdt), bias,
      params["latents"], params["decoder_queries"],
      params["ln_g"], params["ln_b"],
      params["wq_all"], params["wkv_all"], params["wo_all"],
      params["proj_w"], params["proj_b"])
    return out[:, :, :C]                       # slice lane padding back off


# ----------------------------------------------------------------------------
# Parameter construction (deterministic, synthetic)
# ----------------------------------------------------------------------------
def init_params(key, *, n_tasks, n_classes, input_size, vocab_size,
                num_latents, patch_size, pixel_channels, input_seq_len,
                compute_dtype=jnp.float32):
    D = input_size
    inner = input_size
    keys = jax.random.split(key, 10)
    patch_dim = pixel_channels * patch_size * patch_size
    c_pad = 128 * pl.cdiv(n_classes, 128)      # lane-dense FinalProj width

    # 3 attention blocks: [0]=encoder cross-attn, [1]=latent self-attn,
    # [2]=decoder cross-attn. All weights stacked for one contiguous DMA.
    wq = jax.random.normal(keys[0], (3, D, inner), jnp.float32) / jnp.sqrt(D)
    wk = jax.random.normal(keys[1], (3, D, inner), jnp.float32) / jnp.sqrt(D)
    wv = jax.random.normal(keys[2], (3, D, inner), jnp.float32) / jnp.sqrt(D)
    pw = jax.random.normal(keys[9], (n_tasks, D, n_classes), jnp.float32) / jnp.sqrt(D)
    pw = jnp.pad(pw, ((0, 0), (0, 0), (0, c_pad - n_classes)))

    return {
        "patch_size": patch_size,
        "n_classes": n_classes,
        # stand-in encoders
        "vision_patch_w": 0.02 * jax.random.normal(
            keys[3], (patch_dim, D), jnp.float32),
        "text_embed": 0.02 * jax.random.normal(
            keys[4], (vocab_size, D), jnp.float32),
        # positional embedding (add_pos_emb=True)
        "pos_emb": 0.02 * jax.random.normal(
            keys[5], (input_seq_len, D), jnp.float32),
        # PerceiverIO
        "latents": jax.random.normal(keys[6], (num_latents, D), jnp.float32),
        "decoder_queries": jax.random.normal(keys[7], (n_tasks, D), jnp.float32),
        # LayerNorm params: rows = (enc_q, enc_x, self_q, self_x, dec_q, dec_x)
        "ln_g": jnp.ones((6, D), jnp.float32),
        "ln_b": jnp.zeros((6, D), jnp.float32),
        # 1/sqrt(inner) softmax scale folded into wq; stored in compute dtype.
        "wq_all": (wq * (float(inner) ** -0.5)).astype(compute_dtype),
        "wkv_all": jnp.concatenate([wk, wv], axis=-1).astype(compute_dtype),
        "wo_all": (jax.random.normal(keys[8], (3, inner, D), jnp.float32)
                   / jnp.sqrt(inner)).astype(compute_dtype),
        # FinalProj (use_separate_projs=True), lane-padded to c_pad.
        "proj_w": pw.astype(compute_dtype),
        "proj_b": jnp.zeros((n_tasks, c_pad), jnp.float32),
    }


# ----------------------------------------------------------------------------
# PerceiverPooler forward (embedding glue in plain JAX, pooler in Pallas)
# ----------------------------------------------------------------------------
def perceiver_pooler_forward(params, pixel_values, input_ids, attention_mask):
    B, C, H, W = pixel_values.shape
    P = params["patch_size"]

    # stand-in vision encoder: patchify NCHW -> tokens (the CLS row the original
    # module drops via last_hidden_state[:, 1:, :] is simply not materialized).
    patches = pixel_values.reshape(B, C, H // P, P, W // P, P)
    patches = patches.transpose(0, 2, 4, 1, 3, 5).reshape(
        B, (H // P) * (W // P), C * P * P)
    v_emb = patches @ params["vision_patch_w"]                        # (B, Nv, D)

    # stand-in text encoder: embedding lookup
    t_emb = params["text_embed"][input_ids]                           # (B, L, D)

    in_array = jnp.concatenate([v_emb, t_emb], axis=1)                # (B, N, D)
    in_array = in_array + params["pos_emb"][: in_array.shape[1]][None]   # add_pos_emb

    v_mask = jnp.ones((B, v_emb.shape[1]), jnp.float32)
    mask = jnp.concatenate([v_mask, attention_mask.astype(jnp.float32)], axis=-1)

    # fused PerceiverIO pooler + FinalProj (single Pallas kernel)
    return perceiver_pooler_pallas(in_array, mask, params)            # (B, T, C)


# ----------------------------------------------------------------------------
if __name__ == "__main__":
    key = jax.random.PRNGKey(0)
    k_par, k_pix, k_ids = jax.random.split(key, 3)

    # Small synthetic shapes
    B = 2
    pixel_channels, H, W, patch = 3, 16, 16, 8       # -> 4 vision tokens
    seq_len = 8                                      # text tokens
    vocab = 100
    input_size = 32
    n_tasks = 4
    n_classes = 8
    num_latents = 8
    total_seq = (H // patch) * (W // patch) + seq_len  # 12

    # bf16 matmul feeds on a real TPU; f32 elsewhere (XLA:CPU cannot execute
    # bf16 x bf16 = f32 dots -- the previous version's runtime failure).
    compute_dtype = jnp.bfloat16 if jax.default_backend() == "tpu" else jnp.float32

    params = init_params(
        k_par, n_tasks=n_tasks, n_classes=n_classes, input_size=input_size,
        vocab_size=vocab, num_latents=num_latents, patch_size=patch,
        pixel_channels=pixel_channels, input_seq_len=total_seq,
        compute_dtype=compute_dtype)

    pixel_values = jax.random.normal(k_pix, (B, pixel_channels, H, W), jnp.float32)
    input_ids = jax.random.randint(k_ids, (B, seq_len), 0, vocab)
    attention_mask = jnp.ones((B, seq_len), jnp.int32)
    attention_mask = attention_mask.at[1, -2:].set(0)   # mask padding on item 1

    logits = perceiver_pooler_forward(params, pixel_values, input_ids, attention_mask)
    jax.block_until_ready(logits)
    assert logits.shape == (B, n_tasks, n_classes)
    assert bool(jnp.all(jnp.isfinite(logits)))
    print("KERNEL_OK")
</pallas_src>

<mosaic_0001>
module attributes {stable_mosaic.version = 11 : i64} {
  func.func @pooler_kernel(%arg0: i32, %arg1: i32, %arg2: memref<1x12x32xf32, #tpu.memory_space<vmem>>, %arg3: memref<1x1x12xf32, #tpu.memory_space<vmem>>, %arg4: memref<8x32xf32, #tpu.memory_space<vmem>>, %arg5: memref<4x32xf32, #tpu.memory_space<vmem>>, %arg6: memref<6x32xf32, #tpu.memory_space<vmem>>, %arg7: memref<6x32xf32, #tpu.memory_space<vmem>>, %arg8: memref<3x32x32xf32, #tpu.memory_space<vmem>>, %arg9: memref<3x32x64xf32, #tpu.memory_space<vmem>>, %arg10: memref<3x32x32xf32, #tpu.memory_space<vmem>>, %arg11: memref<4x32x128xf32, #tpu.memory_space<vmem>>, %arg12: memref<4x128xf32, #tpu.memory_space<vmem>>, %arg13: memref<1x4x128xf32, #tpu.memory_space<vmem>>, %arg14: memref<8x32xf32, #tpu.memory_space<vmem>>, %arg15: memref<1x8x1xf32, #tpu.memory_space<vmem>>, %arg16: memref<1x8x1xf32, #tpu.memory_space<vmem>>, %arg17: memref<1x8x32xf32, #tpu.memory_space<vmem>>) attributes {dimension_semantics = [#tpu.dimension_semantics<parallel>, #tpu.dimension_semantics<arbitrary>], iteration_bounds = array<i64: 2, 1>, scalar_prefetch = 0 : i64, scratch_operands = 4 : i64, tpu.core_type = #tpu.core_type<tc>, window_params = [{transform_indices = @transform_0, window_bounds = array<i64: 1, 12, 32>}, {transform_indices = @transform_1, window_bounds = array<i64: 1, 1, 12>}, {pipeline_mode = #tpu.pipeline_mode<synchronous>, transform_indices = @transform_2, window_bounds = array<i64: 8, 32>}, {pipeline_mode = #tpu.pipeline_mode<synchronous>, transform_indices = @transform_3, window_bounds = array<i64: 4, 32>}, {pipeline_mode = #tpu.pipeline_mode<synchronous>, transform_indices = @transform_4, window_bounds = array<i64: 6, 32>}, {pipeline_mode = #tpu.pipeline_mode<synchronous>, transform_indices = @transform_5, window_bounds = array<i64: 6, 32>}, {pipeline_mode = #tpu.pipeline_mode<synchronous>, transform_indices = @transform_6, window_bounds = array<i64: 3, 32, 32>}, {pipeline_mode = #tpu.pipeline_mode<synchronous>, transform_indices = @transform_7, window_bounds = array<i64: 3, 32, 64>}, {pipeline_mode = #tpu.pipeline_mode<synchronous>, transform_indices = @transform_8, window_bounds = array<i64: 3, 32, 32>}, {pipeline_mode = #tpu.pipeline_mode<synchronous>, transform_indices = @transform_9, window_bounds = array<i64: 4, 32, 128>}, {pipeline_mode = #tpu.pipeline_mode<synchronous>, transform_indices = @transform_10, window_bounds = array<i64: 4, 128>}, {transform_indices = @transform_11, window_bounds = array<i64: 1, 4, 128>}]} {
    %c0 = arith.constant 0 : index
    %c0_0 = arith.constant 0 : index
    %0 = vector.load %arg4[%c0, %c0_0] : memref<8x32xf32, #tpu.memory_space<vmem>>, vector<8x32xf32>
    %c0_i32 = arith.constant 0 : i32
    %1 = arith.cmpi eq, %arg1, %c0_i32 : i32
    %2 = arith.extui %1 : i1 to i32
    %c0_i32_1 = arith.constant 0 : i32
    %3 = arith.cmpi ne, %2, %c0_i32_1 : i32
    scf.if %3 {
      %cst_45 = arith.constant dense<0.000000e+00> : vector<8xf32>
      %69 = vector.multi_reduction <add>, %0, %cst_45 [1] : vector<8x32xf32> to vector<8xf32>
      %70 = vector.shape_cast %69 : vector<8xf32> to vector<8x1xf32>
      %cst_46 = arith.constant 3.200000e+01 : f32
      %71 = vector.broadcast %cst_46 : f32 to vector<8x1xf32>
      %72 = arith.divf %70, %71 : vector<8x1xf32>
      %73 = vector.broadcast %72 : vector<8x1xf32> to vector<8x32xf32>
      %74 = arith.subf %0, %73 : vector<8x32xf32>
      %75 = arith.mulf %74, %74 : vector<8x32xf32>
      %cst_47 = arith.constant dense<0.000000e+00> : vector<8xf32>
      %76 = vector.multi_reduction <add>, %75, %cst_47 [1] : vector<8x32xf32> to vector<8xf32>
      %77 = vector.shape_cast %76 : vector<8xf32> to vector<8x1xf32>
      %cst_48 = arith.constant 3.200000e+01 : f32
      %78 = vector.broadcast %cst_48 : f32 to vector<8x1xf32>
      %79 = arith.divf %77, %78 : vector<8x1xf32>
      %80 = vector.broadcast %72 : vector<8x1xf32> to vector<8x32xf32>
      %81 = arith.subf %0, %80 : vector<8x32xf32>
      %cst_49 = arith.constant 9.99999974E-6 : f32
      %82 = vector.broadcast %cst_49 : f32 to vector<8x1xf32>
      %83 = arith.addf %79, %82 : vector<8x1xf32>
      %84 = math.rsqrt %83 : vector<8x1xf32>
      %85 = vector.broadcast %84 : vector<8x1xf32> to vector<8x32xf32>
      %86 = arith.mulf %81, %85 : vector<8x32xf32>
      %c0_50 = arith.constant 0 : index
      %c0_51 = arith.constant 0 : index
      %87 = vector.load %arg6[%c0_50, %c0_51] : memref<6x32xf32, #tpu.memory_space<vmem>>, vector<1x32xf32>
      %88 = vector.shape_cast %87 : vector<1x32xf32> to vector<32xf32>
      %89 = vector.shape_cast %88 : vector<32xf32> to vector<1x32xf32>
      %90 = vector.broadcast %89 : vector<1x32xf32> to vector<8x32xf32>
      %91 = arith.mulf %86, %90 : vector<8x32xf32>
      %c0_52 = arith.constant 0 : index
      %c0_53 = arith.constant 0 : index
      %92 = vector.load %arg7[%c0_52, %c0_53] : memref<6x32xf32, #tpu.memory_space<vmem>>, vector<1x32xf32>
      %93 = vector.shape_cast %92 : vector<1x32xf32> to vector<32xf32>
      %94 = vector.shape_cast %93 : vector<32xf32> to vector<1x32xf32>
      %95 = vector.broadcast %94 : vector<1x32xf32> to vector<8x32xf32>
      %96 = arith.addf %91, %95 : vector<8x32xf32>
      %c0_54 = arith.constant 0 : index
      %c0_55 = arith.constant 0 : index
      %c0_56 = arith.constant 0 : index
      %97 = vector.load %arg8[%c0_54, %c0_55, %c0_56] : memref<3x32x32xf32, #tpu.memory_space<vmem>>, vector<1x32x32xf32>
      %98 = vector.shape_cast %97 : vector<1x32x32xf32> to vector<32x32xf32>
      "tpu.trace_start"() <{level = 10 : i32, message = "md,dk->mk"}> : () -> ()
      %cst_57 = arith.constant dense<0.000000e+00> : vector<8x32xf32>
      %99 = tpu.matmul %96, %98, %cst_57 {dimension_numbers = #tpu.dot_dimension_numbers<[1], [0], [0], [1], [0, 0, 1, 1], [], []>} : vector<8x32xf32>, vector<32x32xf32>, vector<8x32xf32> -> vector<8x32xf32>
      "tpu.trace_stop"() : () -> ()
      %c0_58 = arith.constant 0 : index
      %c0_59 = arith.constant 0 : index
      %100 = vector.load %arg14[%c0_58, %c0_59] : memref<8x32xf32, #tpu.memory_space<vmem>>, vector<8x32xf32>
      tpu.vector_store %arg14[%c0_58, %c0_59], %99 {strides = array<i32>} : memref<8x32xf32, #tpu.memory_space<vmem>>, vector<8x32xf32>,
      %cst_60 = arith.constant 0xFF800000 : f32
      %101 = vector.broadcast %cst_60 : f32 to vector<1x8x1xf32>
      %c0_61 = arith.constant 0 : index
      %c0_62 = arith.constant 0 : index
      %c0_63 = arith.constant 0 : index
      %102 = vector.load %arg15[%c0_61, %c0_62, %c0_63] : memref<1x8x1xf32, #tpu.memory_space<vmem>>, vector<1x8x1xf32>
      tpu.vector_store %arg15[%c0_61, %c0_62, %c0_63], %101 {strides = array<i32>} : memref<1x8x1xf32, #tpu.memory_space<vmem>>, vector<1x8x1xf32>,
      %cst_64 = arith.constant 0.000000e+00 : f32
      %103 = vector.broadcast %cst_64 : f32 to vector<1x8x1xf32>
      %c0_65 = arith.constant 0 : index
      %c0_66 = arith.constant 0 : index
      %c0_67 = arith.constant 0 : index
      %104 = vector.load %arg16[%c0_65, %c0_66, %c0_67] : memref<1x8x1xf32, #tpu.memory_space<vmem>>, vector<1x8x1xf32>
      tpu.vector_store %arg16[%c0_65, %c0_66, %c0_67], %103 {strides = array<i32>} : memref<1x8x1xf32, #tpu.memory_space<vmem>>, vector<1x8x1xf32>,
      %cst_68 = arith.constant 0.000000e+00 : f32
      %105 = vector.broadcast %cst_68 : f32 to vector<1x8x32xf32>
      %c0_69 = arith.constant 0 : index
      %c0_70 = arith.constant 0 : index
      %c0_71 = arith.constant 0 : index
      %106 = vector.load %arg17[%c0_69, %c0_70, %c0_71] : memref<1x8x32xf32, #tpu.memory_space<vmem>>, vector<1x8x32xf32>
      tpu.vector_store %arg17[%c0_69, %c0_70, %c0_71], %105 {strides = array<i32>} : memref<1x8x32xf32, #tpu.memory_space<vmem>>, vector<1x8x32xf32>,
    } else {
    }
    %c0_2 = arith.constant 0 : index
    %c0_3 = arith.constant 0 : index
    %c0_4 = arith.constant 0 : index
    %4 = vector.load %arg2[%c0_2, %c0_3, %c0_4] : memref<1x12x32xf32, #tpu.memory_space<vmem>>, vector<1x12x32xf32>
    %cst = arith.constant dense<0.000000e+00> : vector<1x12xf32>
    %5 = vector.multi_reduction <add>, %4, %cst [2] : vector<1x12x32xf32> to vector<1x12xf32>
    %6 = vector.shape_cast %5 : vector<1x12xf32> to vector<1x12x1xf32>
    %cst_5 = arith.constant 3.200000e+01 : f32
    %7 = vector.broadcast %cst_5 : f32 to vector<1x12x1xf32>
    %8 = arith.divf %6, %7 : vector<1x12x1xf32>
    %9 = vector.broadcast %8 : vector<1x12x1xf32> to vector<1x12x32xf32>
    %10 = arith.subf %4, %9 : vector<1x12x32xf32>
    %11 = arith.mulf %10, %10 : vector<1x12x32xf32>
    %cst_6 = arith.constant dense<0.000000e+00> : vector<1x12xf32>
    %12 = vector.multi_reduction <add>, %11, %cst_6 [2] : vector<1x12x32xf32> to vector<1x12xf32>
    %13 = vector.shape_cast %12 : vector<1x12xf32> to vector<1x12x1xf32>
    %cst_7 = arith.constant 3.200000e+01 : f32
    %14 = vector.broadcast %cst_7 : f32 to vector<1x12x1xf32>
    %15 = arith.divf %13, %14 : vector<1x12x1xf32>
    %16 = vector.broadcast %8 : vector<1x12x1xf32> to vector<1x12x32xf32>
    %17 = arith.subf %4, %16 : vector<1x12x32xf32>
    %cst_8 = arith.constant 9.99999974E-6 : f32
    %18 = vector.broadcast %cst_8 : f32 to vector<1x12x1xf32>
    %19 = arith.addf %15, %18 : vector<1x12x1xf32>
    %20 = math.rsqrt %19 : vector<1x12x1xf32>
    %21 = vector.broadcast %20 : vector<1x12x1xf32> to vector<1x12x32xf32>
    %22 = arith.mulf %17, %21 : vector<1x12x32xf32>
    %c1 = arith.constant 1 : index
    %c0_9 = arith.constant 0 : index
    %23 = vector.load %arg6[%c1, %c0_9] : memref<6x32xf32, #tpu.memory_space<vmem>>, vector<1x32xf32>
    %24 = vector.shape_cast %23 : vector<1x32xf32> to vector<32xf32>
    %25 = vector.shape_cast %24 : vector<32xf32> to vector<1x1x32xf32>
    %26 = vector.broadcast %25 : vector<1x1x32xf32> to vector<1x12x32xf32>
    %27 = arith.mulf %22, %26 : vector<1x12x32xf32>
    %c1_10 = arith.constant 1 : index
    %c0_11 = arith.constant 0 : index
    %28 = vector.load %arg7[%c1_10, %c0_11] : memref<6x32xf32, #tpu.memory_space<vmem>>, vector<1x32xf32>
    %29 = vector.shape_cast %28 : vector<1x32xf32> to vector<32xf32>
    %30 = vector.shape_cast %29 : vector<32xf32> to vector<1x1x32xf32>
    %31 = vector.broadcast %30 : vector<1x1x32xf32> to vector<1x12x32xf32>
    %32 = arith.addf %27, %31 : vector<1x12x32xf32>
    %c0_12 = arith.constant 0 : index
    %c0_13 = arith.constant 0 : index
    %c0_14 = arith.constant 0 : index
    %33 = vector.load %arg9[%c0_12, %c0_13, %c0_14] : memref<3x32x64xf32, #tpu.memory_space<vmem>>, vector<1x32x64xf32>
    %34 = vector.shape_cast %33 : vector<1x32x64xf32> to vector<32x64xf32>
    "tpu.trace_start"() <{level = 10 : i32, message = "bnd,dk->bnk"}> : () -> ()
    %cst_15 = arith.constant dense<0.000000e+00> : vector<1x12x64xf32>
    %35 = tpu.matmul %32, %34, %cst_15 {dimension_numbers = #tpu.dot_dimension_numbers<[2], [0], [0, 1], [1], [0, 0, 0, 1, 1, 1], [], []>} : vector<1x12x32xf32>, vector<32x64xf32>, vector<1x12x64xf32> -> vector<1x12x64xf32>
    "tpu.trace_stop"() : () -> ()
    %36 = vector.extract_strided_slice %35 {offsets = [0, 0, 0], sizes = [1, 12, 32], strides = [1, 1, 1]} : vector<1x12x64xf32> to vector<1x12x32xf32>
    %37 = vector.extract_strided_slice %35 {offsets = [0, 0, 32], sizes = [1, 12, 32], strides = [1, 1, 1]} : vector<1x12x64xf32> to vector<1x12x32xf32>
    %c0_16 = arith.constant 0 : index
    %c0_17 = arith.constant 0 : index
    %38 = vector.load %arg14[%c0_16, %c0_17] : memref<8x32xf32, #tpu.memory_space<vmem>>, vector<8x32xf32>
    %39 = vector.shape_cast %38 : vector<8x32xf32> to vector<1x8x32xf32>
    "tpu.trace_start"() <{level = 10 : i32, message = "bmk,bnk->bmn"}> : () -> ()
    %cst_18 = arith.constant dense<0.000000e+00> : vector<1x8x12xf32>
    %40 = tpu.matmul %39, %36, %cst_18 {dimension_numbers = #tpu.dot_dimension_numbers<[2], [2], [1], [1], [0, 0, 0, 1, 1, 1], [0], [0]>} : vector<1x8x32xf32>, vector<1x12x32xf32>, vector<1x8x12xf32> -> vector<1x8x12xf32>
    "tpu.trace_stop"() : () -> ()
    %c0_19 = arith.constant 0 : index
    %c0_20 = arith.constant 0 : index
    %c0_21 = arith.constant 0 : index
    %41 = vector.load %arg3[%c0_19, %c0_20, %c0_21] : memref<1x1x12xf32, #tpu.memory_space<vmem>>, vector<1x1x12xf32>
    %42 = vector.broadcast %41 : vector<1x1x12xf32> to vector<1x8x12xf32>
    %43 = arith.addf %40, %42 : vector<1x8x12xf32>
    %c0_22 = arith.constant 0 : index
    %c0_23 = arith.constant 0 : index
    %c0_24 = arith.constant 0 : index
    %44 = vector.load %arg15[%c0_22, %c0_23, %c0_24] : memref<1x8x1xf32, #tpu.memory_space<vmem>>, vector<1x8x1xf32>
    %cst_25 = arith.constant dense<0xFF800000> : vector<1x8xf32>
    %45 = vector.multi_reduction <maximumf>, %43, %cst_25 [2] : vector<1x8x12xf32> to vector<1x8xf32>
    %46 = vector.shape_cast %45 : vector<1x8xf32> to vector<1x8x1xf32>
    %47 = arith.maximumf %44, %46 : vector<1x8x1xf32>
    %48 = arith.subf %44, %47 : vector<1x8x1xf32>
    %49 = math.exp %48 : vector<1x8x1xf32>
    %50 = vector.broadcast %47 : vector<1x8x1xf32> to vector<1x8x12xf32>
    %51 = arith.subf %43, %50 : vector<1x8x12xf32>
    %52 = math.exp %51 : vector<1x8x12xf32>
    %c0_26 = arith.constant 0 : index
    %c0_27 = arith.constant 0 : index
    %c0_28 = arith.constant 0 : index
    %53 = vector.load %arg16[%c0_26, %c0_27, %c0_28] : memref<1x8x1xf32, #tpu.memory_space<vmem>>, vector<1x8x1xf32>
    %54 = arith.mulf %49, %53 : vector<1x8x1xf32>
    %cst_29 = arith.constant dense<0.000000e+00> : vector<1x8xf32>
    %55 = vector.multi_reduction <add>, %52, %cst_29 [2] : vector<1x8x12xf32> to vector<1x8xf32>
    %56 = vector.shape_cast %55 : vector<1x8xf32> to vector<1x8x1xf32>
    %57 = arith.addf %54, %56 : vector<1x8x1xf32>
    %c0_30 = arith.constant 0 : index
    %c0_31 = arith.constant 0 : index
    %c0_32 = arith.constant 0 : index
    %58 = vector.load %arg16[%c0_30, %c0_31, %c0_32] : memref<1x8x1xf32, #tpu.memory_space<vmem>>, vector<1x8x1xf32>
    tpu.vector_store %arg16[%c0_30, %c0_31, %c0_32], %57 {strides = array<i32>} : memref<1x8x1xf32, #tpu.memory_space<vmem>>, vector<1x8x1xf32>,
    %c0_33 = arith.constant 0 : index
    %c0_34 = arith.constant 0 : index
    %c0_35 = arith.constant 0 : index
    %59 = vector.load %arg17[%c0_33, %c0_34, %c0_35] : memref<1x8x32xf32, #tpu.memory_space<vmem>>, vector<1x8x32xf32>
    %60 = vector.broadcast %49 : vector<1x8x1xf32> to vector<1x8x32xf32>
    %61 = arith.mulf %60, %59 : vector<1x8x32xf32>
    "tpu.trace_start"() <{level = 10 : i32, message = "bmn,bnk->bmk"}> : () -> ()
    %cst_36 = arith.constant dense<0.000000e+00> : vector<1x8x32xf32>
    %62 = tpu.matmul %52, %37, %cst_36 {dimension_numbers = #tpu.dot_dimension_numbers<[2], [1], [1], [2], [0, 0, 0, 1, 1, 2], [0], [0]>} : vector<1x8x12xf32>, vector<1x12x32xf32>, vector<1x8x32xf32> -> vector<1x8x32xf32>
    "tpu.trace_stop"() : () -> ()
    %63 = arith.addf %61, %62 : vector<1x8x32xf32>
    %c0_37 = arith.constant 0 : index
    %c0_38 = arith.constant 0 : index
    %c0_39 = arith.constant 0 : index
    %64 = vector.load %arg17[%c0_37, %c0_38, %c0_39] : memref<1x8x32xf32, #tpu.memory_space<vmem>>, vector<1x8x32xf32>
    tpu.vector_store %arg17[%c0_37, %c0_38, %c0_39], %63 {strides = array<i32>} : memref<1x8x32xf32, #tpu.memory_space<vmem>>, vector<1x8x32xf32>,
    %c0_40 = arith.constant 0 : index
    %c0_41 = arith.constant 0 : index
    %c0_42 = arith.constant 0 : index
    %65 = vector.load %arg15[%c0_40, %c0_41, %c0_42] : memref<1x8x1xf32, #tpu.memory_space<vmem>>, vector<1x8x1xf32>
    tpu.vector_store %arg15[%c0_40, %c0_41, %c0_42], %47 {strides = array<i32>} : memref<1x8x1xf32, #tpu.memory_space<vmem>>, vector<1x8x1xf32>,
    %c0_i32_43 = arith.constant 0 : i32
    %66 = arith.cmpi eq, %arg1, %c0_i32_43 : i32
    %67 = arith.extui %66 : i1 to i32
    %c0_i32_44 = arith.constant 0 : i32
    %68 = arith.cmpi ne, %67, %c0_i32_44 : i32
    scf.if %68 {
      %c0_45 = arith.constant 0 : index
      %c0_46 = arith.constant 0 : index
      %c0_47 = arith.constant 0 : index
      %69 = vector.load %arg17[%c0_45, %c0_46, %c0_47] : memref<1x8x32xf32, #tpu.memory_space<vmem>>, vector<1x8x32xf32>
      %c0_48 = arith.constant 0 : index
      %c0_49 = arith.constant 0 : index
      %c0_50 = arith.constant 0 : index
      %70 = vector.load %arg16[%c0_48, %c0_49, %c0_50] : memref<1x8x1xf32, #tpu.memory_space<vmem>>, vector<1x8x1xf32>
      %71 = vector.broadcast %70 : vector<1x8x1xf32> to vector<1x8x32xf32>
      %72 = arith.divf %69, %71 : vector<1x8x32xf32>
      %73 = vector.shape_cast %0 : vector<8x32xf32> to vector<1x8x32xf32>
      %c0_51 = arith.constant 0 : index
      %c0_52 = arith.constant 0 : index
      %c0_53 = arith.constant 0 : index
      %74 = vector.load %arg10[%c0_51, %c0_52, %c0_53] : memref<3x32x32xf32, #tpu.memory_space<vmem>>, vector<1x32x32xf32>
      %75 = vector.shape_cast %74 : vector<1x32x32xf32> to vector<32x32xf32>
      "tpu.trace_start"() <{level = 10 : i32, message = "bmk,kd->bmd"}> : () -> ()
      %cst_54 = arith.constant dense<0.000000e+00> : vector<1x8x32xf32>
      %76 = tpu.matmul %72, %75, %cst_54 {dimension_numbers = #tpu.dot_dimension_numbers<[2], [0], [0, 1], [1], [0, 0, 0, 1, 1, 1], [], []>} : vector<1x8x32xf32>, vector<32x32xf32>, vector<1x8x32xf32> -> vector<1x8x32xf32>
      "tpu.trace_stop"() : () -> ()
      %77 = arith.addf %73, %76 : vector<1x8x32xf32>
      %cst_55 = arith.constant dense<0.000000e+00> : vector<1x8xf32>
      %78 = vector.multi_reduction <add>, %77, %cst_55 [2] : vector<1x8x32xf32> to vector<1x8xf32>
      %79 = vector.shape_cast %78 : vector<1x8xf32> to vector<1x8x1xf32>
      %cst_56 = arith.constant 3.200000e+01 : f32
      %80 = vector.broadcast %cst_56 : f32 to vector<1x8x1xf32>
      %81 = arith.divf %79, %80 : vector<1x8x1xf32>
      %82 = vector.broadcast %81 : vector<1x8x1xf32> to vector<1x8x32xf32>
      %83 = arith.subf %77, %82 : vector<1x8x32xf32>
      %84 = arith.mulf %83, %83 : vector<1x8x32xf32>
      %cst_57 = arith.constant dense<0.000000e+00> : vector<1x8xf32>
      %85 = vector.multi_reduction <add>, %84, %cst_57 [2] : vector<1x8x32xf32> to vector<1x8xf32>
      %86 = vector.shape_cast %85 : vector<1x8xf32> to vector<1x8x1xf32>
      %cst_58 = arith.constant 3.200000e+01 : f32
      %87 = vector.broadcast %cst_58 : f32 to vector<1x8x1xf32>
      %88 = arith.divf %86, %87 : vector<1x8x1xf32>
      %89 = vector.broadcast %81 : vector<1x8x1xf32> to vector<1x8x32xf32>
      %90 = arith.subf %77, %89 : vector<1x8x32xf32>
      %cst_59 = arith.constant 9.99999974E-6 : f32
      %91 = vector.broadcast %cst_59 : f32 to vector<1x8x1xf32>
      %92 = arith.addf %88, %91 : vector<1x8x1xf32>
      %93 = math.rsqrt %92 : vector<1x8x1xf32>
      %94 = vector.broadcast %93 : vector<1x8x1xf32> to vector<1x8x32xf32>
      %95 = arith.mulf %90, %94 : vector<1x8x32xf32>
      %c2 = arith.constant 2 : index
      %c0_60 = arith.constant 0 : index
      %96 = vector.load %arg6[%c2, %c0_60] : memref<6x32xf32, #tpu.memory_space<vmem>>, vector<1x32xf32>
      %97 = vector.shape_cast %96 : vector<1x32xf32> to vector<32xf32>
      %98 = vector.shape_cast %97 : vector<32xf32> to vector<1x1x32xf32>
      %99 = vector.broadcast %98 : vector<1x1x32xf32> to vector<1x8x32xf32>
      %100 = arith.mulf %95, %99 : vector<1x8x32xf32>
      %c2_61 = arith.constant 2 : index
      %c0_62 = arith.constant 0 : index
      %101 = vector.load %arg7[%c2_61, %c0_62] : memref<6x32xf32, #tpu.memory_space<vmem>>, vector<1x32xf32>
      %102 = vector.shape_cast %101 : vector<1x32xf32> to vector<32xf32>
      %103 = vector.shape_cast %102 : vector<32xf32> to vector<1x1x32xf32>
      %104 = vector.broadcast %103 : vector<1x1x32xf32> to vector<1x8x32xf32>
      %105 = arith.addf %100, %104 : vector<1x8x32xf32>
      %c1_63 = arith.constant 1 : index
      %c0_64 = arith.constant 0 : index
      %c0_65 = arith.constant 0 : index
      %106 = vector.load %arg8[%c1_63, %c0_64, %c0_65] : memref<3x32x32xf32, #tpu.memory_space<vmem>>, vector<1x32x32xf32>
      %107 = vector.shape_cast %106 : vector<1x32x32xf32> to vector<32x32xf32>
      "tpu.trace_start"() <{level = 10 : i32, message = "bmd,dk->bmk"}> : () -> ()
      %cst_66 = arith.constant dense<0.000000e+00> : vector<1x8x32xf32>
      %108 = tpu.matmul %105, %107, %cst_66 {dimension_numbers = #tpu.dot_dimension_numbers<[2], [0], [0, 1], [1], [0, 0, 0, 1, 1, 1], [], []>} : vector<1x8x32xf32>, vector<32x32xf32>, vector<1x8x32xf32> -> vector<1x8x32xf32>
      "tpu.trace_stop"() : () -> ()
      %cst_67 = arith.constant dense<0.000000e+00> : vector<1x8xf32>
      %109 = vector.multi_reduction <add>, %77, %cst_67 [2] : vector<1x8x32xf32> to vector<1x8xf32>
      %110 = vector.shape_cast %109 : vector<1x8xf32> to vector<1x8x1xf32>
      %cst_68 = arith.constant 3.200000e+01 : f32
      %111 = vector.broadcast %cst_68 : f32 to vector<1x8x1xf32>
      %112 = arith.divf %110, %111 : vector<1x8x1xf32>
      %113 = vector.broadcast %112 : vector<1x8x1xf32> to vector<1x8x32xf32>
      %114 = arith.subf %77, %113 : vector<1x8x32xf32>
      %115 = arith.mulf %114, %114 : vector<1x8x32xf32>
      %cst_69 = arith.constant dense<0.000000e+00> : vector<1x8xf32>
      %116 = vector.multi_reduction <add>, %115, %cst_69 [2] : vector<1x8x32xf32> to vector<1x8xf32>
      %117 = vector.shape_cast %116 : vector<1x8xf32> to vector<1x8x1xf32>
      %cst_70 = arith.constant 3.200000e+01 : f32
      %118 = vector.broadcast %cst_70 : f32 to vector<1x8x1xf32>
      %119 = arith.divf %117, %118 : vector<1x8x1xf32>
      %120 = vector.broadcast %112 : vector<1x8x1xf32> to vector<1x8x32xf32>
      %121 = arith.subf %77, %120 : vector<1x8x32xf32>
      %cst_71 = arith.constant 9.99999974E-6 : f32
      %122 = vector.broadcast %cst_71 : f32 to vector<1x8x1xf32>
      %123 = arith.addf %119, %122 : vector<1x8x1xf32>
      %124 = math.rsqrt %123 : vector<1x8x1xf32>
      %125 = vector.broadcast %124 : vector<1x8x1xf32> to vector<1x8x32xf32>
      %126 = arith.mulf %121, %125 : vector<1x8x32xf32>
      %c3 = arith.constant 3 : index
      %c0_72 = arith.constant 0 : index
      %127 = vector.load %arg6[%c3, %c0_72] : memref<6x32xf32, #tpu.memory_space<vmem>>, vector<1x32xf32>
      %128 = vector.shape_cast %127 : vector<1x32xf32> to vector<32xf32>
      %129 = vector.shape_cast %128 : vector<32xf32> to vector<1x1x32xf32>
      %130 = vector.broadcast %129 : vector<1x1x32xf32> to vector<1x8x32xf32>
      %131 = arith.mulf %126, %130 : vector<1x8x32xf32>
      %c3_73 = arith.constant 3 : index
      %c0_74 = arith.constant 0 : index
      %132 = vector.load %arg7[%c3_73, %c0_74] : memref<6x32xf32, #tpu.memory_space<vmem>>, vector<1x32xf32>
      %133 = vector.shape_cast %132 : vector<1x32xf32> to vector<32xf32>
      %134 = vector.shape_cast %133 : vector<32xf32> to vector<1x1x32xf32>
      %135 = vector.broadcast %134 : vector<1x1x32xf32> to vector<1x8x32xf32>
      %136 = arith.addf %131, %135 : vector<1x8x32xf32>
      %c1_75 = arith.constant 1 : index
      %c0_76 = arith.constant 0 : index
      %c0_77 = arith.constant 0 : index
      %137 = vector.load %arg9[%c1_75, %c0_76, %c0_77] : memref<3x32x64xf32, #tpu.memory_space<vmem>>, vector<1x32x64xf32>
      %138 = vector.shape_cast %137 : vector<1x32x64xf32> to vector<32x64xf32>
      "tpu.trace_start"() <{level = 10 : i32, message = "bnd,dk->bnk"}> : () -> ()
      %cst_78 = arith.constant dense<0.000000e+00> : vector<1x8x64xf32>
      %139 = tpu.matmul %136, %138, %cst_78 {dimension_numbers = #tpu.dot_dimension_numbers<[2], [0], [0, 1], [1], [0, 0, 0, 1, 1, 1], [], []>} : vector<1x8x32xf32>, vector<32x64xf32>, vector<1x8x64xf32> -> vector<1x8x64xf32>
      "tpu.trace_stop"() : () -> ()
      %140 = vector.extract_strided_slice %139 {offsets = [0, 0, 0], sizes = [1, 8, 32], strides = [1, 1, 1]} : vector<1x8x64xf32> to vector<1x8x32xf32>
      %141 = vector.extract_strided_slice %139 {offsets = [0, 0, 32], sizes = [1, 8, 32], strides = [1, 1, 1]} : vector<1x8x64xf32> to vector<1x8x32xf32>
      "tpu.trace_start"() <{level = 10 : i32, message = "bmk,bnk->bmn"}> : () -> ()
      %cst_79 = arith.constant dense<0.000000e+00> : vector<1x8x8xf32>
      %142 = tpu.matmul %108, %140, %cst_79 {dimension_numbers = #tpu.dot_dimension_numbers<[2], [2], [1], [1], [0, 0, 0, 1, 1, 1], [0], [0]>} : vector<1x8x32xf32>, vector<1x8x32xf32>, vector<1x8x8xf32> -> vector<1x8x8xf32>
      "tpu.trace_stop"() : () -> ()
      %cst_80 = arith.constant dense<0xFF800000> : vector<1x8xf32>
      %143 = vector.multi_reduction <maximumf>, %142, %cst_80 [2] : vector<1x8x8xf32> to vector<1x8xf32>
      %144 = vector.shape_cast %143 : vector<1x8xf32> to vector<1x8x1xf32>
      %145 = vector.broadcast %144 : vector<1x8x1xf32> to vector<1x8x8xf32>
      %146 = arith.subf %142, %145 : vector<1x8x8xf32>
      %147 = math.exp %146 : vector<1x8x8xf32>
      %cst_81 = arith.constant dense<0.000000e+00> : vector<1x8xf32>
      %148 = vector.multi_reduction <add>, %147, %cst_81 [2] : vector<1x8x8xf32> to vector<1x8xf32>
      %149 = vector.shape_cast %148 : vector<1x8xf32> to vector<1x8x1xf32>
      %150 = vector.broadcast %149 : vector<1x8x1xf32> to vector<1x8x8xf32>
      %151 = arith.divf %147, %150 : vector<1x8x8xf32>
      "tpu.trace_start"() <{level = 10 : i32, message = "bmn,bnk->bmk"}> : () -> ()
      %cst_82 = arith.constant dense<0.000000e+00> : vector<1x8x32xf32>
      %152 = tpu.matmul %151, %141, %cst_82 {dimension_numbers = #tpu.dot_dimension_numbers<[2], [1], [1], [2], [0, 0, 0, 1, 1, 2], [0], [0]>} : vector<1x8x8xf32>, vector<1x8x32xf32>, vector<1x8x32xf32> -> vector<1x8x32xf32>
      "tpu.trace_stop"() : () -> ()
      %c1_83 = arith.constant 1 : index
      %c0_84 = arith.constant 0 : index
      %c0_85 = arith.constant 0 : index
      %153 = vector.load %arg10[%c1_83, %c0_84, %c0_85] : memref<3x32x32xf32, #tpu.memory_space<vmem>>, vector<1x32x32xf32>
      %154 = vector.shape_cast %153 : vector<1x32x32xf32> to vector<32x32xf32>
      "tpu.trace_start"() <{level = 10 : i32, message = "bmk,kd->bmd"}> : () -> ()
      %cst_86 = arith.constant dense<0.000000e+00> : vector<1x8x32xf32>
      %155 = tpu.matmul %152, %154, %cst_86 {dimension_numbers = #tpu.dot_dimension_numbers<[2], [0], [0, 1], [1], [0, 0, 0, 1, 1, 1], [], []>} : vector<1x8x32xf32>, vector<32x32xf32>, vector<1x8x32xf32> -> vector<1x8x32xf32>
      "tpu.trace_stop"() : () -> ()
      %156 = arith.addf %77, %155 : vector<1x8x32xf32>
      %c0_87 = arith.constant 0 : index
      %c0_88 = arith.constant 0 : index
      %157 = vector.load %arg5[%c0_87, %c0_88] : memref<4x32xf32, #tpu.memory_space<vmem>>, vector<4x32xf32>
      %cst_89 = arith.constant dense<0.000000e+00> : vector<4xf32>
      %158 = vector.multi_reduction <add>, %157, %cst_89 [1] : vector<4x32xf32> to vector<4xf32>
      %159 = vector.shape_cast %158 : vector<4xf32> to vector<4x1xf32>
      %cst_90 = arith.constant 3.200000e+01 : f32
      %160 = vector.broadcast %cst_90 : f32 to vector<4x1xf32>
      %161 = arith.divf %159, %160 : vector<4x1xf32>
      %162 = vector.broadcast %161 : vector<4x1xf32> to vector<4x32xf32>
      %163 = arith.subf %157, %162 : vector<4x32xf32>
      %164 = arith.mulf %163, %163 : vector<4x32xf32>
      %cst_91 = arith.constant dense<0.000000e+00> : vector<4xf32>
      %165 = vector.multi_reduction <add>, %164, %cst_91 [1] : vector<4x32xf32> to vector<4xf32>
      %166 = vector.shape_cast %165 : vector<4xf32> to vector<4x1xf32>
      %cst_92 = arith.constant 3.200000e+01 : f32
      %167 = vector.broadcast %cst_92 : f32 to vector<4x1xf32>
      %168 = arith.divf %166, %167 : vector<4x1xf32>
      %169 = vector.broadcast %161 : vector<4x1xf32> to vector<4x32xf32>
      %170 = arith.subf %157, %169 : vector<4x32xf32>
      %cst_93 = arith.constant 9.99999974E-6 : f32
      %171 = vector.broadcast %cst_93 : f32 to vector<4x1xf32>
      %172 = arith.addf %168, %171 : vector<4x1xf32>
      %173 = math.rsqrt %172 : vector<4x1xf32>
      %174 = vector.broadcast %173 : vector<4x1xf32> to vector<4x32xf32>
      %175 = arith.mulf %170, %174 : vector<4x32xf32>
      %c4 = arith.constant 4 : index
      %c0_94 = arith.constant 0 : index
      %176 = vector.load %arg6[%c4, %c0_94] : memref<6x32xf32, #tpu.memory_space<vmem>>, vector<1x32xf32>
      %177 = vector.shape_cast %176 : vector<1x32xf32> to vector<32xf32>
      %178 = vector.shape_cast %177 : vector<32xf32> to vector<1x32xf32>
      %179 = vector.broadcast %178 : vector<1x32xf32> to vector<4x32xf32>
      %180 = arith.mulf %175, %179 : vector<4x32xf32>
      %c4_95 = arith.constant 4 : index
      %c0_96 = arith.constant 0 : index
      %181 = vector.load %arg7[%c4_95, %c0_96] : memref<6x32xf32, #tpu.memory_space<vmem>>, vector<1x32xf32>
      %182 = vector.shape_cast %181 : vector<1x32xf32> to vector<32xf32>
      %183 = vector.shape_cast %182 : vector<32xf32> to vector<1x32xf32>
      %184 = vector.broadcast %183 : vector<1x32xf32> to vector<4x32xf32>
      %185 = arith.addf %180, %184 : vector<4x32xf32>
      %c2_97 = arith.constant 2 : index
      %c0_98 = arith.constant 0 : index
      %c0_99 = arith.constant 0 : index
      %186 = vector.load %arg8[%c2_97, %c0_98, %c0_99] : memref<3x32x32xf32, #tpu.memory_space<vmem>>, vector<1x32x32xf32>
      %187 = vector.shape_cast %186 : vector<1x32x32xf32> to vector<32x32xf32>
      "tpu.trace_start"() <{level = 10 : i32, message = "td,dk->tk"}> : () -> ()
      %cst_100 = arith.constant dense<0.000000e+00> : vector<4x32xf32>
      %188 = tpu.matmul %185, %187, %cst_100 {dimension_numbers = #tpu.dot_dimension_numbers<[1], [0], [0], [1], [0, 0, 1, 1], [], []>} : vector<4x32xf32>, vector<32x32xf32>, vector<4x32xf32> -> vector<4x32xf32>
      "tpu.trace_stop"() : () -> ()
      %189 = vector.shape_cast %188 : vector<4x32xf32> to vector<1x4x32xf32>
      %cst_101 = arith.constant dense<0.000000e+00> : vector<1x8xf32>
      %190 = vector.multi_reduction <add>, %156, %cst_101 [2] : vector<1x8x32xf32> to vector<1x8xf32>
      %191 = vector.shape_cast %190 : vector<1x8xf32> to vector<1x8x1xf32>
      %cst_102 = arith.constant 3.200000e+01 : f32
      %192 = vector.broadcast %cst_102 : f32 to vector<1x8x1xf32>
      %193 = arith.divf %191, %192 : vector<1x8x1xf32>
      %194 = vector.broadcast %193 : vector<1x8x1xf32> to vector<1x8x32xf32>
      %195 = arith.subf %156, %194 : vector<1x8x32xf32>
      %196 = arith.mulf %195, %195 : vector<1x8x32xf32>
      %cst_103 = arith.constant dense<0.000000e+00> : vector<1x8xf32>
      %197 = vector.multi_reduction <add>, %196, %cst_103 [2] : vector<1x8x32xf32> to vector<1x8xf32>
      %198 = vector.shape_cast %197 : vector<1x8xf32> to vector<1x8x1xf32>
      %cst_104 = arith.constant 3.200000e+01 : f32
      %199 = vector.broadcast %cst_104 : f32 to vector<1x8x1xf32>
      %200 = arith.divf %198, %199 : vector<1x8x1xf32>
      %201 = vector.broadcast %193 : vector<1x8x1xf32> to vector<1x8x32xf32>
      %202 = arith.subf %156, %201 : vector<1x8x32xf32>
      %cst_105 = arith.constant 9.99999974E-6 : f32
      %203 = vector.broadcast %cst_105 : f32 to vector<1x8x1xf32>
      %204 = arith.addf %200, %203 : vector<1x8x1xf32>
      %205 = math.rsqrt %204 : vector<1x8x1xf32>
      %206 = vector.broadcast %205 : vector<1x8x1xf32> to vector<1x8x32xf32>
      %207 = arith.mulf %202, %206 : vector<1x8x32xf32>
      %c5 = arith.constant 5 : index
      %c0_106 = arith.constant 0 : index
      %208 = vector.load %arg6[%c5, %c0_106] : memref<6x32xf32, #tpu.memory_space<vmem>>, vector<1x32xf32>
      %209 = vector.shape_cast %208 : vector<1x32xf32> to vector<32xf32>
      %210 = vector.shape_cast %209 : vector<32xf32> to vector<1x1x32xf32>
      %211 = vector.broadcast %210 : vector<1x1x32xf32> to vector<1x8x32xf32>
      %212 = arith.mulf %207, %211 : vector<1x8x32xf32>
      %c5_107 = arith.constant 5 : index
      %c0_108 = arith.constant 0 : index
      %213 = vector.load %arg7[%c5_107, %c0_108] : memref<6x32xf32, #tpu.memory_space<vmem>>, vector<1x32xf32>
      %214 = vector.shape_cast %213 : vector<1x32xf32> to vector<32xf32>
      %215 = vector.shape_cast %214 : vector<32xf32> to vector<1x1x32xf32>
      %216 = vector.broadcast %215 : vector<1x1x32xf32> to vector<1x8x32xf32>
      %217 = arith.addf %212, %216 : vector<1x8x32xf32>
      %c2_109 = arith.constant 2 : index
      %c0_110 = arith.constant 0 : index
      %c0_111 = arith.constant 0 : index
      %218 = vector.load %arg9[%c2_109, %c0_110, %c0_111] : memref<3x32x64xf32, #tpu.memory_space<vmem>>, vector<1x32x64xf32>
      %219 = vector.shape_cast %218 : vector<1x32x64xf32> to vector<32x64xf32>
      "tpu.trace_start"() <{level = 10 : i32, message = "bnd,dk->bnk"}> : () -> ()
      %cst_112 = arith.constant dense<0.000000e+00> : vector<1x8x64xf32>
      %220 = tpu.matmul %217, %219, %cst_112 {dimension_numbers = #tpu.dot_dimension_numbers<[2], [0], [0, 1], [1], [0, 0, 0, 1, 1, 1], [], []>} : vector<1x8x32xf32>, vector<32x64xf32>, vector<1x8x64xf32> -> vector<1x8x64xf32>
      "tpu.trace_stop"() : () -> ()
      %221 = vector.extract_strided_slice %220 {offsets = [0, 0, 0], sizes = [1, 8, 32], strides = [1, 1, 1]} : vector<1x8x64xf32> to vector<1x8x32xf32>
      %222 = vector.extract_strided_slice %220 {offsets = [0, 0, 32], sizes = [1, 8, 32], strides = [1, 1, 1]} : vector<1x8x64xf32> to vector<1x8x32xf32>
      "tpu.trace_start"() <{level = 10 : i32, message = "btk,bmk->btm"}> : () -> ()
      %cst_113 = arith.constant dense<0.000000e+00> : vector<1x4x8xf32>
      %223 = tpu.matmul %189, %221, %cst_113 {dimension_numbers = #tpu.dot_dimension_numbers<[2], [2], [1], [1], [0, 0, 0, 1, 1, 1], [0], [0]>} : vector<1x4x32xf32>, vector<1x8x32xf32>, vector<1x4x8xf32> -> vector<1x4x8xf32>
      "tpu.trace_stop"() : () -> ()
      %cst_114 = arith.constant dense<0xFF800000> : vector<1x4xf32>
      %224 = vector.multi_reduction <maximumf>, %223, %cst_114 [2] : vector<1x4x8xf32> to vector<1x4xf32>
      %225 = vector.shape_cast %224 : vector<1x4xf32> to vector<1x4x1xf32>
      %226 = vector.broadcast %225 : vector<1x4x1xf32> to vector<1x4x8xf32>
      %227 = arith.subf %223, %226 : vector<1x4x8xf32>
      %228 = math.exp %227 : vector<1x4x8xf32>
      %cst_115 = arith.constant dense<0.000000e+00> : vector<1x4xf32>
      %229 = vector.multi_reduction <add>, %228, %cst_115 [2] : vector<1x4x8xf32> to vector<1x4xf32>
      %230 = vector.shape_cast %229 : vector<1x4xf32> to vector<1x4x1xf32>
      %231 = vector.broadcast %230 : vector<1x4x1xf32> to vector<1x4x8xf32>
      %232 = arith.divf %228, %231 : vector<1x4x8xf32>
      "tpu.trace_start"() <{level = 10 : i32, message = "btm,bmk->btk"}> : () -> ()
      %cst_116 = arith.constant dense<0.000000e+00> : vector<1x4x32xf32>
      %233 = tpu.matmul %232, %222, %cst_116 {dimension_numbers = #tpu.dot_dimension_numbers<[2], [1], [1], [2], [0, 0, 0, 1, 1, 2], [0], [0]>} : vector<1x4x8xf32>, vector<1x8x32xf32>, vector<1x4x32xf32> -> vector<1x4x32xf32>
      "tpu.trace_stop"() : () -> ()
      %234 = vector.shape_cast %157 : vector<4x32xf32> to vector<1x4x32xf32>
      %c2_117 = arith.constant 2 : index
      %c0_118 = arith.constant 0 : index
      %c0_119 = arith.constant 0 : index
      %235 = vector.load %arg10[%c2_117, %c0_118, %c0_119] : memref<3x32x32xf32, #tpu.memory_space<vmem>>, vector<1x32x32xf32>
      %236 = vector.shape_cast %235 : vector<1x32x32xf32> to vector<32x32xf32>
      "tpu.trace_start"() <{level = 10 : i32, message = "btk,kd->btd"}> : () -> ()
      %cst_120 = arith.constant dense<0.000000e+00> : vector<1x4x32xf32>
      %237 = tpu.matmul %233, %236, %cst_120 {dimension_numbers = #tpu.dot_dimension_numbers<[2], [0], [0, 1], [1], [0, 0, 0, 1, 1, 1], [], []>} : vector<1x4x32xf32>, vector<32x32xf32>, vector<1x4x32xf32> -> vector<1x4x32xf32>
      "tpu.trace_stop"() : () -> ()
      %238 = arith.addf %234, %237 : vector<1x4x32xf32>
      %239 = vector.extract_strided_slice %238 {offsets = [0, 0, 0], sizes = [1, 1, 32], strides = [1, 1, 1]} : vector<1x4x32xf32> to vector<1x1x32xf32>
      %240 = vector.shape_cast %239 : vector<1x1x32xf32> to vector<1x32xf32>
      %c0_121 = arith.constant 0 : index
      %c0_122 = arith.constant 0 : index
      %c0_123 = arith.constant 0 : index
      %241 = vector.load %arg11[%c0_121, %c0_122, %c0_123] : memref<4x32x128xf32, #tpu.memory_space<vmem>>, vector<1x32x128xf32>
      %242 = vector.shape_cast %241 : vector<1x32x128xf32> to vector<32x128xf32>
      "tpu.trace_start"() <{level = 10 : i32, message = "bd,dc->bc"}> : () -> ()
      %cst_124 = arith.constant dense<0.000000e+00> : vector<1x128xf32>
      %243 = tpu.matmul %240, %242, %cst_124 {dimension_numbers = #tpu.dot_dimension_numbers<[1], [0], [0], [1], [0, 0, 1, 1], [], []>} : vector<1x32xf32>, vector<32x128xf32>, vector<1x128xf32> -> vector<1x128xf32>
      "tpu.trace_stop"() : () -> ()
      %c0_125 = arith.constant 0 : index
      %c0_126 = arith.constant 0 : index
      %244 = vector.load %arg12[%c0_125, %c0_126] : memref<4x128xf32, #tpu.memory_space<vmem>>, vector<1x128xf32>
      %245 = vector.shape_cast %244 : vector<1x128xf32> to vector<128xf32>
      %246 = vector.shape_cast %245 : vector<128xf32> to vector<1x128xf32>
      %247 = arith.addf %243, %246 : vector<1x128xf32>
      %c0_127 = arith.constant 0 : index
      %c0_128 = arith.constant 0 : index
      %c0_129 = arith.constant 0 : index
      %248 = vector.load %arg13[%c0_127, %c0_128, %c0_129] : memref<1x4x128xf32, #tpu.memory_space<vmem>>, vector<1x1x128xf32>
      %249 = vector.shape_cast %248 : vector<1x1x128xf32> to vector<1x128xf32>
      %250 = vector.shape_cast %247 : vector<1x128xf32> to vector<1x1x128xf32>
      tpu.vector_store %arg13[%c0_127, %c0_128, %c0_129], %250 {strides = array<i32>} : memref<1x4x128xf32, #tpu.memory_space<vmem>>, vector<1x1x128xf32>,
      %251 = vector.extract_strided_slice %238 {offsets = [0, 1, 0], sizes = [1, 1, 32], strides = [1, 1, 1]} : vector<1x4x32xf32> to vector<1x1x32xf32>
      %252 = vector.shape_cast %251 : vector<1x1x32xf32> to vector<1x32xf32>
      %c1_130 = arith.constant 1 : index
      %c0_131 = arith.constant 0 : index
      %c0_132 = arith.constant 0 : index
      %253 = vector.load %arg11[%c1_130, %c0_131, %c0_132] : memref<4x32x128xf32, #tpu.memory_space<vmem>>, vector<1x32x128xf32>
      %254 = vector.shape_cast %253 : vector<1x32x128xf32> to vector<32x128xf32>
      "tpu.trace_start"() <{level = 10 : i32, message = "bd,dc->bc"}> : () -> ()
      %cst_133 = arith.constant dense<0.000000e+00> : vector<1x128xf32>
      %255 = tpu.matmul %252, %254, %cst_133 {dimension_numbers = #tpu.dot_dimension_numbers<[1], [0], [0], [1], [0, 0, 1, 1], [], []>} : vector<1x32xf32>, vector<32x128xf32>, vector<1x128xf32> -> vector<1x128xf32>
      "tpu.trace_stop"() : () -> ()
      %c1_134 = arith.constant 1 : index
      %c0_135 = arith.constant 0 : index
      %256 = vector.load %arg12[%c1_134, %c0_135] : memref<4x128xf32, #tpu.memory_space<vmem>>, vector<1x128xf32>
      %257 = vector.shape_cast %256 : vector<1x128xf32> to vector<128xf32>
      %258 = vector.shape_cast %257 : vector<128xf32> to vector<1x128xf32>
      %259 = arith.addf %255, %258 : vector<1x128xf32>
      %c0_136 = arith.constant 0 : index
      %c1_137 = arith.constant 1 : index
      %c0_138 = arith.constant 0 : index
      %260 = vector.load %arg13[%c0_136, %c1_137, %c0_138] : memref<1x4x128xf32, #tpu.memory_space<vmem>>, vector<1x1x128xf32>
      %261 = vector.shape_cast %260 : vector<1x1x128xf32> to vector<1x128xf32>
      %262 = vector.shape_cast %259 : vector<1x128xf32> to vector<1x1x128xf32>
      tpu.vector_store %arg13[%c0_136, %c1_137, %c0_138], %262 {strides = array<i32>} : memref<1x4x128xf32, #tpu.memory_space<vmem>>, vector<1x1x128xf32>,
      %263 = vector.extract_strided_slice %238 {offsets = [0, 2, 0], sizes = [1, 1, 32], strides = [1, 1, 1]} : vector<1x4x32xf32> to vector<1x1x32xf32>
      %264 = vector.shape_cast %263 : vector<1x1x32xf32> to vector<1x32xf32>
      %c2_139 = arith.constant 2 : index
      %c0_140 = arith.constant 0 : index
      %c0_141 = arith.constant 0 : index
      %265 = vector.load %arg11[%c2_139, %c0_140, %c0_141] : memref<4x32x128xf32, #tpu.memory_space<vmem>>, vector<1x32x128xf32>
      %266 = vector.shape_cast %265 : vector<1x32x128xf32> to vector<32x128xf32>
      "tpu.trace_start"() <{level = 10 : i32, message = "bd,dc->bc"}> : () -> ()
      %cst_142 = arith.constant dense<0.000000e+00> : vector<1x128xf32>
      %267 = tpu.matmul %264, %266, %cst_142 {dimension_numbers = #tpu.dot_dimension_numbers<[1], [0], [0], [1], [0, 0, 1, 1], [], []>} : vector<1x32xf32>, vector<32x128xf32>, vector<1x128xf32> -> vector<1x128xf32>
      "tpu.trace_stop"() : () -> ()
      %c2_143 = arith.constant 2 : index
      %c0_144 = arith.constant 0 : index
      %268 = vector.load %arg12[%c2_143, %c0_144] : memref<4x128xf32, #tpu.memory_space<vmem>>, vector<1x128xf32>
      %269 = vector.shape_cast %268 : vector<1x128xf32> to vector<128xf32>
      %270 = vector.shape_cast %269 : vector<128xf32> to vector<1x128xf32>
      %271 = arith.addf %267, %270 : vector<1x128xf32>
      %c0_145 = arith.constant 0 : index
      %c2_146 = arith.constant 2 : index
      %c0_147 = arith.constant 0 : index
      %272 = vector.load %arg13[%c0_145, %c2_146, %c0_147] : memref<1x4x128xf32, #tpu.memory_space<vmem>>, vector<1x1x128xf32>
      %273 = vector.shape_cast %272 : vector<1x1x128xf32> to vector<1x128xf32>
      %274 = vector.shape_cast %271 : vector<1x128xf32> to vector<1x1x128xf32>
      tpu.vector_store %arg13[%c0_145, %c2_146, %c0_147], %274 {strides = array<i32>} : memref<1x4x128xf32, #tpu.memory_space<vmem>>, vector<1x1x128xf32>,
      %275 = vector.extract_strided_slice %238 {offsets = [0, 3, 0], sizes = [1, 1, 32], strides = [1, 1, 1]} : vector<1x4x32xf32> to vector<1x1x32xf32>
      %276 = vector.shape_cast %275 : vector<1x1x32xf32> to vector<1x32xf32>
      %c3_148 = arith.constant 3 : index
      %c0_149 = arith.constant 0 : index
      %c0_150 = arith.constant 0 : index
      %277 = vector.load %arg11[%c3_148, %c0_149, %c0_150] : memref<4x32x128xf32, #tpu.memory_space<vmem>>, vector<1x32x128xf32>
      %278 = vector.shape_cast %277 : vector<1x32x128xf32> to vector<32x128xf32>
      "tpu.trace_start"() <{level = 10 : i32, message = "bd,dc->bc"}> : () -> ()
      %cst_151 = arith.constant dense<0.000000e+00> : vector<1x128xf32>
      %279 = tpu.matmul %276, %278, %cst_151 {dimension_numbers = #tpu.dot_dimension_numbers<[1], [0], [0], [1], [0, 0, 1, 1], [], []>} : vector<1x32xf32>, vector<32x128xf32>, vector<1x128xf32> -> vector<1x128xf32>
      "tpu.trace_stop"() : () -> ()
      %c3_152 = arith.constant 3 : index
      %c0_153 = arith.constant 0 : index
      %280 = vector.load %arg12[%c3_152, %c0_153] : memref<4x128xf32, #tpu.memory_space<vmem>>, vector<1x128xf32>
      %281 = vector.shape_cast %280 : vector<1x128xf32> to vector<128xf32>
      %282 = vector.shape_cast %281 : vector<128xf32> to vector<1x128xf32>
      %283 = arith.addf %279, %282 : vector<1x128xf32>
      %c0_154 = arith.constant 0 : index
      %c3_155 = arith.constant 3 : index
      %c0_156 = arith.constant 0 : index
      %284 = vector.load %arg13[%c0_154, %c3_155, %c0_156] : memref<1x4x128xf32, #tpu.memory_space<vmem>>, vector<1x1x128xf32>
      %285 = vector.shape_cast %284 : vector<1x1x128xf32> to vector<1x128xf32>
      %286 = vector.shape_cast %283 : vector<1x128xf32> to vector<1x1x128xf32>
      tpu.vector_store %arg13[%c0_154, %c3_155, %c0_156], %286 {strides = array<i32>} : memref<1x4x128xf32, #tpu.memory_space<vmem>>, vector<1x1x128xf32>,
    } else {
    }
    return
  }
  func.func @transform_0(%arg0: i32, %arg1: i32) -> (i32, i32, i32) {
    %c0_i32 = arith.constant 0 : i32
    %c0_i32_0 = arith.constant 0 : i32
    return %arg0, %arg1, %c0_i32 : i32, i32, i32
  }
  func.func @transform_1(%arg0: i32, %arg1: i32) -> (i32, i32, i32) {
    %c0_i32 = arith.constant 0 : i32
    %c0_i32_0 = arith.constant 0 : i32
    return %arg0, %c0_i32, %arg1 : i32, i32, i32
  }
  func.func @transform_2(%arg0: i32, %arg1: i32) -> (i32, i32) {
    %c0_i32 = arith.constant 0 : i32
    %c0_i32_0 = arith.constant 0 : i32
    %c0_i32_1 = arith.constant 0 : i32
    return %c0_i32, %c0_i32_0 : i32, i32
  }
  func.func @transform_3(%arg0: i32, %arg1: i32) -> (i32, i32) {
    %c0_i32 = arith.constant 0 : i32
    %c0_i32_0 = arith.constant 0 : i32
    %c0_i32_1 = arith.constant 0 : i32
    return %c0_i32, %c0_i32_0 : i32, i32
  }
  func.func @transform_4(%arg0: i32, %arg1: i32) -> (i32, i32) {
    %c0_i32 = arith.constant 0 : i32
    %c0_i32_0 = arith.constant 0 : i32
    %c0_i32_1 = arith.constant 0 : i32
    return %c0_i32, %c0_i32_0 : i32, i32
  }
  func.func @transform_5(%arg0: i32, %arg1: i32) -> (i32, i32) {
    %c0_i32 = arith.constant 0 : i32
    %c0_i32_0 = arith.constant 0 : i32
    %c0_i32_1 = arith.constant 0 : i32
    return %c0_i32, %c0_i32_0 : i32, i32
  }
  func.func @transform_6(%arg0: i32, %arg1: i32) -> (i32, i32, i32) {
    %c0_i32 = arith.constant 0 : i32
    %c0_i32_0 = arith.constant 0 : i32
    %c0_i32_1 = arith.constant 0 : i32
    %c0_i32_2 = arith.constant 0 : i32
    return %c0_i32, %c0_i32_0, %c0_i32_1 : i32, i32, i32
  }
  func.func @transform_7(%arg0: i32, %arg1: i32) -> (i32, i32, i32) {
    %c0_i32 = arith.constant 0 : i32
    %c0_i32_0 = arith.constant 0 : i32
    %c0_i32_1 = arith.constant 0 : i32
    %c0_i32_2 = arith.constant 0 : i32
    return %c0_i32, %c0_i32_0, %c0_i32_1 : i32, i32, i32
  }
  func.func @transform_8(%arg0: i32, %arg1: i32) -> (i32, i32, i32) {
    %c0_i32 = arith.constant 0 : i32
    %c0_i32_0 = arith.constant 0 : i32
    %c0_i32_1 = arith.constant 0 : i32
    %c0_i32_2 = arith.constant 0 : i32
    return %c0_i32, %c0_i32_0, %c0_i32_1 : i32, i32, i32
  }
  func.func @transform_9(%arg0: i32, %arg1: i32) -> (i32, i32, i32) {
    %c0_i32 = arith.constant 0 : i32
    %c0_i32_0 = arith.constant 0 : i32
    %c0_i32_1 = arith.constant 0 : i32
    %c0_i32_2 = arith.constant 0 : i32
    return %c0_i32, %c0_i32_0, %c0_i32_1 : i32, i32, i32
  }
  func.func @transform_10(%arg0: i32, %arg1: i32) -> (i32, i32) {
    %c0_i32 = arith.constant 0 : i32
    %c0_i32_0 = arith.constant 0 : i32
    %c0_i32_1 = arith.constant 0 : i32
    return %c0_i32, %c0_i32_0 : i32, i32
  }
  func.func @transform_11(%arg0: i32, %arg1: i32) -> (i32, i32, i32) {
    %c0_i32 = arith.constant 0 : i32
    %c0_i32_0 = arith.constant 0 : i32
    %c0_i32_1 = arith.constant 0 : i32
    return %arg0, %c0_i32, %c0_i32_0 : i32, i32, i32
  }
}

</mosaic_0001>

<llo_original>
// kernel: tpu_custom_call.1
$region0: #{tpu_custom_call.1}
  #allocation0 [shape = 'u32[]', space=smem, size = 0x4, offset = 0x4, fixed_abs, tag = 'smem constant byte address 0x4 - core index']
  #allocation1 [shape = 'u32[144,128]{1,0:T(1,128)}', space=vmem, size = 0x12000, scoped, tag = 'internal scratch']
  #allocation2 [shape = 'f32[8,32]{1,0:T(8,128)}', space=vmem, size = 0x1000, scoped, tag = 'scratch operand']
  #allocation3 [shape = 'f32[1,8,1]{2,1,0:T(8,128)}', space=vmem, size = 0x1000, scoped, tag = 'scratch operand']
  #allocation4 [shape = 'f32[1,8,1]{2,1,0:T(8,128)}', space=vmem, size = 0x1000, scoped, tag = 'scratch operand']
  #allocation5 [shape = 'f32[1,8,32]{2,1,0:T(8,128)}', space=vmem, size = 0x1000, scoped, tag = 'scratch operand']
  %s0 = inlined_call_operand.vmem [shape: f32[2,12,32], index: 0, kind: input, shape index: {}]
  %s1 = inlined_call_operand.vmem [shape: f32[2,1,12], index: 1, kind: input, shape index: {}]
  %s2 = inlined_call_operand.vmem [shape: f32[8,32], index: 2, kind: input, shape index: {}]
  %s3 = inlined_call_operand.vmem [shape: f32[4,32], index: 3, kind: input, shape index: {}]
  %s4 = inlined_call_operand.vmem [shape: f32[6,32], index: 4, kind: input, shape index: {}]
  %s5 = inlined_call_operand.vmem [shape: f32[6,32], index: 5, kind: input, shape index: {}]
  %s6 = inlined_call_operand.hbm [shape: f32[3,32,32], index: 6, kind: input, shape index: {}]
  %s7 = inlined_call_operand.hbm [shape: f32[3,32,64], index: 7, kind: input, shape index: {}]
  %s8 = inlined_call_operand.hbm [shape: f32[3,32,32], index: 8, kind: input, shape index: {}]
  %s9 = inlined_call_operand.hbm [shape: f32[4,32,128], index: 9, kind: input, shape index: {}]
  %s10 = inlined_call_operand.vmem [shape: f32[4,128], index: 10, kind: input, shape index: {}]
  %s11 = inlined_call_operand.hbm [shape: f32[2,4,128], index: 11, kind: output, shape index: {}]
  %s12 = sld [smem:[#allocation0]]
  $region101: #{tpu_custom_call.1} parent=0
    _
  %s14 = ssub.s32 1, %s12
  %s15 = scalar_select 0, %s14, %s12
  $region1: #{tpu_custom_call.1} parent=0
    #allocation6 [shape = 'u8[49152]{0}', space=vmem, size = 0xc000, scoped, tag = 'input window, operand 6, single buffered']
    #allocation7 [shape = 's32[2]{0}', space=sflag, size = 0x8, scoped, tag = 'scoped memory for tpu_custom_call.1']
    #allocation8 [shape = 's32[2]{0}', space=sflag, size = 0x8, scoped, tag = 'scoped memory for tpu_custom_call.1']
    #allocation9 [shape = 'u8[49152]{0}', space=vmem, size = 0xc000, scoped, tag = 'input window, operand 7, single buffered']
    #allocation10 [shape = 's32[1]{0}', space=sflag, size = 0x4, scoped, tag = 'scoped memory for tpu_custom_call.1']
    #allocation11 [shape = 'u8[49152]{0}', space=vmem, size = 0xc000, scoped, tag = 'input window, operand 8, single buffered']
    #allocation12 [shape = 'u8[65536]{0}', space=vmem, size = 0x10000, scoped, tag = 'input window, operand 9, single buffered']
    #allocation13 [shape = 's32[1]{0}', space=sflag, size = 0x4, scoped, tag = 'scoped memory for tpu_custom_call.1']
    #allocation14 [shape = 'u8[4096]{0}', space=vmem, size = 0x1000, scoped, tag = 'output window, operand 0']
    %16 = vsyncpa [#allocation7], 0
    %17 = vsyncpa [#allocation10], 0
    %18 = vsyncpa [#allocation13], 0
    %19 = vsyncpa [#allocation8], 0
    %s20 = scalar_lea.sflag [#allocation8], 1
    %21 = vsyncpa %s20, 0
    loop: start=0, step=1, limit=4
    $region2: #{tpu_custom_call.1} parent=1 // loop_pre_header
      _
    $region3: #{tpu_custom_call.1} parent=1 // loop_header
      %s23 = sphi 0, %s27
      %p24 = scmp.ge.s32.totalorder %s23, 4
      %s30 = sphi 0, %s42
      %s31 = sphi 0, %s38
      %s32 = sphi 0, %s30
      %s33 = sphi 0, %s31
      %s34 = sphi 0, %s32
      %s35 = sphi 0, %s33
      %s47 = sphi 0, %s49
      %s50 = sphi 0, %s47
      %s51 = sphi 0, %s50
      %s67 = sphi 0, %s51
      %s75 = sphi 0, %s77
      %s78 = sphi 0, %s75
      %s79 = sphi 0, %s78
      %s95 = sphi 0, %s79
      %s99 = sphi 0, %s99
      %s101 = sphi 0, %s99
      %s102 = sphi 0, %s101
      %s116 = sphi 0, %s102
      %s120 = sphi 0, %s120
      %s122 = sphi 0, %s120
      %s123 = sphi 0, %s122
      %s137 = sphi 0, %s123
      %s141 = sphi 0, %s141
      %s143 = sphi 0, %s141
      %s144 = sphi 0, %s143
      %s158 = sphi 0, %s144
      %s162 = sphi 0, %s162
      %s164 = sphi 0, %s162
      %s165 = sphi 0, %s164
      %s179 = sphi 0, %s165
      %s183 = sphi 0, %s183
      %s185 = sphi 0, %s183
      %s186 = sphi 0, %s185
      %s200 = sphi 0, %s186
      %s204 = sphi 0, %s204
      %s206 = sphi 0, %s204
      %s207 = sphi 0, %s206
      %s221 = sphi 0, %s207
      %s225 = sphi 0, %s225
      %s227 = sphi 0, %s225
      %s228 = sphi 0, %s227
      %s242 = sphi 0, %s228
      %s246 = sphi 0, %s246
      %s248 = sphi 0, %s246
      %s249 = sphi 0, %s248
      %s263 = sphi 0, %s249
      %s267 = sphi 0, %s267
      %s269 = sphi 0, %s267
      %s270 = sphi 0, %s269
      %s284 = sphi 0, %s270
      %s290 = sphi 0, %s292
      %s293 = sphi 0, %s290
      %s294 = sphi 0, %s293
      %s310 = sphi 0, %s294
    $region4: #{tpu_custom_call.1} parent=1 // loop_header_branch
      %26 = sbr.rel (%p24) target = $region8
    $region5: #{tpu_custom_call.1} parent=1 // loop_body
      %s28 = ssub.s32 %s23, 1
      %s29 = ssub.s32 %s23, 2
      %s36 = sadd.s32 1, %s31
      %p37 = scmp.ge.s32.totalorder %s36, 1
      %s38 = scalar_select %p37, 0, %s36
      %s39 = sadd.s32 1, %s30
      %s40 = scalar_select %p37, %s39, %s30
      %p41 = scmp.ge.s32.totalorder %s40, 2
      %s42 = scalar_select %p41, 0, %s40
      %s43 = ssub.s32 %s30, %s42
      %s44 = ssub.s32 %s31, %s38
      %s45 = sor.u32 %s43, %s44
      %p46 = scmp.eq.s32.totalorder %s45, 0
      %s48 = sadd.s32 %s47, 1
      %s49 = scalar_select %p46, %s47, %s48
      %p52 = pneg %p46
      %p53 = scmp.eq.s32.totalorder %s23, 1
      %p54 = por %p52, %p53
      %p55 = scmp.ne.s32.totalorder %s47, %s50
      %p56 = scmp.eq.s32.totalorder %s23, 0
      %p57 = por %p55, %p56
      %p58 = scmp.ne.s32.totalorder %s47, %s50
      %p59 = scmp.eq.s32.totalorder %s28, 1
      %p60 = por %p58, %p59
      %p61 = scmp.ne.s32.totalorder %s50, %s51
      %p62 = scmp.eq.s32.totalorder %s28, 0
      %p63 = por %p61, %p62
      %p64 = scmp.ne.s32.totalorder %s50, %s51
      %p65 = scmp.eq.s32.totalorder %s29, 1
      %p66 = por %p64, %p65
      %p68 = scmp.ne.s32.totalorder %s51, %s67
      %p69 = scmp.eq.s32.totalorder %s29, 0
      %p70 = por %p68, %p69
      %s71 = ssub.s32 %s30, %s42
      %s72 = ssub.s32 %s31, %s38
      %s73 = sor.u32 %s71, %s72
      %p74 = scmp.eq.s32.totalorder %s73, 0
      %s76 = sadd.s32 %s75, 1
      %s77 = scalar_select %p74, %s75, %s76
      %p80 = pneg %p74
      %p81 = scmp.eq.s32.totalorder %s23, 1
      %p82 = por %p80, %p81
      %p83 = scmp.ne.s32.totalorder %s75, %s78
      %p84 = scmp.eq.s32.totalorder %s23, 0
      %p85 = por %p83, %p84
      %p86 = scmp.ne.s32.totalorder %s75, %s78
      %p87 = scmp.eq.s32.totalorder %s28, 1
      %p88 = por %p86, %p87
      %p89 = scmp.ne.s32.totalorder %s78, %s79
      %p90 = scmp.eq.s32.totalorder %s28, 0
      %p91 = por %p89, %p90
      %p92 = scmp.ne.s32.totalorder %s78, %s79
      %p93 = scmp.eq.s32.totalorder %s29, 1
      %p94 = por %p92, %p93
      %p96 = scmp.ne.s32.totalorder %s79, %s95
      %p97 = scmp.eq.s32.totalorder %s29, 0
      %p98 = por %p96, %p97
      %s100 = sadd.s32 %s99, 1
      %p103 = scmp.eq.s32.totalorder %s23, 1
      %p104 = scmp.ne.s32.totalorder %s99, %s101
      %p105 = scmp.eq.s32.totalorder %s23, 0
      %p106 = por %p104, %p105
      %p107 = scmp.ne.s32.totalorder %s99, %s101
      %p108 = scmp.eq.s32.totalorder %s28, 1
      %p109 = por %p107, %p108
      %p110 = scmp.ne.s32.totalorder %s101, %s102
      %p111 = scmp.eq.s32.totalorder %s28, 0
      %p112 = por %p110, %p111
      %p113 = scmp.ne.s32.totalorder %s101, %s102
      %p114 = scmp.eq.s32.totalorder %s29, 1
      %p115 = por %p113, %p114
      %p117 = scmp.ne.s32.totalorder %s102, %s116
      %p118 = scmp.eq.s32.totalorder %s29, 0
      %p119 = por %p117, %p118
      %s121 = sadd.s32 %s120, 1
      %p124 = scmp.eq.s32.totalorder %s23, 1
      %p125 = scmp.ne.s32.totalorder %s120, %s122
      %p126 = scmp.eq.s32.totalorder %s23, 0
      %p127 = por %p125, %p126
      %p128 = scmp.ne.s32.totalorder %s120, %s122
      %p129 = scmp.eq.s32.totalorder %s28, 1
      %p130 = por %p128, %p129
      %p131 = scmp.ne.s32.totalorder %s122, %s123
      %p132 = scmp.eq.s32.totalorder %s28, 0
      %p133 = por %p131, %p132
      %p134 = scmp.ne.s32.totalorder %s122, %s123
      %p135 = scmp.eq.s32.totalorder %s29, 1
      %p136 = por %p134, %p135
      %p138 = scmp.ne.s32.totalorder %s123, %s137
      %p139 = scmp.eq.s32.totalorder %s29, 0
      %p140 = por %p138, %p139
      %s142 = sadd.s32 %s141, 1
      %p145 = scmp.eq.s32.totalorder %s23, 1
      %p146 = scmp.ne.s32.totalorder %s141, %s143
      %p147 = scmp.eq.s32.totalorder %s23, 0
      %p148 = por %p146, %p147
      %p149 = scmp.ne.s32.totalorder %s141, %s143
      %p150 = scmp.eq.s32.totalorder %s28, 1
      %p151 = por %p149, %p150
      %p152 = scmp.ne.s32.totalorder %s143, %s144
      %p153 = scmp.eq.s32.totalorder %s28, 0
      %p154 = por %p152, %p153
      %p155 = scmp.ne.s32.totalorder %s143, %s144
      %p156 = scmp.eq.s32.totalorder %s29, 1
      %p157 = por %p155, %p156
      %p159 = scmp.ne.s32.totalorder %s144, %s158
      %p160 = scmp.eq.s32.totalorder %s29, 0
      %p161 = por %p159, %p160
      %s163 = sadd.s32 %s162, 1
      %p166 = scmp.eq.s32.totalorder %s23, 1
      %p167 = scmp.ne.s32.totalorder %s162, %s164
      %p168 = scmp.eq.s32.totalorder %s23, 0
      %p169 = por %p167, %p168
      %p170 = scmp.ne.s32.totalorder %s162, %s164
      %p171 = scmp.eq.s32.totalorder %s28, 1
      %p172 = por %p170, %p171
      %p173 = scmp.ne.s32.totalorder %s164, %s165
      %p174 = scmp.eq.s32.totalorder %s28, 0
      %p175 = por %p173, %p174
      %p176 = scmp.ne.s32.totalorder %s164, %s165
      %p177 = scmp.eq.s32.totalorder %s29, 1
      %p178 = por %p176, %p177
      %p180 = scmp.ne.s32.totalorder %s165, %s179
      %p181 = scmp.eq.s32.totalorder %s29, 0
      %p182 = por %p180, %p181
      %s184 = sadd.s32 %s183, 1
      %p187 = scmp.eq.s32.totalorder %s23, 1
      %p188 = scmp.ne.s32.totalorder %s183, %s185
      %p189 = scmp.eq.s32.totalorder %s23, 0
      %p190 = por %p188, %p189
      %p191 = scmp.ne.s32.totalorder %s183, %s185
      %p192 = scmp.eq.s32.totalorder %s28, 1
      %p193 = por %p191, %p192
      %p194 = scmp.ne.s32.totalorder %s185, %s186
      %p195 = scmp.eq.s32.totalorder %s28, 0
      %p196 = por %p194, %p195
      %p197 = scmp.ne.s32.totalorder %s185, %s186
      %p198 = scmp.eq.s32.totalorder %s29, 1
      %p199 = por %p197, %p198
      %p201 = scmp.ne.s32.totalorder %s186, %s200
      %p202 = scmp.eq.s32.totalorder %s29, 0
      %p203 = por %p201, %p202
      %s205 = sadd.s32 %s204, 1
      %p208 = scmp.eq.s32.totalorder %s23, 1
      %p209 = scmp.ne.s32.totalorder %s204, %s206
      %p210 = scmp.eq.s32.totalorder %s23, 0
      %p211 = por %p209, %p210
      %p212 = scmp.ne.s32.totalorder %s204, %s206
      %p213 = scmp.eq.s32.totalorder %s28, 1
      %p214 = por %p212, %p213
      %p215 = scmp.ne.s32.totalorder %s206, %s207
      %p216 = scmp.eq.s32.totalorder %s28, 0
      %p217 = por %p215, %p216
      %p218 = scmp.ne.s32.totalorder %s206, %s207
      %p219 = scmp.eq.s32.totalorder %s29, 1
      %p220 = por %p218, %p219
      %p222 = scmp.ne.s32.totalorder %s207, %s221
      %p223 = scmp.eq.s32.totalorder %s29, 0
      %p224 = por %p222, %p223
      %s226 = sadd.s32 %s225, 1
      %p229 = scmp.eq.s32.totalorder %s23, 1
      %p230 = scmp.ne.s32.totalorder %s225, %s227
      %p231 = scmp.eq.s32.totalorder %s23, 0
      %p232 = por %p230, %p231
      %p233 = scmp.ne.s32.totalorder %s225, %s227
      %p234 = scmp.eq.s32.totalorder %s28, 1
      %p235 = por %p233, %p234
      %p236 = scmp.ne.s32.totalorder %s227, %s228
      %p237 = scmp.eq.s32.totalorder %s28, 0
      %p238 = por %p236, %p237
      %p239 = scmp.ne.s32.totalorder %s227, %s228
      %p240 = scmp.eq.s32.totalorder %s29, 1
      %p241 = por %p239, %p240
      %p243 = scmp.ne.s32.totalorder %s228, %s242
      %p244 = scmp.eq.s32.totalorder %s29, 0
      %p245 = por %p243, %p244
      %s247 = sadd.s32 %s246, 1
      %p250 = scmp.eq.s32.totalorder %s23, 1
      %p251 = scmp.ne.s32.totalorder %s246, %s248
      %p252 = scmp.eq.s32.totalorder %s23, 0
      %p253 = por %p251, %p252
      %p254 = scmp.ne.s32.totalorder %s246, %s248
      %p255 = scmp.eq.s32.totalorder %s28, 1
      %p256 = por %p254, %p255
      %p257 = scmp.ne.s32.totalorder %s248, %s249
      %p258 = scmp.eq.s32.totalorder %s28, 0
      %p259 = por %p257, %p258
      %p260 = scmp.ne.s32.totalorder %s248, %s249
      %p261 = scmp.eq.s32.totalorder %s29, 1
      %p262 = por %p260, %p261
      %p264 = scmp.ne.s32.totalorder %s249, %s263
      %p265 = scmp.eq.s32.totalorder %s29, 0
      %p266 = por %p264, %p265
      %s268 = sadd.s32 %s267, 1
      %p271 = scmp.eq.s32.totalorder %s23, 1
      %p272 = scmp.ne.s32.totalorder %s267, %s269
      %p273 = scmp.eq.s32.totalorder %s23, 0
      %p274 = por %p272, %p273
      %p275 = scmp.ne.s32.totalorder %s267, %s269
      %p276 = scmp.eq.s32.totalorder %s28, 1
      %p277 = por %p275, %p276
      %p278 = scmp.ne.s32.totalorder %s269, %s270
      %p279 = scmp.eq.s32.totalorder %s28, 0
      %p280 = por %p278, %p279
      %p281 = scmp.ne.s32.totalorder %s269, %s270
      %p282 = scmp.eq.s32.totalorder %s29, 1
      %p283 = por %p281, %p282
      %p285 = scmp.ne.s32.totalorder %s270, %s284
      %p286 = scmp.eq.s32.totalorder %s29, 0
      %p287 = por %p285, %p286
      %s288 = ssub.s32 %s30, %s42
      %p289 = scmp.eq.s32.totalorder %s288, 0
      %s291 = sadd.s32 %s290, 1
      %s292 = scalar_select %p289, %s290, %s291
      %p295 = pneg %p289
      %p296 = scmp.eq.s32.totalorder %s23, 1
      %p297 = por %p295, %p296
      %p298 = scmp.ne.s32.totalorder %s290, %s293
      %p299 = scmp.eq.s32.totalorder %s23, 0
      %p300 = por %p298, %p299
      %p301 = scmp.ne.s32.totalorder %s290, %s293
      %p302 = scmp.eq.s32.totalorder %s28, 1
      %p303 = por %p301, %p302
      %p304 = scmp.ne.s32.totalorder %s293, %s294
      %p305 = scmp.eq.s32.totalorder %s28, 0
      %p306 = por %p304, %p305
      %p307 = scmp.ne.s32.totalorder %s293, %s294
      %p308 = scmp.eq.s32.totalorder %s29, 1
      %p309 = por %p307, %p308
      %p311 = scmp.ne.s32.totalorder %s294, %s310
      %p312 = scmp.eq.s32.totalorder %s29, 0
      %p313 = por %p311, %p312
      %p314 = scmp.le.s32.totalorder 1, %s23
      %p315 = scmp.lt.s32.totalorder %s23, 3
      %p316 = pnand %p314, %p315
      %p317 = pneg %p316
      // Predicated region
      $region9: #{tpu_custom_call.1} parent=5 // pred_check
        _
      $region10: #{tpu_custom_call.1} parent=5 // pred_check_branch
        %319 = sbr.rel (%p316) target = $region12
      $region11: #{tpu_custom_call.1} parent=5 // pred_region
        %s320 = ssub.s32 %s23, 1
        // Predicated region
        $region13: #{tpu_custom_call.1} parent=11 // pred_check
          %p321 = pneg %p112
        $region14: #{tpu_custom_call.1} parent=11 // pred_check_branch
          %323 = sbr.rel (%p321) target = $region16
        $region15: #{tpu_custom_call.1} parent=11 // pred_region
          _
        $region16: #{tpu_custom_call.1} parent=11 // pred_fallthru
          _
        // Predicated region
        $region17: #{tpu_custom_call.1} parent=11 // pred_check
          %p324 = pneg %p133
        $region18: #{tpu_custom_call.1} parent=11 // pred_check_branch
          %326 = sbr.rel (%p324) target = $region20
        $region19: #{tpu_custom_call.1} parent=11 // pred_region
          _
        $region20: #{tpu_custom_call.1} parent=11 // pred_fallthru
          _
        // Predicated region
        $region21: #{tpu_custom_call.1} parent=11 // pred_check
          %p327 = pneg %p154
        $region22: #{tpu_custom_call.1} parent=11 // pred_check_branch
          %329 = sbr.rel (%p327) target = $region24
        $region23: #{tpu_custom_call.1} parent=11 // pred_region
          _
        $region24: #{tpu_custom_call.1} parent=11 // pred_fallthru
          _
        // Predicated region
        $region25: #{tpu_custom_call.1} parent=11 // pred_check
          %p330 = pneg %p175
        $region26: #{tpu_custom_call.1} parent=11 // pred_check_branch
          %332 = sbr.rel (%p330) target = $region28
        $region27: #{tpu_custom_call.1} parent=11 // pred_region
          _
        $region28: #{tpu_custom_call.1} parent=11 // pred_fallthru
          _
        // Predicated region
        $region29: #{tpu_custom_call.1} parent=11 // pred_check
          %p333 = pneg %p196
        $region30: #{tpu_custom_call.1} parent=11 // pred_check_branch
          %335 = sbr.rel (%p333) target = $region32
        $region31: #{tpu_custom_call.1} parent=11 // pred_region
          %s337 = ssub.s32 1536, 1536
          %338 = vsyncadd [#allocation7], %s337
          %s339 = sshll.u32 [#allocation6], 4
          %s340 = int_to_ptr.vmem [resolvable:$true] %s339
          %345 = dma.hbm_to_vmem [thread:$0]  %s6, 1536, %s340, [#allocation7], 128, 128, 8
        $region32: #{tpu_custom_call.1} parent=11 // pred_fallthru
          _
        // Predicated region
        $region33: #{tpu_custom_call.1} parent=11 // pred_check
          %p346 = pneg %p217
        $region34: #{tpu_custom_call.1} parent=11 // pred_check_branch
          %348 = sbr.rel (%p346) target = $region36
        $region35: #{tpu_custom_call.1} parent=11 // pred_region
          %s350 = ssub.s32 1536, 1536
          %351 = vsyncadd [#allocation10], %s350
          %s352 = sshll.u32 [#allocation9], 4
          %s353 = int_to_ptr.vmem [resolvable:$true] %s352
          %358 = dma.hbm_to_vmem [thread:$0]  %s7, 1536, %s353, [#allocation10], 128, 128, 8
        $region36: #{tpu_custom_call.1} parent=11 // pred_fallthru
          _
        // Predicated region
        $region37: #{tpu_custom_call.1} parent=11 // pred_check
          %p359 = pneg %p238
        $region38: #{tpu_custom_call.1} parent=11 // pred_check_branch
          %361 = sbr.rel (%p359) target = $region40
        $region39: #{tpu_custom_call.1} parent=11 // pred_region
          %s363 = ssub.s32 1536, 1536
          %364 = vsyncadd [#allocation10], %s363
          %s365 = sshll.u32 [#allocation11], 4
          %s366 = int_to_ptr.vmem [resolvable:$true] %s365
          %371 = dma.hbm_to_vmem [thread:$0]  %s8, 1536, %s366, [#allocation10], 128, 128, 8
        $region40: #{tpu_custom_call.1} parent=11 // pred_fallthru
          _
        // Predicated region
        $region41: #{tpu_custom_call.1} parent=11 // pred_check
          %p372 = pneg %p259
        $region42: #{tpu_custom_call.1} parent=11 // pred_check_branch
          %374 = sbr.rel (%p372) target = $region44
        $region43: #{tpu_custom_call.1} parent=11 // pred_region
          %s376 = ssub.s32 2048, 2048
          %377 = vsyncadd [#allocation13], %s376
          %s378 = sshll.u32 [#allocation12], 4
          %s379 = int_to_ptr.vmem [resolvable:$true] %s378
          %384 = dma.hbm_to_vmem [thread:$0]  %s9, 2048, %s379, [#allocation13], 128, 128, 8
        $region44: #{tpu_custom_call.1} parent=11 // pred_fallthru
          _
        // Predicated region
        $region45: #{tpu_custom_call.1} parent=11 // pred_check
          %p385 = pneg %p280
        $region46: #{tpu_custom_call.1} parent=11 // pred_check_branch
          %387 = sbr.rel (%p385) target = $region48
        $region47: #{tpu_custom_call.1} parent=11 // pred_region
          _
        $region48: #{tpu_custom_call.1} parent=11 // pred_fallthru
          _
      $region12: #{tpu_custom_call.1} parent=5 // pred_fallthru
        _
      %p388 = scmp.lt.s32.totalorder %s23, 2
      // Predicated region
      $region49: #{tpu_custom_call.1} parent=5 // pred_check
        %p389 = pneg %p388
      $region50: #{tpu_custom_call.1} parent=5 // pred_check_branch
        %391 = sbr.rel (%p389) target = $region52
      $region51: #{tpu_custom_call.1} parent=5 // pred_region
        // Predicated region
        $region53: #{tpu_custom_call.1} parent=51 // pred_check
          %p392 = pneg %p57
        $region54: #{tpu_custom_call.1} parent=51 // pred_check_branch
          %394 = sbr.rel (%p392) target = $region56
        $region55: #{tpu_custom_call.1} parent=51 // pred_region
          %s395 = smul.u32 2, %s31
          %p396 = scmp.lt.s32.totalorder %s30, 1
          %s397 = scalar_select %p396, %s30, 1
          %p398 = scmp.lt.s32.totalorder %s395, 1
          %s399 = scalar_select %p398, %s395, 1
          %s400 = smul.addr %s397, 2
          %s401 = sadd.s32 %s399, %s400
          %s402 = smul.addr %s401, 8
          %s403 = scalar_lea.vmem %s0, %s402
          %s404 = smul.u32 2, %s31
        $region56: #{tpu_custom_call.1} parent=51 // pred_fallthru
          _
        // Predicated region
        $region57: #{tpu_custom_call.1} parent=51 // pred_check
          %p405 = pneg %p85
        $region58: #{tpu_custom_call.1} parent=51 // pred_check_branch
          %407 = sbr.rel (%p405) target = $region60
        $region59: #{tpu_custom_call.1} parent=51 // pred_region
          %p408 = scmp.lt.s32.totalorder %s30, 1
          %s409 = scalar_select %p408, %s30, 1
          %p410 = scmp.lt.s32.totalorder %s31, 0
          %s411 = scalar_select %p410, %s31, 0
          %s412 = sadd.s32 %s411, %s409
          %s413 = scalar_lea.vmem %s1, %s412
        $region60: #{tpu_custom_call.1} parent=51 // pred_fallthru
          _
      $region52: #{tpu_custom_call.1} parent=5 // pred_fallthru
        _
      %p414 = scmp.le.s32.totalorder 1, %s23
      %p415 = scmp.lt.s32.totalorder %s23, 3
      %p416 = pnand %p414, %p415
      %p417 = pneg %p416
      // Predicated region
      $region61: #{tpu_custom_call.1} parent=5 // pred_check
        _
      $region62: #{tpu_custom_call.1} parent=5 // pred_check_branch
        %419 = sbr.rel (%p416) target = $region64
      $region63: #{tpu_custom_call.1} parent=5 // pred_region
        %s420 = ssub.s32 %s23, 1
        // Predicated region
        $region65: #{tpu_custom_call.1} parent=63 // pred_check
          %p421 = pneg %p196
        $region66: #{tpu_custom_call.1} parent=63 // pred_check_branch
          %423 = sbr.rel (%p421) target = $region68
        $region67: #{tpu_custom_call.1} parent=63 // pred_region
          %424 = dma.done [#allocation7], 1536
        $region68: #{tpu_custom_call.1} parent=63 // pred_fallthru
          _
        // Predicated region
        $region69: #{tpu_custom_call.1} parent=63 // pred_check
          %p425 = pneg %p217
        $region70: #{tpu_custom_call.1} parent=63 // pred_check_branch
          %427 = sbr.rel (%p425) target = $region72
        $region71: #{tpu_custom_call.1} parent=63 // pred_region
          %428 = dma.done [#allocation10], 1536
        $region72: #{tpu_custom_call.1} parent=63 // pred_fallthru
          _
        // Predicated region
        $region73: #{tpu_custom_call.1} parent=63 // pred_check
          %p429 = pneg %p238
        $region74: #{tpu_custom_call.1} parent=63 // pred_check_branch
          %431 = sbr.rel (%p429) target = $region76
        $region75: #{tpu_custom_call.1} parent=63 // pred_region
          %432 = dma.done [#allocation10], 1536
        $region76: #{tpu_custom_call.1} parent=63 // pred_fallthru
          _
        // Predicated region
        $region77: #{tpu_custom_call.1} parent=63 // pred_check
          %p433 = pneg %p259
        $region78: #{tpu_custom_call.1} parent=63 // pred_check_branch
          %435 = sbr.rel (%p433) target = $region80
        $region79: #{tpu_custom_call.1} parent=63 // pred_region
          %436 = dma.done [#allocation13], 2048
        $region80: #{tpu_custom_call.1} parent=63 // pred_fallthru
          _
        %s437 = smul.u32 2, %s33
        %p438 = scmp.lt.s32.totalorder %s32, 1
        %s439 = scalar_select %p438, %s32, 1
        %p440 = scmp.lt.s32.totalorder %s437, 1
        %s441 = scalar_select %p440, %s437, 1
        %s442 = smul.addr %s439, 2
        %s443 = sadd.s32 %s441, %s442
        %s444 = smul.addr %s443, 8
        %s445 = scalar_lea.vmem %s0, %s444
        %p446 = pneg %p63
        %p447 = pneg %p60
        %p448 = scmp.lt.s32.totalorder %s32, 1
        %s449 = scalar_select %p448, %s32, 1
        %p450 = scmp.lt.s32.totalorder %s33, 0
        %s451 = scalar_select %p450, %s33, 0
        %s452 = sadd.s32 %s451, %s449
        %s453 = scalar_lea.vmem %s1, %s452
        %p454 = pneg %p91
        %p455 = pneg %p88
        %p456 = pneg %p112
        %p457 = pneg %p109
        %p458 = pneg %p133
        %p459 = pneg %p130
        %p460 = pneg %p154
        %p461 = pneg %p151
        %p462 = pneg %p175
        %p463 = pneg %p172
        %p464 = pneg %p196
        %p465 = pneg %p193
        %p466 = pneg %p217
        %p467 = pneg %p214
        %p468 = pneg %p238
        %p469 = pneg %p235
        %p470 = pneg %p259
        %p471 = pneg %p256
        %p472 = pneg %p280
        %p473 = pneg %p277
        %p474 = pneg %p306
        %p475 = pneg %p303
        %s476 = sand.u32 %s293, 1
        %s477 = scalar_lea.sflag [#allocation8], %s476
        %s478 = sand.u32 %s293, 1
        %s479 = smul.addr %s478, 4
        %s480 = scalar_lea.vmem [#allocation14], %s479
        %s481 = smul.u32 2, %s33
        %p482 = scmp.lt.s32.totalorder %s32, 1
        %s483 = scalar_select %p482, %s32, 1
        %p484 = scmp.lt.s32.totalorder %s481, 1
        %s485 = scalar_select %p484, %s481, 1
        %s486 = smul.addr %s483, 2
        %s487 = sadd.s32 %s485, %s486
        %s488 = smul.addr %s487, 8
        %s489 = scalar_lea.vmem %s0, %s488
        %s490 = smul.u32 2, %s33
        %p491 = scmp.lt.s32.totalorder %s32, 1
        %s492 = scalar_select %p491, %s32, 1
        %p493 = scmp.lt.s32.totalorder %s33, 0
        %s494 = scalar_select %p493, %s33, 0
        %s495 = sadd.s32 %s494, %s492
        %s496 = scalar_lea.vmem %s1, %s495
        %v497 = vld [vmem:[%s2] sm:$0xff]
        %p498 = scmp.eq.s32.totalorder %s33, 0
        // Predicated region
        $region81: #{tpu_custom_call.1} parent=63 // pred_check
          %p499 = pneg %p498
        $region82: #{tpu_custom_call.1} parent=63 // pred_check_branch
          %501 = sbr.rel (%p499) target = $region84
        $region83: #{tpu_custom_call.1} parent=63 // pred_region
          %vm502 = vcmask 261120
          %v503 = vsel %vm502, %v497, 0.0
          %504 = vadd.xlane.f32.xlu0 %v503
          %v505 = vpop.xlane.xlu0 %504
          %v506 = vrcp.pop 32.0
          %v507 = vmul.f32 %v505, %v506
          %v508 = vsub.f32 %v497, %v507
          %v509 = vmul.f32 %v508, %v508
          %v510 = vsel %vm502, %v509, 0.0
          %511 = vadd.xlane.f32.xlu0 %v510
          %v512 = vpop.xlane.xlu0 %511
          %v513 = vmul.f32 %v512, %v506
          %v514 = vadd.f32 %v513, 1e-05
          %v515 = vrsqrt.pop %v514
          %v516 = vmul.f32 %v508, %v515
          %v517 = vld [vmem:[%s4] sm:$0x1]
          %v518 = vlaneseq
          %v519 = vshrl.u32 %v518, 7
          %v520 = vsub.s32 0, %v519
          %v521 = vrot.slane %v517, %v520
          %v522 = vmul.f32 %v516, %v521
          %v523 = vld [vmem:[%s5] sm:$0x1]
          %v524 = vlaneseq
          %v525 = vshrl.u32 %v524, 7
          %v526 = vsub.s32 0, %v525
          %v527 = vrot.slane %v523, %v526
          %v528 = vadd.f32 %v522, %v527
          %v529 = vld [vmem:[#allocation6] sm:$0xff]
          %v530 = vld [vmem:[#allocation6 + $0x8] sm:$0xff]
          %v531 = vld [vmem:[#allocation6 + $0x10] sm:$0xff]
          %v532 = vld [vmem:[#allocation6 + $0x18] sm:$0xff]
          %v534 = vsel %vm502, %v528, 0
          %536 = vmatprep.subr.mxu0 0.0
          %537 = vmatpush1.msra.mxu0 %v529
          %538 = vmatprep.subr.mxu0 0.0
          %539 = vmatpush1.msra.mxu0 %v530
          %540 = vmatprep.subr.mxu0 0.0
          %541 = vmatpush1.msra.mxu0 %v531
          %542 = vmatprep.subr.mxu0 0.0
          %543 = vmatpush1.msra.mxu0 %v532
          %544 = vmatprep.subr.mxu0 0.0
          %545 = vmatpush1.msra.mxu0 0.0
          %546 = vmatprep.subr.mxu0 0.0
          %547 = vmatpush1.msra.mxu0 0.0
          %548 = vmatprep.subr.mxu0 0.0
          %549 = vmatpush1.msra.mxu0 0.0
          %550 = vmatprep.subr.mxu0 0.0
          %551 = vmatpush1.msra.mxu0 0.0
          %552 = vmatprep.subr.mxu0 0.0
          %553 = vmatpush1.msra.mxu0 0.0
          %554 = vmatprep.subr.mxu0 0.0
          %555 = vmatpush1.msra.mxu0 0.0
          %556 = vmatprep.subr.mxu0 0.0
          %557 = vmatpush1.msra.mxu0 0.0
          %558 = vmatprep.subr.mxu0 0.0
          %559 = vmatpush1.msra.mxu0 0.0
          %560 = vmatprep.subr.mxu0 0.0
          %561 = vmatpush1.msra.mxu0 0.0
          %562 = vmatprep.subr.mxu0 0.0
          %563 = vmatpush1.msra.mxu0 0.0
          %564 = vmatprep.subr.mxu0 0.0
          %565 = vmatpush1.msra.mxu0 0.0
          %566 = vmatprep.subr.mxu0 0.0
          %567 = vmatpush1.msra.mxu0 0.0
          %568 = vmatprep.subr.mxu0 0.0
          %569 = vmatpush1.msra.mxu0 0.0
          %570 = vmatprep.subr.mxu0 0.0
          %571 = vmatpush1.msra.mxu0 0.0
          %572 = vmatprep.subr.mxu0 0.0
          %573 = vmatpush1.msra.mxu0 0.0
          %574 = vmatprep.subr.mxu0 0.0
          %575 = vmatpush1.msra.mxu0 0.0
          %576 = vmatprep.subr.mxu0 0.0
          %577 = vmatpush1.msra.mxu0 0.0
          %578 = vmatprep.subr.mxu0 0.0
          %579 = vmatpush1.msra.mxu0 0.0
          %580 = vmatprep.subr.mxu0 0.0
          %581 = vmatpush1.msra.mxu0 0.0
          %582 = vmatprep.subr.mxu0 0.0
          %583 = vmatpush1.msra.mxu0 0.0
          %584 = vmatprep.subr.mxu0 0.0
          %585 = vmatpush1.msra.mxu0 0.0
          %586 = vmatprep.subr.mxu0 0.0
          %587 = vmatpush1.msra.mxu0 0.0
          %588 = vmatprep.subr.mxu0 0.0
          %589 = vmatpush1.msra.mxu0 0.0
          %590 = vmatprep.subr.mxu0 0.0
          %591 = vmatpush1.msra.mxu0 0.0
          %592 = vmatprep.subr.mxu0 0.0
          %593 = vmatpush1.msra.mxu0 0.0
          %594 = vmatprep.subr.mxu0 0.0
          %595 = vmatpush1.msra.mxu0 0.0
          %596 = vmatprep.subr.mxu0 0.0
          %597 = vmatpush1.msra.mxu0 0.0
          %598 = vmatprep.subr.mxu0 0.0
          %599 = vmatpush1.msra.mxu0 0.0
          %600 = vmatprep.mubr.f32.mxu0 0.0
          %601 = vmatmul.mubr.f32.gmra.mrb[0].mxu0 %v534
          %v602 = vpop.f32.mrb[0].mxu0
          %v603 = vadd.f32 0.0, %v602
          %v604 = vpop.f32.mrb[0].mxu0
          %605 = vdwg.mxu0
          %606 = vst.msk [vmem:[#allocation2] sm:$0xff] %vm502, %v603
          %vm607 = vcmask 7168
          %608 = vst.msk [vmem:[#allocation3] sm:$0xff] %vm607, -inf
          %609 = vst.msk [vmem:[#allocation4] sm:$0xff] %vm607, 0.0
          %610 = vst.msk [vmem:[#allocation5] sm:$0xff] %vm502, 0.0
        $region84: #{tpu_custom_call.1} parent=63 // pred_fallthru
          _
        %v611 = vld [vmem:[%s489] sm:$0xff]
        %v612 = vld [vmem:[%s489 + $0x8] sm:$0xf]
        %vm613 = vcmask 261120
        %v614 = vsel %vm613, %v611, 0.0
        %615 = vadd.xlane.f32.xlu0 %v614
        %v616 = vpop.xlane.xlu0 %615
        %vm617 = vcmask 257024
        %v618 = vsel %vm617, %v612, 0.0
        %619 = vadd.xlane.f32.xlu0 %v618
        %v620 = vpop.xlane.xlu0 %619
        %v621 = vrcp.pop 32.0
        %v622 = vmul.f32 %v616, %v621
        %v623 = vmul.f32 %v620, %v621
        %v624 = vsub.f32 %v611, %v622
        %v625 = vsub.f32 %v612, %v623
        %v626 = vmul.f32 %v624, %v624
        %v627 = vmul.f32 %v625, %v625
        %v628 = vsel %vm613, %v626, 0.0
        %629 = vadd.xlane.f32.xlu0 %v628
        %v630 = vpop.xlane.xlu0 %629
        %v631 = vsel %vm617, %v627, 0.0
        %632 = vadd.xlane.f32.xlu0 %v631
        %v633 = vpop.xlane.xlu0 %632
        %v634 = vmul.f32 %v630, %v621
        %v635 = vmul.f32 %v633, %v621
        %v636 = vadd.f32 %v634, 1e-05
        %v637 = vadd.f32 %v635, 1e-05
        %v638 = vrsqrt.pop %v636
        %v639 = vrsqrt.pop %v637
        %v640 = vmul.f32 %v624, %v638
        %v641 = vmul.f32 %v625, %v639
        %v642 = vld [vmem:[%s4 + $0x1] sm:$0x1]
        %v643 = vlaneseq
        %v644 = vshrl.u32 %v643, 7
        %v645 = vsub.s32 0, %v644
        %v646 = vrot.slane %v642, %v645
        %v647 = vmul.f32 %v640, %v646
        %v648 = vmul.f32 %v641, %v646
        %v649 = vld [vmem:[%s5 + $0x1] sm:$0x1]
        %v650 = vlaneseq
        %v651 = vshrl.u32 %v650, 7
        %v652 = vsub.s32 0, %v651
        %v653 = vrot.slane %v649, %v652
        %v654 = vadd.f32 %v647, %v653
        %v655 = vadd.f32 %v648, %v653
        %v656 = vld [vmem:[#allocation9] sm:$0xff]
        %v657 = vld [vmem:[#allocation9 + $0x8] sm:$0xff]
        %v658 = vld [vmem:[#allocation9 + $0x10] sm:$0xff]
        %v659 = vld [vmem:[#allocation9 + $0x18] sm:$0xff]
        %v661 = vsel %vm613, %v654, 0
        %v664 = vsel %vm613, %v655, 0
        %666 = vmatprep.subr.mxu0 0.0
        %667 = vmatpush1.msra.mxu0 %v656
        %668 = vmatprep.subr.mxu0 0.0
        %669 = vmatpush1.msra.mxu0 %v657
        %670 = vmatprep.subr.mxu0 0.0
        %671 = vmatpush1.msra.mxu0 %v658
        %672 = vmatprep.subr.mxu0 0.0
        %673 = vmatpush1.msra.mxu0 %v659
        %674 = vmatprep.subr.mxu0 0.0
        %675 = vmatpush1.msra.mxu0 0.0
        %676 = vmatprep.subr.mxu0 0.0
        %677 = vmatpush1.msra.mxu0 0.0
        %678 = vmatprep.subr.mxu0 0.0
        %679 = vmatpush1.msra.mxu0 0.0
        %680 = vmatprep.subr.mxu0 0.0
        %681 = vmatpush1.msra.mxu0 0.0
        %682 = vmatprep.subr.mxu0 0.0
        %683 = vmatpush1.msra.mxu0 0.0
        %684 = vmatprep.subr.mxu0 0.0
        %685 = vmatpush1.msra.mxu0 0.0
        %686 = vmatprep.subr.mxu0 0.0
        %687 = vmatpush1.msra.mxu0 0.0
        %688 = vmatprep.subr.mxu0 0.0
        %689 = vmatpush1.msra.mxu0 0.0
        %690 = vmatprep.subr.mxu0 0.0
        %691 = vmatpush1.msra.mxu0 0.0
        %692 = vmatprep.subr.mxu0 0.0
        %693 = vmatpush1.msra.mxu0 0.0
        %694 = vmatprep.subr.mxu0 0.0
        %695 = vmatpush1.msra.mxu0 0.0
        %696 = vmatprep.subr.mxu0 0.0
        %697 = vmatpush1.msra.mxu0 0.0
        %698 = vmatprep.subr.mxu0 0.0
        %699 = vmatpush1.msra.mxu0 0.0
        %700 = vmatprep.subr.mxu0 0.0
        %701 = vmatpush1.msra.mxu0 0.0
        %702 = vmatprep.subr.mxu0 0.0
        %703 = vmatpush1.msra.mxu0 0.0
        %704 = vmatprep.subr.mxu0 0.0
        %705 = vmatpush1.msra.mxu0 0.0
        %706 = vmatprep.subr.mxu0 0.0
        %707 = vmatpush1.msra.mxu0 0.0
        %708 = vmatprep.subr.mxu0 0.0
        %709 = vmatpush1.msra.mxu0 0.0
        %710 = vmatprep.subr.mxu0 0.0
        %711 = vmatpush1.msra.mxu0 0.0
        %712 = vmatprep.subr.mxu0 0.0
        %713 = vmatpush1.msra.mxu0 0.0
        %714 = vmatprep.subr.mxu0 0.0
        %715 = vmatpush1.msra.mxu0 0.0
        %716 = vmatprep.subr.mxu0 0.0
        %717 = vmatpush1.msra.mxu0 0.0
        %718 = vmatprep.subr.mxu0 0.0
        %719 = vmatpush1.msra.mxu0 0.0
        %720 = vmatprep.subr.mxu0 0.0
        %721 = vmatpush1.msra.mxu0 0.0
        %722 = vmatprep.subr.mxu0 0.0
        %723 = vmatpush1.msra.mxu0 0.0
        %724 = vmatprep.subr.mxu0 0.0
        %725 = vmatpush1.msra.mxu0 0.0
        %726 = vmatprep.subr.mxu0 0.0
        %727 = vmatpush1.msra.mxu0 0.0
        %728 = vmatprep.subr.mxu0 0.0
        %729 = vmatpush1.msra.mxu0 0.0
        %730 = vmatprep.mubr.f32.mxu0 0.0
        %731 = vmatmul.mubr.f32.gmra.mrb[0].mxu0 %v661
        %v732 = vpop.f32.mrb[0].mxu0
        %v733 = vadd.f32 0.0, %v732
        %v734 = vpop.f32.mrb[0].mxu0
        %735 = vmatprep.mubr.f32.mxu0 0.0
        %736 = vmatmul.mubr.f32.gmra.mrb[0].mxu0 %v664
        %v737 = vpop.f32.mrb[0].mxu0
        %v738 = vadd.f32 0.0, %v737
        %v739 = vpop.f32.mrb[0].mxu0
        %740 = vdwg.mxu0
        %v741 = vld [vmem:[#allocation2] sm:$0xff]
        %v742 = vld [vmem:[%s496] sm:$0x1]
        %v744 = vlaneseq
        %v745 = vshrl.u32 %v744, 7
        %v746 = vsub.s32 0, %v745
        %v747 = vrot.slane %v742, %v746
        %v750 = vsel %vm613, %v741, 0
        %v753 = vsel %vm613, %v733, 0
        %v756 = vsel %vm613, %v738, 0
        %758 = vmatprep.subr.mxu0 0.0
        %759 = vmatpush1.xpose.msra.mxu0 %v753
        %760 = vmatprep.subr.mxu0 0.0
        %761 = vmatpush1.xpose.msra.mxu0 %v756
        %762 = vmatprep.subr.mxu0 0.0
        %763 = vmatpush1.xpose.msra.mxu0 0.0
        %764 = vmatprep.subr.mxu0 0.0
        %765 = vmatpush1.xpose.msra.mxu0 0.0
        %766 = vmatprep.subr.mxu0 0.0
        %767 = vmatpush1.xpose.msra.mxu0 0.0
        %768 = vmatprep.subr.mxu0 0.0
        %769 = vmatpush1.xpose.msra.mxu0 0.0
        %770 = vmatprep.subr.mxu0 0.0
        %771 = vmatpush1.xpose.msra.mxu0 0.0
        %772 = vmatprep.subr.mxu0 0.0
        %773 = vmatpush1.xpose.msra.mxu0 0.0
        %774 = vmatprep.subr.mxu0 0.0
        %775 = vmatpush1.xpose.msra.mxu0 0.0
        %776 = vmatprep.subr.mxu0 0.0
        %777 = vmatpush1.xpose.msra.mxu0 0.0
        %778 = vmatprep.subr.mxu0 0.0
        %779 = vmatpush1.xpose.msra.mxu0 0.0
        %780 = vmatprep.subr.mxu0 0.0
        %781 = vmatpush1.xpose.msra.mxu0 0.0
        %782 = vmatprep.subr.mxu0 0.0
        %783 = vmatpush1.xpose.msra.mxu0 0.0
        %784 = vmatprep.subr.mxu0 0.0
        %785 = vmatpush1.xpose.msra.mxu0 0.0
        %786 = vmatprep.subr.mxu0 0.0
        %787 = vmatpush1.xpose.msra.mxu0 0.0
        %788 = vmatprep.subr.mxu0 0.0
        %789 = vmatpush1.xpose.msra.mxu0 0.0
        %790 = vmatprep.subr.mxu0 0.0
        %791 = vmatpush1.xpose.msra.mxu0 0.0
        %792 = vmatprep.subr.mxu0 0.0
        %793 = vmatpush1.xpose.msra.mxu0 0.0
        %794 = vmatprep.subr.mxu0 0.0
        %795 = vmatpush1.xpose.msra.mxu0 0.0
        %796 = vmatprep.subr.mxu0 0.0
        %797 = vmatpush1.xpose.msra.mxu0 0.0
        %798 = vmatprep.subr.mxu0 0.0
        %799 = vmatpush1.xpose.msra.mxu0 0.0
        %800 = vmatprep.subr.mxu0 0.0
        %801 = vmatpush1.xpose.msra.mxu0 0.0
        %802 = vmatprep.subr.mxu0 0.0
        %803 = vmatpush1.xpose.msra.mxu0 0.0
        %804 = vmatprep.subr.mxu0 0.0
        %805 = vmatpush1.xpose.msra.mxu0 0.0
        %806 = vmatprep.subr.mxu0 0.0
        %807 = vmatpush1.xpose.msra.mxu0 0.0
        %808 = vmatprep.subr.mxu0 0.0
        %809 = vmatpush1.xpose.msra.mxu0 0.0
        %810 = vmatprep.subr.mxu0 0.0
        %811 = vmatpush1.xpose.msra.mxu0 0.0
        %812 = vmatprep.subr.mxu0 0.0
        %813 = vmatpush1.xpose.msra.mxu0 0.0
        %814 = vmatprep.subr.mxu0 0.0
        %815 = vmatpush1.xpose.msra.mxu0 0.0
        %816 = vmatprep.subr.mxu0 0.0
        %817 = vmatpush1.xpose.msra.mxu0 0.0
        %818 = vmatprep.subr.mxu0 0.0
        %819 = vmatpush1.xpose.msra.mxu0 0.0
        %820 = vmatprep.subr.mxu0 0.0
        %821 = vmatpush1.xpose.msra.mxu0 0.0
        %822 = vmatprep.mubr.f32.mxu0 0.0
        %823 = vmatmul.mubr.f32.gmra.mrb[0].mxu0 %v750
        %v824 = vpop.f32.mrb[0].mxu0
        %v825 = vadd.f32 %v747, %v824
        %v826 = vpop.f32.mrb[0].mxu0
        %827 = vdwg.mxu0
        %v828 = vld [vmem:[#allocation3] sm:$0xff]
        %vm829 = vcmask 97280
        %v830 = vsel %vm829, %v825, -inf
        %831 = vmax.xlane.f32.xlu0 %v830
        %v832 = vpop.xlane.xlu0 %831
        %v833 = vmax.f32 %v828, %v832
        %v834 = vsub.f32 %v828, %v833
        %v835 = vmul.f32 %v834, 1.442695
        %v836 = vpow.pop %v835
        %838 = vset.pattern.permute.xlu0 0
        %839 = vperm.xlu0 %838, %v833
        %v840 = vpop.permute.xlu0 %839
        %v842 = vsub.f32 %v825, %v840
        %v843 = vmul.f32 %v842, 1.442695
        %v844 = vpow.pop %v843
        %v845 = vld [vmem:[#allocation4] sm:$0xff]
        %v846 = vmul.f32 %v836, %v845
        %v847 = vsel %vm829, %v844, 0.0
        %848 = vadd.xlane.f32.xlu0 %v847
        %v849 = vpop.xlane.xlu0 %848
        %v850 = vadd.f32 %v846, %v849
        %vm851 = vcmask 7168
        %852 = vst.msk [vmem:[#allocation4] sm:$0xff] %vm851, %v850
        %v853 = vld [vmem:[#allocation5] sm:$0xff]
        %855 = vset.pattern.permute.xlu0 0
        %856 = vperm.xlu0 %855, %v836
        %v857 = vpop.permute.xlu0 %856
        %v859 = vmul.f32 %v857, %v853
        %860 = vrot.lane.b32.xlu0 %v733, 96
        %v861 = vpop.permute.xlu0 %860
        %862 = vrot.lane.b32.xlu0 %v738, 96
        %v863 = vpop.permute.xlu0 %862
        %v866 = vsel %vm829, %v844, 0
        %vm868 = vcmask 1043456
        %v869 = vsel %vm868, %v863, 0
        %871 = vmatprep.subr.mxu0 0.0
        %872 = vmatpush1.msra.mxu0 %v861
        %873 = vmatprep.subr.mxu0 0.0
        %874 = vmatpush1.msra.mxu0 %v869
        %875 = vmatprep.subr.mxu0 0.0
        %876 = vmatpush1.msra.mxu0 0.0
        %877 = vmatprep.subr.mxu0 0.0
        %878 = vmatpush1.msra.mxu0 0.0
        %879 = vmatprep.subr.mxu0 0.0
        %880 = vmatpush1.msra.mxu0 0.0
        %881 = vmatprep.subr.mxu0 0.0
        %882 = vmatpush1.msra.mxu0 0.0
        %883 = vmatprep.subr.mxu0 0.0
        %884 = vmatpush1.msra.mxu0 0.0
        %885 = vmatprep.subr.mxu0 0.0
        %886 = vmatpush1.msra.mxu0 0.0
        %887 = vmatprep.subr.mxu0 0.0
        %888 = vmatpush1.msra.mxu0 0.0
        %889 = vmatprep.subr.mxu0 0.0
        %890 = vmatpush1.msra.mxu0 0.0
        %891 = vmatprep.subr.mxu0 0.0
        %892 = vmatpush1.msra.mxu0 0.0
        %893 = vmatprep.subr.mxu0 0.0
        %894 = vmatpush1.msra.mxu0 0.0
        %895 = vmatprep.subr.mxu0 0.0
        %896 = vmatpush1.msra.mxu0 0.0
        %897 = vmatprep.subr.mxu0 0.0
        %898 = vmatpush1.msra.mxu0 0.0
        %899 = vmatprep.subr.mxu0 0.0
        %900 = vmatpush1.msra.mxu0 0.0
        %901 = vmatprep.subr.mxu0 0.0
        %902 = vmatpush1.msra.mxu0 0.0
        %903 = vmatprep.subr.mxu0 0.0
        %904 = vmatpush1.msra.mxu0 0.0
        %905 = vmatprep.subr.mxu0 0.0
        %906 = vmatpush1.msra.mxu0 0.0
        %907 = vmatprep.subr.mxu0 0.0
        %908 = vmatpush1.msra.mxu0 0.0
        %909 = vmatprep.subr.mxu0 0.0
        %910 = vmatpush1.msra.mxu0 0.0
        %911 = vmatprep.subr.mxu0 0.0
        %912 = vmatpush1.msra.mxu0 0.0
        %913 = vmatprep.subr.mxu0 0.0
        %914 = vmatpush1.msra.mxu0 0.0
        %915 = vmatprep.subr.mxu0 0.0
        %916 = vmatpush1.msra.mxu0 0.0
        %917 = vmatprep.subr.mxu0 0.0
        %918 = vmatpush1.msra.mxu0 0.0
        %919 = vmatprep.subr.mxu0 0.0
        %920 = vmatpush1.msra.mxu0 0.0
        %921 = vmatprep.subr.mxu0 0.0
        %922 = vmatpush1.msra.mxu0 0.0
        %923 = vmatprep.subr.mxu0 0.0
        %924 = vmatpush1.msra.mxu0 0.0
        %925 = vmatprep.subr.mxu0 0.0
        %926 = vmatpush1.msra.mxu0 0.0
        %927 = vmatprep.subr.mxu0 0.0
        %928 = vmatpush1.msra.mxu0 0.0
        %929 = vmatprep.subr.mxu0 0.0
        %930 = vmatpush1.msra.mxu0 0.0
        %931 = vmatprep.subr.mxu0 0.0
        %932 = vmatpush1.msra.mxu0 0.0
        %933 = vmatprep.subr.mxu0 0.0
        %934 = vmatpush1.msra.mxu0 0.0
        %935 = vmatprep.mubr.f32.mxu0 0.0
        %936 = vmatmul.mubr.f32.gmra.mrb[0].mxu0 %v866
        %v937 = vpop.f32.mrb[0].mxu0
        %v938 = vadd.f32 0.0, %v937
        %v939 = vpop.f32.mrb[0].mxu0
        %940 = vdwg.mxu0
        %v941 = vadd.f32 %v859, %v938
        %942 = vst.msk [vmem:[#allocation5] sm:$0xff] %vm613, %v941
        %943 = vst.msk [vmem:[#allocation3] sm:$0xff] %vm851, %v833
        // Predicated region
        $region85: #{tpu_custom_call.1} parent=63 // pred_check
          %p944 = pneg %p498
        $region86: #{tpu_custom_call.1} parent=63 // pred_check_branch
          %946 = sbr.rel (%p944) target = $region88
        $region87: #{tpu_custom_call.1} parent=63 // pred_region
          %v947 = vld [vmem:[#allocation5] sm:$0xff]
          %v948 = vld [vmem:[#allocation4] sm:$0xff]
          %950 = vset.pattern.permute.xlu0 0
          %951 = vperm.xlu0 %950, %v948
          %v952 = vpop.permute.xlu0 %951
          %v954 = vrcp.pop %v952
          %v955 = vmul.f32 %v947, %v954
          %v956 = vld [vmem:[#allocation11] sm:$0xff]
          %v957 = vld [vmem:[#allocation11 + $0x8] sm:$0xff]
          %v958 = vld [vmem:[#allocation11 + $0x10] sm:$0xff]
          %v959 = vld [vmem:[#allocation11 + $0x18] sm:$0xff]
          %v961 = vsel %vm613, %v955, 0
          %963 = vmatprep.subr.mxu0 0.0
          %964 = vmatpush1.msra.mxu0 %v956
          %965 = vmatprep.subr.mxu0 0.0
          %966 = vmatpush1.msra.mxu0 %v957
          %967 = vmatprep.subr.mxu0 0.0
          %968 = vmatpush1.msra.mxu0 %v958
          %969 = vmatprep.subr.mxu0 0.0
          %970 = vmatpush1.msra.mxu0 %v959
          %971 = vmatprep.subr.mxu0 0.0
          %972 = vmatpush1.msra.mxu0 0.0
          %973 = vmatprep.subr.mxu0 0.0
          %974 = vmatpush1.msra.mxu0 0.0
          %975 = vmatprep.subr.mxu0 0.0
          %976 = vmatpush1.msra.mxu0 0.0
          %977 = vmatprep.subr.mxu0 0.0
          %978 = vmatpush1.msra.mxu0 0.0
          %979 = vmatprep.subr.mxu0 0.0
          %980 = vmatpush1.msra.mxu0 0.0
          %981 = vmatprep.subr.mxu0 0.0
          %982 = vmatpush1.msra.mxu0 0.0
          %983 = vmatprep.subr.mxu0 0.0
          %984 = vmatpush1.msra.mxu0 0.0
          %985 = vmatprep.subr.mxu0 0.0
          %986 = vmatpush1.msra.mxu0 0.0
          %987 = vmatprep.subr.mxu0 0.0
          %988 = vmatpush1.msra.mxu0 0.0
          %989 = vmatprep.subr.mxu0 0.0
          %990 = vmatpush1.msra.mxu0 0.0
          %991 = vmatprep.subr.mxu0 0.0
          %992 = vmatpush1.msra.mxu0 0.0
          %993 = vmatprep.subr.mxu0 0.0
          %994 = vmatpush1.msra.mxu0 0.0
          %995 = vmatprep.subr.mxu0 0.0
          %996 = vmatpush1.msra.mxu0 0.0
          %997 = vmatprep.subr.mxu0 0.0
          %998 = vmatpush1.msra.mxu0 0.0
          %999 = vmatprep.subr.mxu0 0.0
          %1000 = vmatpush1.msra.mxu0 0.0
          %1001 = vmatprep.subr.mxu0 0.0
          %1002 = vmatpush1.msra.mxu0 0.0
          %1003 = vmatprep.subr.mxu0 0.0
          %1004 = vmatpush1.msra.mxu0 0.0
          %1005 = vmatprep.subr.mxu0 0.0
          %1006 = vmatpush1.msra.mxu0 0.0
          %1007 = vmatprep.subr.mxu0 0.0
          %1008 = vmatpush1.msra.mxu0 0.0
          %1009 = vmatprep.subr.mxu0 0.0
          %1010 = vmatpush1.msra.mxu0 0.0
          %1011 = vmatprep.subr.mxu0 0.0
          %1012 = vmatpush1.msra.mxu0 0.0
          %1013 = vmatprep.subr.mxu0 0.0
          %1014 = vmatpush1.msra.mxu0 0.0
          %1015 = vmatprep.subr.mxu0 0.0
          %1016 = vmatpush1.msra.mxu0 0.0
          %1017 = vmatprep.subr.mxu0 0.0
          %1018 = vmatpush1.msra.mxu0 0.0
          %1019 = vmatprep.subr.mxu0 0.0
          %1020 = vmatpush1.msra.mxu0 0.0
          %1021 = vmatprep.subr.mxu0 0.0
          %1022 = vmatpush1.msra.mxu0 0.0
          %1023 = vmatprep.subr.mxu0 0.0
          %1024 = vmatpush1.msra.mxu0 0.0
          %1025 = vmatprep.subr.mxu0 0.0
          %1026 = vmatpush1.msra.mxu0 0.0
          %1027 = vmatprep.mubr.f32.mxu0 0.0
          %1028 = vmatmul.mubr.f32.gmra.mrb[0].mxu0 %v961
          %v1029 = vpop.f32.mrb[0].mxu0
          %v1030 = vadd.f32 0.0, %v1029
          %v1031 = vpop.f32.mrb[0].mxu0
          %1032 = vdwg.mxu0
          %v1033 = vadd.f32 %v497, %v1030
          %v1034 = vsel %vm613, %v1033, 0.0
          %1035 = vadd.xlane.f32.xlu0 %v1034
          %v1036 = vpop.xlane.xlu0 %1035
          %v1037 = vmul.f32 %v1036, %v621
          %v1038 = vsub.f32 %v1033, %v1037
          %v1039 = vmul.f32 %v1038, %v1038
          %v1040 = vsel %vm613, %v1039, 0.0
          %1041 = vadd.xlane.f32.xlu0 %v1040
          %v1042 = vpop.xlane.xlu0 %1041
          %v1043 = vmul.f32 %v1042, %v621
          %v1044 = vadd.f32 %v1043, 1e-05
          %v1045 = vrsqrt.pop %v1044
          %v1046 = vmul.f32 %v1038, %v1045
          %v1047 = vld [vmem:[%s4 + $0x2] sm:$0x1]
          %v1048 = vlaneseq
          %v1049 = vshrl.u32 %v1048, 7
          %v1050 = vsub.s32 0, %v1049
          %v1051 = vrot.slane %v1047, %v1050
          %v1052 = vmul.f32 %v1046, %v1051
          %v1053 = vld [vmem:[%s5 + $0x2] sm:$0x1]
          %v1054 = vlaneseq
          %v1055 = vshrl.u32 %v1054, 7
          %v1056 = vsub.s32 0, %v1055
          %v1057 = vrot.slane %v1053, %v1056
          %v1058 = vadd.f32 %v1052, %v1057
          %s1059 = scalar_lea.vmem [#allocation6], 32
          %v1060 = vld [vmem:[%s1059] sm:$0xff]
          %v1061 = vld [vmem:[%s1059 + $0x8] sm:$0xff]
          %v1062 = vld [vmem:[%s1059 + $0x10] sm:$0xff]
          %v1063 = vld [vmem:[%s1059 + $0x18] sm:$0xff]
          %v1065 = vsel %vm613, %v1058, 0
          %1067 = vmatprep.subr.mxu0 0.0
          %1068 = vmatpush1.msra.mxu0 %v1060
          %1069 = vmatprep.subr.mxu0 0.0
          %1070 = vmatpush1.msra.mxu0 %v1061
          %1071 = vmatprep.subr.mxu0 0.0
          %1072 = vmatpush1.msra.mxu0 %v1062
          %1073 = vmatprep.subr.mxu0 0.0
          %1074 = vmatpush1.msra.mxu0 %v1063
          %1075 = vmatprep.subr.mxu0 0.0
          %1076 = vmatpush1.msra.mxu0 0.0
          %1077 = vmatprep.subr.mxu0 0.0
          %1078 = vmatpush1.msra.mxu0 0.0
          %1079 = vmatprep.subr.mxu0 0.0
          %1080 = vmatpush1.msra.mxu0 0.0
          %1081 = vmatprep.subr.mxu0 0.0
          %1082 = vmatpush1.msra.mxu0 0.0
          %1083 = vmatprep.subr.mxu0 0.0
          %1084 = vmatpush1.msra.mxu0 0.0
          %1085 = vmatprep.subr.mxu0 0.0
          %1086 = vmatpush1.msra.mxu0 0.0
          %1087 = vmatprep.subr.mxu0 0.0
          %1088 = vmatpush1.msra.mxu0 0.0
          %1089 = vmatprep.subr.mxu0 0.0
          %1090 = vmatpush1.msra.mxu0 0.0
          %1091 = vmatprep.subr.mxu0 0.0
          %1092 = vmatpush1.msra.mxu0 0.0
          %1093 = vmatprep.subr.mxu0 0.0
          %1094 = vmatpush1.msra.mxu0 0.0
          %1095 = vmatprep.subr.mxu0 0.0
          %1096 = vmatpush1.msra.mxu0 0.0
          %1097 = vmatprep.subr.mxu0 0.0
          %1098 = vmatpush1.msra.mxu0 0.0
          %1099 = vmatprep.subr.mxu0 0.0
          %1100 = vmatpush1.msra.mxu0 0.0
          %1101 = vmatprep.subr.mxu0 0.0
          %1102 = vmatpush1.msra.mxu0 0.0
          %1103 = vmatprep.subr.mxu0 0.0
          %1104 = vmatpush1.msra.mxu0 0.0
          %1105 = vmatprep.subr.mxu0 0.0
          %1106 = vmatpush1.msra.mxu0 0.0
          %1107 = vmatprep.subr.mxu0 0.0
          %1108 = vmatpush1.msra.mxu0 0.0
          %1109 = vmatprep.subr.mxu0 0.0
          %1110 = vmatpush1.msra.mxu0 0.0
          %1111 = vmatprep.subr.mxu0 0.0
          %1112 = vmatpush1.msra.mxu0 0.0
          %1113 = vmatprep.subr.mxu0 0.0
          %1114 = vmatpush1.msra.mxu0 0.0
          %1115 = vmatprep.subr.mxu0 0.0
          %1116 = vmatpush1.msra.mxu0 0.0
          %1117 = vmatprep.subr.mxu0 0.0
          %1118 = vmatpush1.msra.mxu0 0.0
          %1119 = vmatprep.subr.mxu0 0.0
          %1120 = vmatpush1.msra.mxu0 0.0
          %1121 = vmatprep.subr.mxu0 0.0
          %1122 = vmatpush1.msra.mxu0 0.0
          %1123 = vmatprep.subr.mxu0 0.0
          %1124 = vmatpush1.msra.mxu0 0.0
          %1125 = vmatprep.subr.mxu0 0.0
          %1126 = vmatpush1.msra.mxu0 0.0
          %1127 = vmatprep.subr.mxu0 0.0
          %1128 = vmatpush1.msra.mxu0 0.0
          %1129 = vmatprep.subr.mxu0 0.0
          %1130 = vmatpush1.msra.mxu0 0.0
          %1131 = vmatprep.mubr.f32.mxu0 0.0
          %1132 = vmatmul.mubr.f32.gmra.mrb[0].mxu0 %v1065
          %v1133 = vpop.f32.mrb[0].mxu0
          %v1134 = vadd.f32 0.0, %v1133
          %v1135 = vpop.f32.mrb[0].mxu0
          %1136 = vdwg.mxu0
          %v1137 = vld [vmem:[%s4 + $0x3] sm:$0x1]
          %v1138 = vlaneseq
          %v1139 = vshrl.u32 %v1138, 7
          %v1140 = vsub.s32 0, %v1139
          %v1141 = vrot.slane %v1137, %v1140
          %v1142 = vmul.f32 %v1046, %v1141
          %v1143 = vld [vmem:[%s5 + $0x3] sm:$0x1]
          %v1144 = vlaneseq
          %v1145 = vshrl.u32 %v1144, 7
          %v1146 = vsub.s32 0, %v1145
          %v1147 = vrot.slane %v1143, %v1146
          %v1148 = vadd.f32 %v1142, %v1147
          %s1149 = scalar_lea.vmem [#allocation9], 32
          %v1150 = vld [vmem:[%s1149] sm:$0xff]
          %v1151 = vld [vmem:[%s1149 + $0x8] sm:$0xff]
          %v1152 = vld [vmem:[%s1149 + $0x10] sm:$0xff]
          %v1153 = vld [vmem:[%s1149 + $0x18] sm:$0xff]
          %v1155 = vsel %vm613, %v1148, 0
          %1157 = vmatprep.subr.mxu0 0.0
          %1158 = vmatpush1.msra.mxu0 %v1150
          %1159 = vmatprep.subr.mxu0 0.0
          %1160 = vmatpush1.msra.mxu0 %v1151
          %1161 = vmatprep.subr.mxu0 0.0
          %1162 = vmatpush1.msra.mxu0 %v1152
          %1163 = vmatprep.subr.mxu0 0.0
          %1164 = vmatpush1.msra.mxu0 %v1153
          %1165 = vmatprep.subr.mxu0 0.0
          %1166 = vmatpush1.msra.mxu0 0.0
          %1167 = vmatprep.subr.mxu0 0.0
          %1168 = vmatpush1.msra.mxu0 0.0
          %1169 = vmatprep.subr.mxu0 0.0
          %1170 = vmatpush1.msra.mxu0 0.0
          %1171 = vmatprep.subr.mxu0 0.0
          %1172 = vmatpush1.msra.mxu0 0.0
          %1173 = vmatprep.subr.mxu0 0.0
          %1174 = vmatpush1.msra.mxu0 0.0
          %1175 = vmatprep.subr.mxu0 0.0
          %1176 = vmatpush1.msra.mxu0 0.0
          %1177 = vmatprep.subr.mxu0 0.0
          %1178 = vmatpush1.msra.mxu0 0.0
          %1179 = vmatprep.subr.mxu0 0.0
          %1180 = vmatpush1.msra.mxu0 0.0
          %1181 = vmatprep.subr.mxu0 0.0
          %1182 = vmatpush1.msra.mxu0 0.0
          %1183 = vmatprep.subr.mxu0 0.0
          %1184 = vmatpush1.msra.mxu0 0.0
          %1185 = vmatprep.subr.mxu0 0.0
          %1186 = vmatpush1.msra.mxu0 0.0
          %1187 = vmatprep.subr.mxu0 0.0
          %1188 = vmatpush1.msra.mxu0 0.0
          %1189 = vmatprep.subr.mxu0 0.0
          %1190 = vmatpush1.msra.mxu0 0.0
          %1191 = vmatprep.subr.mxu0 0.0
          %1192 = vmatpush1.msra.mxu0 0.0
          %1193 = vmatprep.subr.mxu0 0.0
          %1194 = vmatpush1.msra.mxu0 0.0
          %1195 = vmatprep.subr.mxu0 0.0
          %1196 = vmatpush1.msra.mxu0 0.0
          %1197 = vmatprep.subr.mxu0 0.0
          %1198 = vmatpush1.msra.mxu0 0.0
          %1199 = vmatprep.subr.mxu0 0.0
          %1200 = vmatpush1.msra.mxu0 0.0
          %1201 = vmatprep.subr.mxu0 0.0
          %1202 = vmatpush1.msra.mxu0 0.0
          %1203 = vmatprep.subr.mxu0 0.0
          %1204 = vmatpush1.msra.mxu0 0.0
          %1205 = vmatprep.subr.mxu0 0.0
          %1206 = vmatpush1.msra.mxu0 0.0
          %1207 = vmatprep.subr.mxu0 0.0
          %1208 = vmatpush1.msra.mxu0 0.0
          %1209 = vmatprep.subr.mxu0 0.0
          %1210 = vmatpush1.msra.mxu0 0.0
          %1211 = vmatprep.subr.mxu0 0.0
          %1212 = vmatpush1.msra.mxu0 0.0
          %1213 = vmatprep.subr.mxu0 0.0
          %1214 = vmatpush1.msra.mxu0 0.0
          %1215 = vmatprep.subr.mxu0 0.0
          %1216 = vmatpush1.msra.mxu0 0.0
          %1217 = vmatprep.subr.mxu0 0.0
          %1218 = vmatpush1.msra.mxu0 0.0
          %1219 = vmatprep.subr.mxu0 0.0
          %1220 = vmatpush1.msra.mxu0 0.0
          %1221 = vmatprep.mubr.f32.mxu0 0.0
          %1222 = vmatmul.mubr.f32.gmra.mrb[0].mxu0 %v1155
          %v1223 = vpop.f32.mrb[0].mxu0
          %v1224 = vadd.f32 0.0, %v1223
          %v1225 = vpop.f32.mrb[0].mxu0
          %1226 = vdwg.mxu0
          %v1228 = vsel %vm613, %v1134, 0
          %v1231 = vsel %vm613, %v1224, 0
          %1233 = vmatprep.subr.mxu0 0.0
          %1234 = vmatpush1.xpose.msra.mxu0 %v1231
          %1235 = vmatprep.subr.mxu0 0.0
          %1236 = vmatpush1.xpose.msra.mxu0 0.0
          %1237 = vmatprep.subr.mxu0 0.0
          %1238 = vmatpush1.xpose.msra.mxu0 0.0
          %1239 = vmatprep.subr.mxu0 0.0
          %1240 = vmatpush1.xpose.msra.mxu0 0.0
          %1241 = vmatprep.subr.mxu0 0.0
          %1242 = vmatpush1.xpose.msra.mxu0 0.0
          %1243 = vmatprep.subr.mxu0 0.0
          %1244 = vmatpush1.xpose.msra.mxu0 0.0
          %1245 = vmatprep.subr.mxu0 0.0
          %1246 = vmatpush1.xpose.msra.mxu0 0.0
          %1247 = vmatprep.subr.mxu0 0.0
          %1248 = vmatpush1.xpose.msra.mxu0 0.0
          %1249 = vmatprep.subr.mxu0 0.0
          %1250 = vmatpush1.xpose.msra.mxu0 0.0
          %1251 = vmatprep.subr.mxu0 0.0
          %1252 = vmatpush1.xpose.msra.mxu0 0.0
          %1253 = vmatprep.subr.mxu0 0.0
          %1254 = vmatpush1.xpose.msra.mxu0 0.0
          %1255 = vmatprep.subr.mxu0 0.0
          %1256 = vmatpush1.xpose.msra.mxu0 0.0
          %1257 = vmatprep.subr.mxu0 0.0
          %1258 = vmatpush1.xpose.msra.mxu0 0.0
          %1259 = vmatprep.subr.mxu0 0.0
          %1260 = vmatpush1.xpose.msra.mxu0 0.0
          %1261 = vmatprep.subr.mxu0 0.0
          %1262 = vmatpush1.xpose.msra.mxu0 0.0
          %1263 = vmatprep.subr.mxu0 0.0
          %1264 = vmatpush1.xpose.msra.mxu0 0.0
          %1265 = vmatprep.subr.mxu0 0.0
          %1266 = vmatpush1.xpose.msra.mxu0 0.0
          %1267 = vmatprep.subr.mxu0 0.0
          %1268 = vmatpush1.xpose.msra.mxu0 0.0
          %1269 = vmatprep.subr.mxu0 0.0
          %1270 = vmatpush1.xpose.msra.mxu0 0.0
          %1271 = vmatprep.subr.mxu0 0.0
          %1272 = vmatpush1.xpose.msra.mxu0 0.0
          %1273 = vmatprep.subr.mxu0 0.0
          %1274 = vmatpush1.xpose.msra.mxu0 0.0
          %1275 = vmatprep.subr.mxu0 0.0
          %1276 = vmatpush1.xpose.msra.mxu0 0.0
          %1277 = vmatprep.subr.mxu0 0.0
          %1278 = vmatpush1.xpose.msra.mxu0 0.0
          %1279 = vmatprep.subr.mxu0 0.0
          %1280 = vmatpush1.xpose.msra.mxu0 0.0
          %1281 = vmatprep.subr.mxu0 0.0
          %1282 = vmatpush1.xpose.msra.mxu0 0.0
          %1283 = vmatprep.subr.mxu0 0.0
          %1284 = vmatpush1.xpose.msra.mxu0 0.0
          %1285 = vmatprep.subr.mxu0 0.0
          %1286 = vmatpush1.xpose.msra.mxu0 0.0
          %1287 = vmatprep.subr.mxu0 0.0
          %1288 = vmatpush1.xpose.msra.mxu0 0.0
          %1289 = vmatprep.subr.mxu0 0.0
          %1290 = vmatpush1.xpose.msra.mxu0 0.0
          %1291 = vmatprep.subr.mxu0 0.0
          %1292 = vmatpush1.xpose.msra.mxu0 0.0
          %1293 = vmatprep.subr.mxu0 0.0
          %1294 = vmatpush1.xpose.msra.mxu0 0.0
          %1295 = vmatprep.subr.mxu0 0.0
          %1296 = vmatpush1.xpose.msra.mxu0 0.0
          %1297 = vmatprep.mubr.f32.mxu0 0.0
          %1298 = vmatmul.mubr.f32.gmra.mrb[0].mxu0 %v1228
          %v1299 = vpop.f32.mrb[0].mxu0
          %v1300 = vadd.f32 0.0, %v1299
          %v1301 = vpop.f32.mrb[0].mxu0
          %1302 = vdwg.mxu0
          %vm1303 = vcmask 64512
          %v1304 = vsel %vm1303, %v1300, -inf
          %1305 = vmax.xlane.f32.xlu0 %v1304
          %v1306 = vpop.xlane.xlu0 %1305
          %v1307 = vsub.f32 %v1300, %v1306
          %v1308 = vmul.f32 %v1307, 1.442695
          %v1309 = vpow.pop %v1308
          %v1310 = vsel %vm1303, %v1309, 0.0
          %1311 = vadd.xlane.f32.xlu0 %v1310
          %v1312 = vpop.xlane.xlu0 %1311
          %v1313 = vrcp.pop %v1312
          %v1314 = vmul.f32 %v1309, %v1313
          %1315 = vrot.lane.b32.xlu0 %v1224, 96
          %v1316 = vpop.permute.xlu0 %1315
          %v1319 = vsel %vm1303, %v1314, 0
          %1321 = vmatprep.subr.mxu0 0.0
          %1322 = vmatpush1.msra.mxu0 %v1316
          %1323 = vmatprep.subr.mxu0 0.0
          %1324 = vmatpush1.msra.mxu0 0.0
          %1325 = vmatprep.subr.mxu0 0.0
          %1326 = vmatpush1.msra.mxu0 0.0
          %1327 = vmatprep.subr.mxu0 0.0
          %1328 = vmatpush1.msra.mxu0 0.0
          %1329 = vmatprep.subr.mxu0 0.0
          %1330 = vmatpush1.msra.mxu0 0.0
          %1331 = vmatprep.subr.mxu0 0.0
          %1332 = vmatpush1.msra.mxu0 0.0
          %1333 = vmatprep.subr.mxu0 0.0
          %1334 = vmatpush1.msra.mxu0 0.0
          %1335 = vmatprep.subr.mxu0 0.0
          %1336 = vmatpush1.msra.mxu0 0.0
          %1337 = vmatprep.subr.mxu0 0.0
          %1338 = vmatpush1.msra.mxu0 0.0
          %1339 = vmatprep.subr.mxu0 0.0
          %1340 = vmatpush1.msra.mxu0 0.0
          %1341 = vmatprep.subr.mxu0 0.0
          %1342 = vmatpush1.msra.mxu0 0.0
          %1343 = vmatprep.subr.mxu0 0.0
          %1344 = vmatpush1.msra.mxu0 0.0
          %1345 = vmatprep.subr.mxu0 0.0
          %1346 = vmatpush1.msra.mxu0 0.0
          %1347 = vmatprep.subr.mxu0 0.0
          %1348 = vmatpush1.msra.mxu0 0.0
          %1349 = vmatprep.subr.mxu0 0.0
          %1350 = vmatpush1.msra.mxu0 0.0
          %1351 = vmatprep.subr.mxu0 0.0
          %1352 = vmatpush1.msra.mxu0 0.0
          %1353 = vmatprep.subr.mxu0 0.0
          %1354 = vmatpush1.msra.mxu0 0.0
          %1355 = vmatprep.subr.mxu0 0.0
          %1356 = vmatpush1.msra.mxu0 0.0
          %1357 = vmatprep.subr.mxu0 0.0
          %1358 = vmatpush1.msra.mxu0 0.0
          %1359 = vmatprep.subr.mxu0 0.0
          %1360 = vmatpush1.msra.mxu0 0.0
          %1361 = vmatprep.subr.mxu0 0.0
          %1362 = vmatpush1.msra.mxu0 0.0
          %1363 = vmatprep.subr.mxu0 0.0
          %1364 = vmatpush1.msra.mxu0 0.0
          %1365 = vmatprep.subr.mxu0 0.0
          %1366 = vmatpush1.msra.mxu0 0.0
          %1367 = vmatprep.subr.mxu0 0.0
          %1368 = vmatpush1.msra.mxu0 0.0
          %1369 = vmatprep.subr.mxu0 0.0
          %1370 = vmatpush1.msra.mxu0 0.0
          %1371 = vmatprep.subr.mxu0 0.0
          %1372 = vmatpush1.msra.mxu0 0.0
          %1373 = vmatprep.subr.mxu0 0.0
          %1374 = vmatpush1.msra.mxu0 0.0
          %1375 = vmatprep.subr.mxu0 0.0
          %1376 = vmatpush1.msra.mxu0 0.0
          %1377 = vmatprep.subr.mxu0 0.0
          %1378 = vmatpush1.msra.mxu0 0.0
          %1379 = vmatprep.subr.mxu0 0.0
          %1380 = vmatpush1.msra.mxu0 0.0
          %1381 = vmatprep.subr.mxu0 0.0
          %1382 = vmatpush1.msra.mxu0 0.0
          %1383 = vmatprep.subr.mxu0 0.0
          %1384 = vmatpush1.msra.mxu0 0.0
          %1385 = vmatprep.mubr.f32.mxu0 0.0
          %1386 = vmatmul.mubr.f32.gmra.mrb[0].mxu0 %v1319
          %v1387 = vpop.f32.mrb[0].mxu0
          %v1388 = vadd.f32 0.0, %v1387
          %v1389 = vpop.f32.mrb[0].mxu0
          %1390 = vdwg.mxu0
          %s1391 = scalar_lea.vmem [#allocation11], 32
          %v1392 = vld [vmem:[%s1391] sm:$0xff]
          %v1393 = vld [vmem:[%s1391 + $0x8] sm:$0xff]
          %v1394 = vld [vmem:[%s1391 + $0x10] sm:$0xff]
          %v1395 = vld [vmem:[%s1391 + $0x18] sm:$0xff]
          %v1397 = vsel %vm613, %v1388, 0
          %1399 = vmatprep.subr.mxu0 0.0
          %1400 = vmatpush1.msra.mxu0 %v1392
          %1401 = vmatprep.subr.mxu0 0.0
          %1402 = vmatpush1.msra.mxu0 %v1393
          %1403 = vmatprep.subr.mxu0 0.0
          %1404 = vmatpush1.msra.mxu0 %v1394
          %1405 = vmatprep.subr.mxu0 0.0
          %1406 = vmatpush1.msra.mxu0 %v1395
          %1407 = vmatprep.subr.mxu0 0.0
          %1408 = vmatpush1.msra.mxu0 0.0
          %1409 = vmatprep.subr.mxu0 0.0
          %1410 = vmatpush1.msra.mxu0 0.0
          %1411 = vmatprep.subr.mxu0 0.0
          %1412 = vmatpush1.msra.mxu0 0.0
          %1413 = vmatprep.subr.mxu0 0.0
          %1414 = vmatpush1.msra.mxu0 0.0
          %1415 = vmatprep.subr.mxu0 0.0
          %1416 = vmatpush1.msra.mxu0 0.0
          %1417 = vmatprep.subr.mxu0 0.0
          %1418 = vmatpush1.msra.mxu0 0.0
          %1419 = vmatprep.subr.mxu0 0.0
          %1420 = vmatpush1.msra.mxu0 0.0
          %1421 = vmatprep.subr.mxu0 0.0
          %1422 = vmatpush1.msra.mxu0 0.0
          %1423 = vmatprep.subr.mxu0 0.0
          %1424 = vmatpush1.msra.mxu0 0.0
          %1425 = vmatprep.subr.mxu0 0.0
          %1426 = vmatpush1.msra.mxu0 0.0
          %1427 = vmatprep.subr.mxu0 0.0
          %1428 = vmatpush1.msra.mxu0 0.0
          %1429 = vmatprep.subr.mxu0 0.0
          %1430 = vmatpush1.msra.mxu0 0.0
          %1431 = vmatprep.subr.mxu0 0.0
          %1432 = vmatpush1.msra.mxu0 0.0
          %1433 = vmatprep.subr.mxu0 0.0
          %1434 = vmatpush1.msra.mxu0 0.0
          %1435 = vmatprep.subr.mxu0 0.0
          %1436 = vmatpush1.msra.mxu0 0.0
          %1437 = vmatprep.subr.mxu0 0.0
          %1438 = vmatpush1.msra.mxu0 0.0
          %1439 = vmatprep.subr.mxu0 0.0
          %1440 = vmatpush1.msra.mxu0 0.0
          %1441 = vmatprep.subr.mxu0 0.0
          %1442 = vmatpush1.msra.mxu0 0.0
          %1443 = vmatprep.subr.mxu0 0.0
          %1444 = vmatpush1.msra.mxu0 0.0
          %1445 = vmatprep.subr.mxu0 0.0
          %1446 = vmatpush1.msra.mxu0 0.0
          %1447 = vmatprep.subr.mxu0 0.0
          %1448 = vmatpush1.msra.mxu0 0.0
          %1449 = vmatprep.subr.mxu0 0.0
          %1450 = vmatpush1.msra.mxu0 0.0
          %1451 = vmatprep.subr.mxu0 0.0
          %1452 = vmatpush1.msra.mxu0 0.0
          %1453 = vmatprep.subr.mxu0 0.0
          %1454 = vmatpush1.msra.mxu0 0.0
          %1455 = vmatprep.subr.mxu0 0.0
          %1456 = vmatpush1.msra.mxu0 0.0
          %1457 = vmatprep.subr.mxu0 0.0
          %1458 = vmatpush1.msra.mxu0 0.0
          %1459 = vmatprep.subr.mxu0 0.0
          %1460 = vmatpush1.msra.mxu0 0.0
          %1461 = vmatprep.subr.mxu0 0.0
          %1462 = vmatpush1.msra.mxu0 0.0
          %1463 = vmatprep.mubr.f32.mxu0 0.0
          %1464 = vmatmul.mubr.f32.gmra.mrb[0].mxu0 %v1397
          %v1465 = vpop.f32.mrb[0].mxu0
          %v1466 = vadd.f32 0.0, %v1465
          %v1467 = vpop.f32.mrb[0].mxu0
          %1468 = vdwg.mxu0
          %v1469 = vadd.f32 %v1033, %v1466
          %v1470 = vld [vmem:[%s3] sm:$0xf]
          %v1471 = vsel %vm617, %v1470, 0.0
          %1472 = vadd.xlane.f32.xlu0 %v1471
          %v1473 = vpop.xlane.xlu0 %1472
          %v1474 = vmul.f32 %v1473, %v621
          %v1475 = vsub.f32 %v1470, %v1474
          %v1476 = vmul.f32 %v1475, %v1475
          %v1477 = vsel %vm617, %v1476, 0.0
          %1478 = vadd.xlane.f32.xlu0 %v1477
          %v1479 = vpop.xlane.xlu0 %1478
          %v1480 = vmul.f32 %v1479, %v621
          %v1481 = vadd.f32 %v1480, 1e-05
          %v1482 = vrsqrt.pop %v1481
          %v1483 = vmul.f32 %v1475, %v1482
          %v1484 = vld [vmem:[%s4 + $0x4] sm:$0x1]
          %v1485 = vlaneseq
          %v1486 = vshrl.u32 %v1485, 7
          %v1487 = vsub.s32 0, %v1486
          %v1488 = vrot.slane %v1484, %v1487
          %v1489 = vmul.f32 %v1483, %v1488
          %v1490 = vld [vmem:[%s5 + $0x4] sm:$0x1]
          %v1491 = vlaneseq
          %v1492 = vshrl.u32 %v1491, 7
          %v1493 = vsub.s32 0, %v1492
          %v1494 = vrot.slane %v1490, %v1493
          %v1495 = vadd.f32 %v1489, %v1494
          %s1496 = scalar_lea.vmem [#allocation6], 64
          %v1497 = vld [vmem:[%s1496] sm:$0xff]
          %v1498 = vld [vmem:[%s1496 + $0x8] sm:$0xff]
          %v1499 = vld [vmem:[%s1496 + $0x10] sm:$0xff]
          %v1500 = vld [vmem:[%s1496 + $0x18] sm:$0xff]
          %v1502 = vsel %vm613, %v1495, 0
          %1504 = vmatprep.subr.mxu0 0.0
          %1505 = vmatpush1.msra.mxu0 %v1497
          %1506 = vmatprep.subr.mxu0 0.0
          %1507 = vmatpush1.msra.mxu0 %v1498
          %1508 = vmatprep.subr.mxu0 0.0
          %1509 = vmatpush1.msra.mxu0 %v1499
          %1510 = vmatprep.subr.mxu0 0.0
          %1511 = vmatpush1.msra.mxu0 %v1500
          %1512 = vmatprep.subr.mxu0 0.0
          %1513 = vmatpush1.msra.mxu0 0.0
          %1514 = vmatprep.subr.mxu0 0.0
          %1515 = vmatpush1.msra.mxu0 0.0
          %1516 = vmatprep.subr.mxu0 0.0
          %1517 = vmatpush1.msra.mxu0 0.0
          %1518 = vmatprep.subr.mxu0 0.0
          %1519 = vmatpush1.msra.mxu0 0.0
          %1520 = vmatprep.subr.mxu0 0.0
          %1521 = vmatpush1.msra.mxu0 0.0
          %1522 = vmatprep.subr.mxu0 0.0
          %1523 = vmatpush1.msra.mxu0 0.0
          %1524 = vmatprep.subr.mxu0 0.0
          %1525 = vmatpush1.msra.mxu0 0.0
          %1526 = vmatprep.subr.mxu0 0.0
          %1527 = vmatpush1.msra.mxu0 0.0
          %1528 = vmatprep.subr.mxu0 0.0
          %1529 = vmatpush1.msra.mxu0 0.0
          %1530 = vmatprep.subr.mxu0 0.0
          %1531 = vmatpush1.msra.mxu0 0.0
          %1532 = vmatprep.subr.mxu0 0.0
          %1533 = vmatpush1.msra.mxu0 0.0
          %1534 = vmatprep.subr.mxu0 0.0
          %1535 = vmatpush1.msra.mxu0 0.0
          %1536 = vmatprep.subr.mxu0 0.0
          %1537 = vmatpush1.msra.mxu0 0.0
          %1538 = vmatprep.subr.mxu0 0.0
          %1539 = vmatpush1.msra.mxu0 0.0
          %1540 = vmatprep.subr.mxu0 0.0
          %1541 = vmatpush1.msra.mxu0 0.0
          %1542 = vmatprep.subr.mxu0 0.0
          %1543 = vmatpush1.msra.mxu0 0.0
          %1544 = vmatprep.subr.mxu0 0.0
          %1545 = vmatpush1.msra.mxu0 0.0
          %1546 = vmatprep.subr.mxu0 0.0
          %1547 = vmatpush1.msra.mxu0 0.0
          %1548 = vmatprep.subr.mxu0 0.0
          %1549 = vmatpush1.msra.mxu0 0.0
          %1550 = vmatprep.subr.mxu0 0.0
          %1551 = vmatpush1.msra.mxu0 0.0
          %1552 = vmatprep.subr.mxu0 0.0
          %1553 = vmatpush1.msra.mxu0 0.0
          %1554 = vmatprep.subr.mxu0 0.0
          %1555 = vmatpush1.msra.mxu0 0.0
          %1556 = vmatprep.subr.mxu0 0.0
          %1557 = vmatpush1.msra.mxu0 0.0
          %1558 = vmatprep.subr.mxu0 0.0
          %1559 = vmatpush1.msra.mxu0 0.0
          %1560 = vmatprep.subr.mxu0 0.0
          %1561 = vmatpush1.msra.mxu0 0.0
          %1562 = vmatprep.subr.mxu0 0.0
          %1563 = vmatpush1.msra.mxu0 0.0
          %1564 = vmatprep.subr.mxu0 0.0
          %1565 = vmatpush1.msra.mxu0 0.0
          %1566 = vmatprep.subr.mxu0 0.0
          %1567 = vmatpush1.msra.mxu0 0.0
          %1568 = vmatprep.mubr.f32.mxu0 0.0
          %1569 = vmatmul.mubr.f32.gmra.mrb[0].mxu0 %v1502
          %v1570 = vpop.f32.mrb[0].mxu0
          %v1571 = vadd.f32 0.0, %v1570
          %v1572 = vpop.f32.mrb[0].mxu0
          %1573 = vdwg.mxu0
          %v1574 = vsel %vm613, %v1469, 0.0
          %1575 = vadd.xlane.f32.xlu0 %v1574
          %v1576 = vpop.xlane.xlu0 %1575
          %v1577 = vmul.f32 %v1576, %v621
          %v1578 = vsub.f32 %v1469, %v1577
          %v1579 = vmul.f32 %v1578, %v1578
          %v1580 = vsel %vm613, %v1579, 0.0
          %1581 = vadd.xlane.f32.xlu0 %v1580
          %v1582 = vpop.xlane.xlu0 %1581
          %v1583 = vmul.f32 %v1582, %v621
          %v1584 = vadd.f32 %v1583, 1e-05
          %v1585 = vrsqrt.pop %v1584
          %v1586 = vmul.f32 %v1578, %v1585
          %v1587 = vld [vmem:[%s4 + $0x5] sm:$0x1]
          %v1588 = vlaneseq
          %v1589 = vshrl.u32 %v1588, 7
          %v1590 = vsub.s32 0, %v1589
          %v1591 = vrot.slane %v1587, %v1590
          %v1592 = vmul.f32 %v1586, %v1591
          %v1593 = vld [vmem:[%s5 + $0x5] sm:$0x1]
          %v1594 = vlaneseq
          %v1595 = vshrl.u32 %v1594, 7
          %v1596 = vsub.s32 0, %v1595
          %v1597 = vrot.slane %v1593, %v1596
          %v1598 = vadd.f32 %v1592, %v1597
          %s1599 = scalar_lea.vmem [#allocation9], 64
          %v1600 = vld [vmem:[%s1599] sm:$0xff]
          %v1601 = vld [vmem:[%s1599 + $0x8] sm:$0xff]
          %v1602 = vld [vmem:[%s1599 + $0x10] sm:$0xff]
          %v1603 = vld [vmem:[%s1599 + $0x18] sm:$0xff]
          %v1605 = vsel %vm613, %v1598, 0
          %1607 = vmatprep.subr.mxu0 0.0
          %1608 = vmatpush1.msra.mxu0 %v1600
          %1609 = vmatprep.subr.mxu0 0.0
          %1610 = vmatpush1.msra.mxu0 %v1601
          %1611 = vmatprep.subr.mxu0 0.0
          %1612 = vmatpush1.msra.mxu0 %v1602
          %1613 = vmatprep.subr.mxu0 0.0
          %1614 = vmatpush1.msra.mxu0 %v1603
          %1615 = vmatprep.subr.mxu0 0.0
          %1616 = vmatpush1.msra.mxu0 0.0
          %1617 = vmatprep.subr.mxu0 0.0
          %1618 = vmatpush1.msra.mxu0 0.0
          %1619 = vmatprep.subr.mxu0 0.0
          %1620 = vmatpush1.msra.mxu0 0.0
          %1621 = vmatprep.subr.mxu0 0.0
          %1622 = vmatpush1.msra.mxu0 0.0
          %1623 = vmatprep.subr.mxu0 0.0
          %1624 = vmatpush1.msra.mxu0 0.0
          %1625 = vmatprep.subr.mxu0 0.0
          %1626 = vmatpush1.msra.mxu0 0.0
          %1627 = vmatprep.subr.mxu0 0.0
          %1628 = vmatpush1.msra.mxu0 0.0
          %1629 = vmatprep.subr.mxu0 0.0
          %1630 = vmatpush1.msra.mxu0 0.0
          %1631 = vmatprep.subr.mxu0 0.0
          %1632 = vmatpush1.msra.mxu0 0.0
          %1633 = vmatprep.subr.mxu0 0.0
          %1634 = vmatpush1.msra.mxu0 0.0
          %1635 = vmatprep.subr.mxu0 0.0
          %1636 = vmatpush1.msra.mxu0 0.0
          %1637 = vmatprep.subr.mxu0 0.0
          %1638 = vmatpush1.msra.mxu0 0.0
          %1639 = vmatprep.subr.mxu0 0.0
          %1640 = vmatpush1.msra.mxu0 0.0
          %1641 = vmatprep.subr.mxu0 0.0
          %1642 = vmatpush1.msra.mxu0 0.0
          %1643 = vmatprep.subr.mxu0 0.0
          %1644 = vmatpush1.msra.mxu0 0.0
          %1645 = vmatprep.subr.mxu0 0.0
          %1646 = vmatpush1.msra.mxu0 0.0
          %1647 = vmatprep.subr.mxu0 0.0
          %1648 = vmatpush1.msra.mxu0 0.0
          %1649 = vmatprep.subr.mxu0 0.0
          %1650 = vmatpush1.msra.mxu0 0.0
          %1651 = vmatprep.subr.mxu0 0.0
          %1652 = vmatpush1.msra.mxu0 0.0
          %1653 = vmatprep.subr.mxu0 0.0
          %1654 = vmatpush1.msra.mxu0 0.0
          %1655 = vmatprep.subr.mxu0 0.0
          %1656 = vmatpush1.msra.mxu0 0.0
          %1657 = vmatprep.subr.mxu0 0.0
          %1658 = vmatpush1.msra.mxu0 0.0
          %1659 = vmatprep.subr.mxu0 0.0
          %1660 = vmatpush1.msra.mxu0 0.0
          %1661 = vmatprep.subr.mxu0 0.0
          %1662 = vmatpush1.msra.mxu0 0.0
          %1663 = vmatprep.subr.mxu0 0.0
          %1664 = vmatpush1.msra.mxu0 0.0
          %1665 = vmatprep.subr.mxu0 0.0
          %1666 = vmatpush1.msra.mxu0 0.0
          %1667 = vmatprep.subr.mxu0 0.0
          %1668 = vmatpush1.msra.mxu0 0.0
          %1669 = vmatprep.subr.mxu0 0.0
          %1670 = vmatpush1.msra.mxu0 0.0
          %1671 = vmatprep.mubr.f32.mxu0 0.0
          %1672 = vmatmul.mubr.f32.gmra.mrb[0].mxu0 %v1605
          %v1673 = vpop.f32.mrb[0].mxu0
          %v1674 = vadd.f32 0.0, %v1673
          %v1675 = vpop.f32.mrb[0].mxu0
          %1676 = vdwg.mxu0
          %v1678 = vsel %vm613, %v1571, 0
          %v1681 = vsel %vm613, %v1674, 0
          %1683 = vmatprep.subr.mxu0 0.0
          %1684 = vmatpush1.xpose.msra.mxu0 %v1681
          %1685 = vmatprep.subr.mxu0 0.0
          %1686 = vmatpush1.xpose.msra.mxu0 0.0
          %1687 = vmatprep.subr.mxu0 0.0
          %1688 = vmatpush1.xpose.msra.mxu0 0.0
          %1689 = vmatprep.subr.mxu0 0.0
          %1690 = vmatpush1.xpose.msra.mxu0 0.0
          %1691 = vmatprep.subr.mxu0 0.0
          %1692 = vmatpush1.xpose.msra.mxu0 0.0
          %1693 = vmatprep.subr.mxu0 0.0
          %1694 = vmatpush1.xpose.msra.mxu0 0.0
          %1695 = vmatprep.subr.mxu0 0.0
          %1696 = vmatpush1.xpose.msra.mxu0 0.0
          %1697 = vmatprep.subr.mxu0 0.0
          %1698 = vmatpush1.xpose.msra.mxu0 0.0
          %1699 = vmatprep.subr.mxu0 0.0
          %1700 = vmatpush1.xpose.msra.mxu0 0.0
          %1701 = vmatprep.subr.mxu0 0.0
          %1702 = vmatpush1.xpose.msra.mxu0 0.0
          %1703 = vmatprep.subr.mxu0 0.0
          %1704 = vmatpush1.xpose.msra.mxu0 0.0
          %1705 = vmatprep.subr.mxu0 0.0
          %1706 = vmatpush1.xpose.msra.mxu0 0.0
          %1707 = vmatprep.subr.mxu0 0.0
          %1708 = vmatpush1.xpose.msra.mxu0 0.0
          %1709 = vmatprep.subr.mxu0 0.0
          %1710 = vmatpush1.xpose.msra.mxu0 0.0
          %1711 = vmatprep.subr.mxu0 0.0
          %1712 = vmatpush1.xpose.msra.mxu0 0.0
          %1713 = vmatprep.subr.mxu0 0.0
          %1714 = vmatpush1.xpose.msra.mxu0 0.0
          %1715 = vmatprep.subr.mxu0 0.0
          %1716 = vmatpush1.xpose.msra.mxu0 0.0
          %1717 = vmatprep.subr.mxu0 0.0
          %1718 = vmatpush1.xpose.msra.mxu0 0.0
          %1719 = vmatprep.subr.mxu0 0.0
          %1720 = vmatpush1.xpose.msra.mxu0 0.0
          %1721 = vmatprep.subr.mxu0 0.0
          %1722 = vmatpush1.xpose.msra.mxu0 0.0
          %1723 = vmatprep.subr.mxu0 0.0
          %1724 = vmatpush1.xpose.msra.mxu0 0.0
          %1725 = vmatprep.subr.mxu0 0.0
          %1726 = vmatpush1.xpose.msra.mxu0 0.0
          %1727 = vmatprep.subr.mxu0 0.0
          %1728 = vmatpush1.xpose.msra.mxu0 0.0
          %1729 = vmatprep.subr.mxu0 0.0
          %1730 = vmatpush1.xpose.msra.mxu0 0.0
          %1731 = vmatprep.subr.mxu0 0.0
          %1732 = vmatpush1.xpose.msra.mxu0 0.0
          %1733 = vmatprep.subr.mxu0 0.0
          %1734 = vmatpush1.xpose.msra.mxu0 0.0
          %1735 = vmatprep.subr.mxu0 0.0
          %1736 = vmatpush1.xpose.msra.mxu0 0.0
          %1737 = vmatprep.subr.mxu0 0.0
          %1738 = vmatpush1.xpose.msra.mxu0 0.0
          %1739 = vmatprep.subr.mxu0 0.0
          %1740 = vmatpush1.xpose.msra.mxu0 0.0
          %1741 = vmatprep.subr.mxu0 0.0
          %1742 = vmatpush1.xpose.msra.mxu0 0.0
          %1743 = vmatprep.subr.mxu0 0.0
          %1744 = vmatpush1.xpose.msra.mxu0 0.0
          %1745 = vmatprep.subr.mxu0 0.0
          %1746 = vmatpush1.xpose.msra.mxu0 0.0
          %1747 = vmatprep.mubr.f32.mxu0 0.0
          %1748 = vmatmul.mubr.f32.gmra.mrb[0].mxu0 %v1678
          %v1749 = vpop.f32.mrb[0].mxu0
          %v1750 = vadd.f32 0.0, %v1749
          %v1751 = vpop.f32.mrb[0].mxu0
          %1752 = vdwg.mxu0
          %vm1753 = vcmask 60416
          %v1754 = vsel %vm1753, %v1750, -inf
          %1755 = vmax.xlane.f32.xlu0 %v1754
          %v1756 = vpop.xlane.xlu0 %1755
          %v1757 = vsub.f32 %v1750, %v1756
          %v1758 = vmul.f32 %v1757, 1.442695
          %v1759 = vpow.pop %v1758
          %v1760 = vsel %vm1753, %v1759, 0.0
          %1761 = vadd.xlane.f32.xlu0 %v1760
          %v1762 = vpop.xlane.xlu0 %1761
          %v1763 = vrcp.pop %v1762
          %v1764 = vmul.f32 %v1759, %v1763
          %1765 = vrot.lane.b32.xlu0 %v1674, 96
          %v1766 = vpop.permute.xlu0 %1765
          %v1769 = vsel %vm1303, %v1764, 0
          %1771 = vmatprep.subr.mxu0 0.0
          %1772 = vmatpush1.msra.mxu0 %v1766
          %1773 = vmatprep.subr.mxu0 0.0
          %1774 = vmatpush1.msra.mxu0 0.0
          %1775 = vmatprep.subr.mxu0 0.0
          %1776 = vmatpush1.msra.mxu0 0.0
          %1777 = vmatprep.subr.mxu0 0.0
          %1778 = vmatpush1.msra.mxu0 0.0
          %1779 = vmatprep.subr.mxu0 0.0
          %1780 = vmatpush1.msra.mxu0 0.0
          %1781 = vmatprep.subr.mxu0 0.0
          %1782 = vmatpush1.msra.mxu0 0.0
          %1783 = vmatprep.subr.mxu0 0.0
          %1784 = vmatpush1.msra.mxu0 0.0
          %1785 = vmatprep.subr.mxu0 0.0
          %1786 = vmatpush1.msra.mxu0 0.0
          %1787 = vmatprep.subr.mxu0 0.0
          %1788 = vmatpush1.msra.mxu0 0.0
          %1789 = vmatprep.subr.mxu0 0.0
          %1790 = vmatpush1.msra.mxu0 0.0
          %1791 = vmatprep.subr.mxu0 0.0
          %1792 = vmatpush1.msra.mxu0 0.0
          %1793 = vmatprep.subr.mxu0 0.0
          %1794 = vmatpush1.msra.mxu0 0.0
          %1795 = vmatprep.subr.mxu0 0.0
          %1796 = vmatpush1.msra.mxu0 0.0
          %1797 = vmatprep.subr.mxu0 0.0
          %1798 = vmatpush1.msra.mxu0 0.0
          %1799 = vmatprep.subr.mxu0 0.0
          %1800 = vmatpush1.msra.mxu0 0.0
          %1801 = vmatprep.subr.mxu0 0.0
          %1802 = vmatpush1.msra.mxu0 0.0
          %1803 = vmatprep.subr.mxu0 0.0
          %1804 = vmatpush1.msra.mxu0 0.0
          %1805 = vmatprep.subr.mxu0 0.0
          %1806 = vmatpush1.msra.mxu0 0.0
          %1807 = vmatprep.subr.mxu0 0.0
          %1808 = vmatpush1.msra.mxu0 0.0
          %1809 = vmatprep.subr.mxu0 0.0
          %1810 = vmatpush1.msra.mxu0 0.0
          %1811 = vmatprep.subr.mxu0 0.0
          %1812 = vmatpush1.msra.mxu0 0.0
          %1813 = vmatprep.subr.mxu0 0.0
          %1814 = vmatpush1.msra.mxu0 0.0
          %1815 = vmatprep.subr.mxu0 0.0
          %1816 = vmatpush1.msra.mxu0 0.0
          %1817 = vmatprep.subr.mxu0 0.0
          %1818 = vmatpush1.msra.mxu0 0.0
          %1819 = vmatprep.subr.mxu0 0.0
          %1820 = vmatpush1.msra.mxu0 0.0
          %1821 = vmatprep.subr.mxu0 0.0
          %1822 = vmatpush1.msra.mxu0 0.0
          %1823 = vmatprep.subr.mxu0 0.0
          %1824 = vmatpush1.msra.mxu0 0.0
          %1825 = vmatprep.subr.mxu0 0.0
          %1826 = vmatpush1.msra.mxu0 0.0
          %1827 = vmatprep.subr.mxu0 0.0
          %1828 = vmatpush1.msra.mxu0 0.0
          %1829 = vmatprep.subr.mxu0 0.0
          %1830 = vmatpush1.msra.mxu0 0.0
          %1831 = vmatprep.subr.mxu0 0.0
          %1832 = vmatpush1.msra.mxu0 0.0
          %1833 = vmatprep.subr.mxu0 0.0
          %1834 = vmatpush1.msra.mxu0 0.0
          %1835 = vmatprep.mubr.f32.mxu0 0.0
          %1836 = vmatmul.mubr.f32.gmra.mrb[0].mxu0 %v1769
          %v1837 = vpop.f32.mrb[0].mxu0
          %v1838 = vadd.f32 0.0, %v1837
          %v1839 = vpop.f32.mrb[0].mxu0
          %1840 = vdwg.mxu0
          %s1841 = scalar_lea.vmem [#allocation11], 64
          %v1842 = vld [vmem:[%s1841] sm:$0xff]
          %v1843 = vld [vmem:[%s1841 + $0x8] sm:$0xff]
          %v1844 = vld [vmem:[%s1841 + $0x10] sm:$0xff]
          %v1845 = vld [vmem:[%s1841 + $0x18] sm:$0xff]
          %v1847 = vsel %vm613, %v1838, 0
          %1849 = vmatprep.subr.mxu0 0.0
          %1850 = vmatpush1.msra.mxu0 %v1842
          %1851 = vmatprep.subr.mxu0 0.0
          %1852 = vmatpush1.msra.mxu0 %v1843
          %1853 = vmatprep.subr.mxu0 0.0
          %1854 = vmatpush1.msra.mxu0 %v1844
          %1855 = vmatprep.subr.mxu0 0.0
          %1856 = vmatpush1.msra.mxu0 %v1845
          %1857 = vmatprep.subr.mxu0 0.0
          %1858 = vmatpush1.msra.mxu0 0.0
          %1859 = vmatprep.subr.mxu0 0.0
          %1860 = vmatpush1.msra.mxu0 0.0
          %1861 = vmatprep.subr.mxu0 0.0
          %1862 = vmatpush1.msra.mxu0 0.0
          %1863 = vmatprep.subr.mxu0 0.0
          %1864 = vmatpush1.msra.mxu0 0.0
          %1865 = vmatprep.subr.mxu0 0.0
          %1866 = vmatpush1.msra.mxu0 0.0
          %1867 = vmatprep.subr.mxu0 0.0
          %1868 = vmatpush1.msra.mxu0 0.0
          %1869 = vmatprep.subr.mxu0 0.0
          %1870 = vmatpush1.msra.mxu0 0.0
          %1871 = vmatprep.subr.mxu0 0.0
          %1872 = vmatpush1.msra.mxu0 0.0
          %1873 = vmatprep.subr.mxu0 0.0
          %1874 = vmatpush1.msra.mxu0 0.0
          %1875 = vmatprep.subr.mxu0 0.0
          %1876 = vmatpush1.msra.mxu0 0.0
          %1877 = vmatprep.subr.mxu0 0.0
          %1878 = vmatpush1.msra.mxu0 0.0
          %1879 = vmatprep.subr.mxu0 0.0
          %1880 = vmatpush1.msra.mxu0 0.0
          %1881 = vmatprep.subr.mxu0 0.0
          %1882 = vmatpush1.msra.mxu0 0.0
          %1883 = vmatprep.subr.mxu0 0.0
          %1884 = vmatpush1.msra.mxu0 0.0
          %1885 = vmatprep.subr.mxu0 0.0
          %1886 = vmatpush1.msra.mxu0 0.0
          %1887 = vmatprep.subr.mxu0 0.0
          %1888 = vmatpush1.msra.mxu0 0.0
          %1889 = vmatprep.subr.mxu0 0.0
          %1890 = vmatpush1.msra.mxu0 0.0
          %1891 = vmatprep.subr.mxu0 0.0
          %1892 = vmatpush1.msra.mxu0 0.0
          %1893 = vmatprep.subr.mxu0 0.0
          %1894 = vmatpush1.msra.mxu0 0.0
          %1895 = vmatprep.subr.mxu0 0.0
          %1896 = vmatpush1.msra.mxu0 0.0
          %1897 = vmatprep.subr.mxu0 0.0
          %1898 = vmatpush1.msra.mxu0 0.0
          %1899 = vmatprep.subr.mxu0 0.0
          %1900 = vmatpush1.msra.mxu0 0.0
          %1901 = vmatprep.subr.mxu0 0.0
          %1902 = vmatpush1.msra.mxu0 0.0
          %1903 = vmatprep.subr.mxu0 0.0
          %1904 = vmatpush1.msra.mxu0 0.0
          %1905 = vmatprep.subr.mxu0 0.0
          %1906 = vmatpush1.msra.mxu0 0.0
          %1907 = vmatprep.subr.mxu0 0.0
          %1908 = vmatpush1.msra.mxu0 0.0
          %1909 = vmatprep.subr.mxu0 0.0
          %1910 = vmatpush1.msra.mxu0 0.0
          %1911 = vmatprep.subr.mxu0 0.0
          %1912 = vmatpush1.msra.mxu0 0.0
          %1913 = vmatprep.mubr.f32.mxu0 0.0
          %1914 = vmatmul.mubr.f32.gmra.mrb[0].mxu0 %v1847
          %v1915 = vpop.f32.mrb[0].mxu0
          %v1916 = vadd.f32 0.0, %v1915
          %v1917 = vpop.f32.mrb[0].mxu0
          %1918 = vdwg.mxu0
          %v1919 = vadd.f32 %v1470, %v1916
          %v1920 = vld [vmem:[#allocation12] sm:$0xff]
          %v1921 = vld [vmem:[#allocation12 + $0x8] sm:$0xff]
          %v1922 = vld [vmem:[#allocation12 + $0x10] sm:$0xff]
          %v1923 = vld [vmem:[#allocation12 + $0x18] sm:$0xff]
          %v1924 = vld [vmem:[%s10] sm:$0x1]
          %v1926 = vsel %vm613, %v1919, 0
          %1928 = vmatprep.subr.mxu0 0.0
          %1929 = vmatpush1.msra.mxu0 %v1920
          %1930 = vmatprep.subr.mxu0 0.0
          %1931 = vmatpush1.msra.mxu0 %v1921
          %1932 = vmatprep.subr.mxu0 0.0
          %1933 = vmatpush1.msra.mxu0 %v1922
          %1934 = vmatprep.subr.mxu0 0.0
          %1935 = vmatpush1.msra.mxu0 %v1923
          %1936 = vmatprep.subr.mxu0 0.0
          %1937 = vmatpush1.msra.mxu0 0.0
          %1938 = vmatprep.subr.mxu0 0.0
          %1939 = vmatpush1.msra.mxu0 0.0
          %1940 = vmatprep.subr.mxu0 0.0
          %1941 = vmatpush1.msra.mxu0 0.0
          %1942 = vmatprep.subr.mxu0 0.0
          %1943 = vmatpush1.msra.mxu0 0.0
          %1944 = vmatprep.subr.mxu0 0.0
          %1945 = vmatpush1.msra.mxu0 0.0
          %1946 = vmatprep.subr.mxu0 0.0
          %1947 = vmatpush1.msra.mxu0 0.0
          %1948 = vmatprep.subr.mxu0 0.0
          %1949 = vmatpush1.msra.mxu0 0.0
          %1950 = vmatprep.subr.mxu0 0.0
          %1951 = vmatpush1.msra.mxu0 0.0
          %1952 = vmatprep.subr.mxu0 0.0
          %1953 = vmatpush1.msra.mxu0 0.0
          %1954 = vmatprep.subr.mxu0 0.0
          %1955 = vmatpush1.msra.mxu0 0.0
          %1956 = vmatprep.subr.mxu0 0.0
          %1957 = vmatpush1.msra.mxu0 0.0
          %1958 = vmatprep.subr.mxu0 0.0
          %1959 = vmatpush1.msra.mxu0 0.0
          %1960 = vmatprep.subr.mxu0 0.0
          %1961 = vmatpush1.msra.mxu0 0.0
          %1962 = vmatprep.subr.mxu0 0.0
          %1963 = vmatpush1.msra.mxu0 0.0
          %1964 = vmatprep.subr.mxu0 0.0
          %1965 = vmatpush1.msra.mxu0 0.0
          %1966 = vmatprep.subr.mxu0 0.0
          %1967 = vmatpush1.msra.mxu0 0.0
          %1968 = vmatprep.subr.mxu0 0.0
          %1969 = vmatpush1.msra.mxu0 0.0
          %1970 = vmatprep.subr.mxu0 0.0
          %1971 = vmatpush1.msra.mxu0 0.0
          %1972 = vmatprep.subr.mxu0 0.0
          %1973 = vmatpush1.msra.mxu0 0.0
          %1974 = vmatprep.subr.mxu0 0.0
          %1975 = vmatpush1.msra.mxu0 0.0
          %1976 = vmatprep.subr.mxu0 0.0
          %1977 = vmatpush1.msra.mxu0 0.0
          %1978 = vmatprep.subr.mxu0 0.0
          %1979 = vmatpush1.msra.mxu0 0.0
          %1980 = vmatprep.subr.mxu0 0.0
          %1981 = vmatpush1.msra.mxu0 0.0
          %1982 = vmatprep.subr.mxu0 0.0
          %1983 = vmatpush1.msra.mxu0 0.0
          %1984 = vmatprep.subr.mxu0 0.0
          %1985 = vmatpush1.msra.mxu0 0.0
          %1986 = vmatprep.subr.mxu0 0.0
          %1987 = vmatpush1.msra.mxu0 0.0
          %1988 = vmatprep.subr.mxu0 0.0
          %1989 = vmatpush1.msra.mxu0 0.0
          %1990 = vmatprep.subr.mxu0 0.0
          %1991 = vmatpush1.msra.mxu0 0.0
          %1992 = vmatprep.mubr.f32.mxu0 0.0
          %1993 = vmatmul.mubr.f32.gmra.mrb[0].mxu0 %v1926
          %v1994 = vpop.f32.mrb[0].mxu0
          %v1995 = vadd.f32 %v1924, %v1994
          %v1996 = vpop.f32.mrb[0].mxu0
          %1997 = vdwg.mxu0
          %1998 = vst [vmem:[%s480] sm:$0x1] %v1995
          %s1999 = scalar_lea.vmem [#allocation12], 32
          %v2000 = vld [vmem:[%s1999] sm:$0xff]
          %v2001 = vld [vmem:[%s1999 + $0x8] sm:$0xff]
          %v2002 = vld [vmem:[%s1999 + $0x10] sm:$0xff]
          %v2003 = vld [vmem:[%s1999 + $0x18] sm:$0xff]
          %v2004 = vld [vmem:[%s10 + $0x1] sm:$0x1]
          %v2005 = vrot.slane %v1919, 1
          %v2006 = vsel %vm613, %v2005, 0
          %2008 = vmatprep.subr.mxu0 0.0
          %2009 = vmatpush1.msra.mxu0 %v2000
          %2010 = vmatprep.subr.mxu0 0.0
          %2011 = vmatpush1.msra.mxu0 %v2001
          %2012 = vmatprep.subr.mxu0 0.0
          %2013 = vmatpush1.msra.mxu0 %v2002
          %2014 = vmatprep.subr.mxu0 0.0
          %2015 = vmatpush1.msra.mxu0 %v2003
          %2016 = vmatprep.subr.mxu0 0.0
          %2017 = vmatpush1.msra.mxu0 0.0
          %2018 = vmatprep.subr.mxu0 0.0
          %2019 = vmatpush1.msra.mxu0 0.0
          %2020 = vmatprep.subr.mxu0 0.0
          %2021 = vmatpush1.msra.mxu0 0.0
          %2022 = vmatprep.subr.mxu0 0.0
          %2023 = vmatpush1.msra.mxu0 0.0
          %2024 = vmatprep.subr.mxu0 0.0
          %2025 = vmatpush1.msra.mxu0 0.0
          %2026 = vmatprep.subr.mxu0 0.0
          %2027 = vmatpush1.msra.mxu0 0.0
          %2028 = vmatprep.subr.mxu0 0.0
          %2029 = vmatpush1.msra.mxu0 0.0
          %2030 = vmatprep.subr.mxu0 0.0
          %2031 = vmatpush1.msra.mxu0 0.0
          %2032 = vmatprep.subr.mxu0 0.0
          %2033 = vmatpush1.msra.mxu0 0.0
          %2034 = vmatprep.subr.mxu0 0.0
          %2035 = vmatpush1.msra.mxu0 0.0
          %2036 = vmatprep.subr.mxu0 0.0
          %2037 = vmatpush1.msra.mxu0 0.0
          %2038 = vmatprep.subr.mxu0 0.0
          %2039 = vmatpush1.msra.mxu0 0.0
          %2040 = vmatprep.subr.mxu0 0.0
          %2041 = vmatpush1.msra.mxu0 0.0
          %2042 = vmatprep.subr.mxu0 0.0
          %2043 = vmatpush1.msra.mxu0 0.0
          %2044 = vmatprep.subr.mxu0 0.0
          %2045 = vmatpush1.msra.mxu0 0.0
          %2046 = vmatprep.subr.mxu0 0.0
          %2047 = vmatpush1.msra.mxu0 0.0
          %2048 = vmatprep.subr.mxu0 0.0
          %2049 = vmatpush1.msra.mxu0 0.0
          %2050 = vmatprep.subr.mxu0 0.0
          %2051 = vmatpush1.msra.mxu0 0.0
          %2052 = vmatprep.subr.mxu0 0.0
          %2053 = vmatpush1.msra.mxu0 0.0
          %2054 = vmatprep.subr.mxu0 0.0
          %2055 = vmatpush1.msra.mxu0 0.0
          %2056 = vmatprep.subr.mxu0 0.0
          %2057 = vmatpush1.msra.mxu0 0.0
          %2058 = vmatprep.subr.mxu0 0.0
          %2059 = vmatpush1.msra.mxu0 0.0
          %2060 = vmatprep.subr.mxu0 0.0
          %2061 = vmatpush1.msra.mxu0 0.0
          %2062 = vmatprep.subr.mxu0 0.0
          %2063 = vmatpush1.msra.mxu0 0.0
          %2064 = vmatprep.subr.mxu0 0.0
          %2065 = vmatpush1.msra.mxu0 0.0
          %2066 = vmatprep.subr.mxu0 0.0
          %2067 = vmatpush1.msra.mxu0 0.0
          %2068 = vmatprep.subr.mxu0 0.0
          %2069 = vmatpush1.msra.mxu0 0.0
          %2070 = vmatprep.subr.mxu0 0.0
          %2071 = vmatpush1.msra.mxu0 0.0
          %2072 = vmatprep.mubr.f32.mxu0 0.0
          %2073 = vmatmul.mubr.f32.gmra.mrb[0].mxu0 %v2006
          %v2074 = vpop.f32.mrb[0].mxu0
          %v2075 = vadd.f32 %v2004, %v2074
          %v2076 = vpop.f32.mrb[0].mxu0
          %2077 = vdwg.mxu0
          %2078 = vst [vmem:[%s480 + $0x1] sm:$0x1] %v2075
          %s2079 = scalar_lea.vmem [#allocation12], 64
          %v2080 = vld [vmem:[%s2079] sm:$0xff]
          %v2081 = vld [vmem:[%s2079 + $0x8] sm:$0xff]
          %v2082 = vld [vmem:[%s2079 + $0x10] sm:$0xff]
          %v2083 = vld [vmem:[%s2079 + $0x18] sm:$0xff]
          %v2084 = vld [vmem:[%s10 + $0x2] sm:$0x1]
          %v2085 = vrot.slane %v1919, 2
          %v2086 = vsel %vm613, %v2085, 0
          %2088 = vmatprep.subr.mxu0 0.0
          %2089 = vmatpush1.msra.mxu0 %v2080
          %2090 = vmatprep.subr.mxu0 0.0
          %2091 = vmatpush1.msra.mxu0 %v2081
          %2092 = vmatprep.subr.mxu0 0.0
          %2093 = vmatpush1.msra.mxu0 %v2082
          %2094 = vmatprep.subr.mxu0 0.0
          %2095 = vmatpush1.msra.mxu0 %v2083
          %2096 = vmatprep.subr.mxu0 0.0
          %2097 = vmatpush1.msra.mxu0 0.0
          %2098 = vmatprep.subr.mxu0 0.0
          %2099 = vmatpush1.msra.mxu0 0.0
          %2100 = vmatprep.subr.mxu0 0.0
          %2101 = vmatpush1.msra.mxu0 0.0
          %2102 = vmatprep.subr.mxu0 0.0
          %2103 = vmatpush1.msra.mxu0 0.0
          %2104 = vmatprep.subr.mxu0 0.0
          %2105 = vmatpush1.msra.mxu0 0.0
          %2106 = vmatprep.subr.mxu0 0.0
          %2107 = vmatpush1.msra.mxu0 0.0
          %2108 = vmatprep.subr.mxu0 0.0
          %2109 = vmatpush1.msra.mxu0 0.0
          %2110 = vmatprep.subr.mxu0 0.0
          %2111 = vmatpush1.msra.mxu0 0.0
          %2112 = vmatprep.subr.mxu0 0.0
          %2113 = vmatpush1.msra.mxu0 0.0
          %2114 = vmatprep.subr.mxu0 0.0
          %2115 = vmatpush1.msra.mxu0 0.0
          %2116 = vmatprep.subr.mxu0 0.0
          %2117 = vmatpush1.msra.mxu0 0.0
          %2118 = vmatprep.subr.mxu0 0.0
          %2119 = vmatpush1.msra.mxu0 0.0
          %2120 = vmatprep.subr.mxu0 0.0
          %2121 = vmatpush1.msra.mxu0 0.0
          %2122 = vmatprep.subr.mxu0 0.0
          %2123 = vmatpush1.msra.mxu0 0.0
          %2124 = vmatprep.subr.mxu0 0.0
          %2125 = vmatpush1.msra.mxu0 0.0
          %2126 = vmatprep.subr.mxu0 0.0
          %2127 = vmatpush1.msra.mxu0 0.0
          %2128 = vmatprep.subr.mxu0 0.0
          %2129 = vmatpush1.msra.mxu0 0.0
          %2130 = vmatprep.subr.mxu0 0.0
          %2131 = vmatpush1.msra.mxu0 0.0
          %2132 = vmatprep.subr.mxu0 0.0
          %2133 = vmatpush1.msra.mxu0 0.0
          %2134 = vmatprep.subr.mxu0 0.0
          %2135 = vmatpush1.msra.mxu0 0.0
          %2136 = vmatprep.subr.mxu0 0.0
          %2137 = vmatpush1.msra.mxu0 0.0
          %2138 = vmatprep.subr.mxu0 0.0
          %2139 = vmatpush1.msra.mxu0 0.0
          %2140 = vmatprep.subr.mxu0 0.0
          %2141 = vmatpush1.msra.mxu0 0.0
          %2142 = vmatprep.subr.mxu0 0.0
          %2143 = vmatpush1.msra.mxu0 0.0
          %2144 = vmatprep.subr.mxu0 0.0
          %2145 = vmatpush1.msra.mxu0 0.0
          %2146 = vmatprep.subr.mxu0 0.0
          %2147 = vmatpush1.msra.mxu0 0.0
          %2148 = vmatprep.subr.mxu0 0.0
          %2149 = vmatpush1.msra.mxu0 0.0
          %2150 = vmatprep.subr.mxu0 0.0
          %2151 = vmatpush1.msra.mxu0 0.0
          %2152 = vmatprep.mubr.f32.mxu0 0.0
          %2153 = vmatmul.mubr.f32.gmra.mrb[0].mxu0 %v2086
          %v2154 = vpop.f32.mrb[0].mxu0
          %v2155 = vadd.f32 %v2084, %v2154
          %v2156 = vpop.f32.mrb[0].mxu0
          %2157 = vdwg.mxu0
          %2158 = vst [vmem:[%s480 + $0x2] sm:$0x1] %v2155
          %s2159 = scalar_lea.vmem [#allocation12], 96
          %v2160 = vld [vmem:[%s2159] sm:$0xff]
          %v2161 = vld [vmem:[%s2159 + $0x8] sm:$0xff]
          %v2162 = vld [vmem:[%s2159 + $0x10] sm:$0xff]
          %v2163 = vld [vmem:[%s2159 + $0x18] sm:$0xff]
          %v2164 = vld [vmem:[%s10 + $0x3] sm:$0x1]
          %v2165 = vrot.slane %v1919, 3
          %v2166 = vsel %vm613, %v2165, 0
          %2168 = vmatprep.subr.mxu0 0.0
          %2169 = vmatpush1.msra.mxu0 %v2160
          %2170 = vmatprep.subr.mxu0 0.0
          %2171 = vmatpush1.msra.mxu0 %v2161
          %2172 = vmatprep.subr.mxu0 0.0
          %2173 = vmatpush1.msra.mxu0 %v2162
          %2174 = vmatprep.subr.mxu0 0.0
          %2175 = vmatpush1.msra.mxu0 %v2163
          %2176 = vmatprep.subr.mxu0 0.0
          %2177 = vmatpush1.msra.mxu0 0.0
          %2178 = vmatprep.subr.mxu0 0.0
          %2179 = vmatpush1.msra.mxu0 0.0
          %2180 = vmatprep.subr.mxu0 0.0
          %2181 = vmatpush1.msra.mxu0 0.0
          %2182 = vmatprep.subr.mxu0 0.0
          %2183 = vmatpush1.msra.mxu0 0.0
          %2184 = vmatprep.subr.mxu0 0.0
          %2185 = vmatpush1.msra.mxu0 0.0
          %2186 = vmatprep.subr.mxu0 0.0
          %2187 = vmatpush1.msra.mxu0 0.0
          %2188 = vmatprep.subr.mxu0 0.0
          %2189 = vmatpush1.msra.mxu0 0.0
          %2190 = vmatprep.subr.mxu0 0.0
          %2191 = vmatpush1.msra.mxu0 0.0
          %2192 = vmatprep.subr.mxu0 0.0
          %2193 = vmatpush1.msra.mxu0 0.0
          %2194 = vmatprep.subr.mxu0 0.0
          %2195 = vmatpush1.msra.mxu0 0.0
          %2196 = vmatprep.subr.mxu0 0.0
          %2197 = vmatpush1.msra.mxu0 0.0
          %2198 = vmatprep.subr.mxu0 0.0
          %2199 = vmatpush1.msra.mxu0 0.0
          %2200 = vmatprep.subr.mxu0 0.0
          %2201 = vmatpush1.msra.mxu0 0.0
          %2202 = vmatprep.subr.mxu0 0.0
          %2203 = vmatpush1.msra.mxu0 0.0
          %2204 = vmatprep.subr.mxu0 0.0
          %2205 = vmatpush1.msra.mxu0 0.0
          %2206 = vmatprep.subr.mxu0 0.0
          %2207 = vmatpush1.msra.mxu0 0.0
          %2208 = vmatprep.subr.mxu0 0.0
          %2209 = vmatpush1.msra.mxu0 0.0
          %2210 = vmatprep.subr.mxu0 0.0
          %2211 = vmatpush1.msra.mxu0 0.0
          %2212 = vmatprep.subr.mxu0 0.0
          %2213 = vmatpush1.msra.mxu0 0.0
          %2214 = vmatprep.subr.mxu0 0.0
          %2215 = vmatpush1.msra.mxu0 0.0
          %2216 = vmatprep.subr.mxu0 0.0
          %2217 = vmatpush1.msra.mxu0 0.0
          %2218 = vmatprep.subr.mxu0 0.0
          %2219 = vmatpush1.msra.mxu0 0.0
          %2220 = vmatprep.subr.mxu0 0.0
          %2221 = vmatpush1.msra.mxu0 0.0
          %2222 = vmatprep.subr.mxu0 0.0
          %2223 = vmatpush1.msra.mxu0 0.0
          %2224 = vmatprep.subr.mxu0 0.0
          %2225 = vmatpush1.msra.mxu0 0.0
          %2226 = vmatprep.subr.mxu0 0.0
          %2227 = vmatpush1.msra.mxu0 0.0
          %2228 = vmatprep.subr.mxu0 0.0
          %2229 = vmatpush1.msra.mxu0 0.0
          %2230 = vmatprep.subr.mxu0 0.0
          %2231 = vmatpush1.msra.mxu0 0.0
          %2232 = vmatprep.mubr.f32.mxu0 0.0
          %2233 = vmatmul.mubr.f32.gmra.mrb[0].mxu0 %v2166
          %v2234 = vpop.f32.mrb[0].mxu0
          %v2235 = vadd.f32 %v2164, %v2234
          %v2236 = vpop.f32.mrb[0].mxu0
          %2237 = vdwg.mxu0
          %2238 = vst [vmem:[%s480 + $0x3] sm:$0x1] %v2235
        $region88: #{tpu_custom_call.1} parent=63 // pred_fallthru
          _
        %s2239 = sand.u32 %s293, 1
        %s2240 = scalar_lea.sflag [#allocation8], %s2239
        %s2241 = sand.u32 %s293, 1
        %s2242 = smul.addr %s2241, 4
        %s2243 = scalar_lea.vmem [#allocation14], %s2242
        // Predicated region
        $region89: #{tpu_custom_call.1} parent=63 // pred_check
          %p2244 = pneg %p303
        $region90: #{tpu_custom_call.1} parent=63 // pred_check_branch
          %2246 = sbr.rel (%p2244) target = $region92
        $region91: #{tpu_custom_call.1} parent=63 // pred_region
          %s2248 = ssub.s32 64, 64
          %2249 = vsyncadd %s2240, %s2248
          %s2250 = smul.addr %s32, 64
          %s2251 = scalar_lea.hbm %s11, %s2250
          %s2253 = sshll.u32 %s2243, 4
          %s2254 = int_to_ptr.vmem [resolvable:$true] %s2253
          %2256 = dma.vmem_to_hbm [thread:$0]  %s2254, 64, %s2251, %s2240
        $region92: #{tpu_custom_call.1} parent=63 // pred_fallthru
          _
      $region64: #{tpu_custom_call.1} parent=5 // pred_fallthru
        _
      %p2257 = scmp.le.s32.totalorder 2, %s23
      // Predicated region
      $region93: #{tpu_custom_call.1} parent=5 // pred_check
        %p2258 = pneg %p2257
      $region94: #{tpu_custom_call.1} parent=5 // pred_check_branch
        %2260 = sbr.rel (%p2258) target = $region96
      $region95: #{tpu_custom_call.1} parent=5 // pred_region
        %s2261 = ssub.s32 %s23, 2
        // Predicated region
        $region97: #{tpu_custom_call.1} parent=95 // pred_check
          %p2262 = pneg %p309
        $region98: #{tpu_custom_call.1} parent=95 // pred_check_branch
          %2264 = sbr.rel (%p2262) target = $region100
        $region99: #{tpu_custom_call.1} parent=95 // pred_region
          %s2265 = sand.u32 %s294, 1
          %s2266 = scalar_lea.sflag [#allocation8], %s2265
          %s2267 = sand.u32 %s294, 1
          %s2268 = smul.addr %s2267, 4
          %s2269 = scalar_lea.vmem [#allocation14], %s2268
          %2270 = dma.done %s2266, 64
        $region100: #{tpu_custom_call.1} parent=95 // pred_fallthru
          _
      $region96: #{tpu_custom_call.1} parent=5 // pred_fallthru
        _
    $region6: #{tpu_custom_call.1} parent=1 // loop_footer
      %s27 = sadd.s32 1, %s23
    $region7: #{tpu_custom_call.1} parent=1 // loop_footer_branch
      %22 = sbr.rel target = $region3
    $region8: #{tpu_custom_call.1} parent=1 // loop_exit
      _
    %2271 = vsyncpa [#allocation7], 1
    %s2272 = scalar_lea.sflag [#allocation7], 1
    %2273 = vsyncpa %s2272, 1
    %2274 = vsyncpa [#allocation10], 1
    %2275 = vsyncpa [#allocation13], 1
    %2276 = vsyncpa [#allocation8], 1
    %s2277 = scalar_lea.sflag [#allocation8], 1
    %2278 = vsyncpa %s2277, 1

</llo_original>
